<compile_context>
chip_gen: v7x
topology: tpu7x:2x2x1
jax: 0.10.0
libtpu: 0.0.40
codegen_flags: <defaults>
</compile_context>

<pallas_src>
import math

import jax
import jax.numpy as jnp
from jax import lax
from jax.experimental import pallas as pl
from jax.experimental.pallas import tpu as pltpu

VMEM = pltpu.MemorySpace.VMEM
_VMEM_LIMIT = 32 << 20


def _vspec():
    return pl.BlockSpec(memory_space=VMEM)


# --------------------------------------------------------------------------
# Batched input projection: xg = x @ [Wir|Wiz|Win] + [bir+bhr | biz+bhz | bin]
# One large matmul over all (T*B) rows, tiled over rows with a parallel grid.
# --------------------------------------------------------------------------
def input_proj_kernel(x_ref, w_ref, b_ref, out_ref):
    out_ref[...] = (
        jnp.dot(x_ref[...], w_ref[...], preferred_element_type=jnp.float32)
        + b_ref[...])


def run_input_proj(x2d, w_ih, bg):
    N, H = x2d.shape
    G = w_ih.shape[1]                       # 3H
    if N % 256 == 0:
        blk = 256
    elif N % 8 == 0:
        blk = 8
    else:
        blk = N
    grid = (N // blk,)
    return pl.pallas_call(
        input_proj_kernel,
        out_shape=jax.ShapeDtypeStruct((N, G), jnp.float32),
        grid=grid,
        in_specs=[pl.BlockSpec((blk, H), lambda i: (i, 0)),
                  pl.BlockSpec((H, G), lambda i: (0, 0)),
                  pl.BlockSpec((1, G), lambda i: (0, 0))],
        out_specs=pl.BlockSpec((blk, G), lambda i: (i, 0)),
        compiler_params=pltpu.CompilerParams(
            dimension_semantics=("parallel",),
            vmem_limit_bytes=_VMEM_LIMIT),
    )(x2d, w_ih, bg)


# --------------------------------------------------------------------------
# Encoder GRU: recurrence only, returns just the final hidden state
# (no (T, B, H) outputs are allocated or written).
# xg_ref is the pre-computed input projection (T, B, 3H).
# --------------------------------------------------------------------------
def gru_encode_kernel(xg_ref, h0_ref, len_ref, whh_ref, bhn_ref, hfin_ref):
    T = xg_ref.shape[0]
    H = h0_ref.shape[1]
    whh = whh_ref[...]                      # (H, 3H) hoisted out of the loop
    bhn = bhn_ref[...]                      # (1, H)
    lens = len_ref[...]                     # (B, 1) int32

    def step(t, h):
        gi = xg_ref[t]                      # (B, 3H)
        gh = jnp.dot(h, whh, preferred_element_type=jnp.float32)
        r = jax.nn.sigmoid(gi[:, :H] + gh[:, :H])
        zg = jax.nn.sigmoid(gi[:, H:2 * H] + gh[:, H:2 * H])
        n = jnp.tanh(gi[:, 2 * H:] + r * (gh[:, 2 * H:] + bhn))
        h_new = (1.0 - zg) * n + zg * h
        return jnp.where(lens > t, h_new, h)   # freeze past sequence end

    hfin_ref[...] = lax.fori_loop(0, T, step, h0_ref[...], unroll=True)


# --------------------------------------------------------------------------
# Fused decoder GRU + head.  Per time step: GRU cell, pad_packed zeroing,
# LayerNorm -> fc_out -> cross-entropy (ignore_index=-1), accumulated into a
# per-batch sum.  Decoder outputs never leave the kernel.
# Targets are (T, B, 1), with row T-1 set to -1 (output[:, :-1] vs trg[:, 1:]).
# --------------------------------------------------------------------------
def gru_decode_head_kernel(xg_ref, h0_ref, len_ref, whh_ref, bhn_ref,
                           gamma_ref, beta_ref, wout_ref, bout_ref, tgt_ref,
                           recon_ref):
    T = xg_ref.shape[0]
    B, H = h0_ref.shape
    L = wout_ref.shape[1]
    whh = whh_ref[...]
    bhn = bhn_ref[...]
    gamma = gamma_ref[...]
    beta = beta_ref[...]
    wout = wout_ref[...]
    bout = bout_ref[...]
    lens = len_ref[...]
    ids = lax.broadcasted_iota(jnp.int32, (B, L), 1)

    def step(t, carry):
        h, acc = carry
        gi = xg_ref[t]                                     # (B, 3H)
        gh = jnp.dot(h, whh, preferred_element_type=jnp.float32)
        r = jax.nn.sigmoid(gi[:, :H] + gh[:, :H])
        zg = jax.nn.sigmoid(gi[:, H:2 * H] + gh[:, H:2 * H])
        n = jnp.tanh(gi[:, 2 * H:] + r * (gh[:, 2 * H:] + bhn))
        h_new = (1.0 - zg) * n + zg * h
        mask = lens > t
        h_next = jnp.where(mask, h_new, h)                 # packed-seq freeze
        out_t = jnp.where(mask, h_new, 0.0)                # pad_packed zeros
        # LayerNorm -> fc_out
        mean = jnp.mean(out_t, axis=-1, keepdims=True)
        var = jnp.mean((out_t - mean) ** 2, axis=-1, keepdims=True)
        xn = (out_t - mean) * lax.rsqrt(var + 1e-5) * gamma + beta
        logits = jnp.dot(xn, wout, preferred_element_type=jnp.float32) + bout
        # cross-entropy with ignore_index = -1
        m = jnp.max(logits, axis=-1, keepdims=True)
        lse = m + jnp.log(jnp.sum(jnp.exp(logits - m), axis=-1, keepdims=True))
        tgt = tgt_ref[t]                                   # (B, 1) int32
        onehot = (ids == tgt).astype(jnp.float32)
        tl = jnp.sum(logits * onehot, axis=-1, keepdims=True)
        valid = (tgt >= 0).astype(jnp.float32)
        return (h_next, acc + (lse - tl) * valid)

    _, recon = lax.fori_loop(
        0, T, step, (h0_ref[...], jnp.zeros((B, 1), jnp.float32)), unroll=True)
    recon_ref[...] = recon


# --------------------------------------------------------------------------
# Latent kernel: fused fc_mu|fc_logvar matmul, reparameterize, category +
# gaussian losses.  The (z - mu_c)^2 / exp(logvar_c) cluster term is expanded
# into matmuls against precomputed operands.
# --------------------------------------------------------------------------
def latent_kernel(h_ref, w_ref, b_ref, eps_ref, aT_ref, muaT_ref,
                  const_ref, lvsum_ref, logpi_ref,
                  z_ref, loss_ref):
    h = h_ref[...]
    B, H = h.shape
    ml = jnp.dot(h, w_ref[...], preferred_element_type=jnp.float32) + b_ref[...]
    mu = ml[:, :H]
    lv = ml[:, H:]
    z = mu + eps_ref[...] * jnp.exp(0.5 * lv)
    z_ref[...] = z

    # quad[b, c] = sum_h (z[b,h] - mu_c[c,h])^2 * exp(-logvar_c[c,h])
    quad = (jnp.dot(z * z, aT_ref[...], preferred_element_type=jnp.float32)
            - 2.0 * jnp.dot(z, muaT_ref[...], preferred_element_type=jnp.float32)
            + const_ref[...])                               # (B, C)
    logits = -0.5 * quad
    m = jnp.max(logits, axis=-1, keepdims=True)
    e = jnp.exp(logits - m)
    p = e / jnp.sum(e, axis=-1, keepdims=True) + 1e-10
    cat = jnp.sum(p * (jnp.log(p) - logpi_ref[...])) / B

    log2pi = math.log(2.0 * math.pi)
    gpl_self = -0.5 * jnp.sum(log2pi + lv + (z - mu) ** 2 * jnp.exp(-lv),
                              axis=-1, keepdims=True)       # (B, 1)
    gpl_c = -0.5 * (H * log2pi + lvsum_ref[...] + quad)     # (B, C)
    C = gpl_c.shape[1]
    gauss = jnp.sum(gpl_self - gpl_c) / (B * C)
    loss_ref[...] = jnp.zeros((1, 1), jnp.float32) + (cat + gauss / H)


# --------------------------------------------------------------------------
# Wrappers
# --------------------------------------------------------------------------
def pack_gru_params(p):
    w_ih = jnp.concatenate([p["wir"], p["wiz"], p["win"]], axis=1)   # (H, 3H)
    w_hh = jnp.concatenate([p["whr"], p["whz"], p["whn"]], axis=1)   # (H, 3H)
    bg = jnp.concatenate([p["bir"] + p["bhr"], p["biz"] + p["bhz"], p["bin"]],
                         axis=1)                                     # (1, 3H)
    return w_ih, w_hh, bg, p["bhn"]


def run_encoder(e_input, h0, lengths, p):
    x = jnp.transpose(e_input, (1, 0, 2)).astype(jnp.float32)        # (T, B, H)
    T, B, H = x.shape
    w_ih, w_hh, bg, bhn = pack_gru_params(p)
    xg = run_input_proj(x.reshape(T * B, H), w_ih, bg).reshape(T, B, 3 * H)
    return pl.pallas_call(
        gru_encode_kernel,
        out_shape=jax.ShapeDtypeStruct((B, H), jnp.float32),
        in_specs=[_vspec()] * 5,
        out_specs=_vspec(),
        compiler_params=pltpu.CompilerParams(vmem_limit_bytes=_VMEM_LIMIT),
    )(xg, h0, lengths.reshape(B, 1).astype(jnp.int32), w_hh, bhn)


def run_decoder_head(d_input, z, lengths, trg, p_dec, params):
    x = jnp.transpose(d_input, (1, 0, 2)).astype(jnp.float32)        # (T, B, H)
    T, B, H = x.shape
    w_ih, w_hh, bg, bhn = pack_gru_params(p_dec)
    xg = run_input_proj(x.reshape(T * B, H), w_ih, bg).reshape(T, B, 3 * H)
    # targets: step t predicts trg[:, t+1]; last step ignored (index -1)
    targets = jnp.full((T, B), -1, jnp.int32)
    targets = targets.at[: T - 1].set(jnp.transpose(trg[:, 1:], (1, 0)).astype(jnp.int32))
    targets = targets.reshape(T, B, 1)
    recon = pl.pallas_call(
        gru_decode_head_kernel,
        out_shape=jax.ShapeDtypeStruct((B, 1), jnp.float32),
        in_specs=[_vspec()] * 10,
        out_specs=_vspec(),
        compiler_params=pltpu.CompilerParams(vmem_limit_bytes=_VMEM_LIMIT),
    )(xg, z, lengths.reshape(B, 1).astype(jnp.int32), w_hh, bhn,
      params["ln_gamma"], params["ln_beta"], params["w_out"], params["b_out"],
      targets)
    return recon[:, 0]                                               # (B,)


def run_latent(h_final, eps, params):
    B, H = h_final.shape
    muc = params["mu_prior"]
    lvc = params["log_var_prior"]
    a = jnp.exp(-lvc)                                   # (C, H)
    aT = a.T                                            # (H, C)
    muaT = (muc * a).T                                  # (H, C)
    const = jnp.sum(muc * muc * a, axis=1)[None, :]     # (1, C)
    lvsum = jnp.sum(lvc, axis=1)[None, :]               # (1, C)
    w = jnp.concatenate([params["w_mu"], params["w_lv"]], axis=1)    # (H, 2H)
    b = jnp.concatenate([params["b_mu"], params["b_lv"]], axis=1)    # (1, 2H)
    logpi = jnp.log(params["pi_prior"])                 # (1, C)
    z, other = pl.pallas_call(
        latent_kernel,
        out_shape=(jax.ShapeDtypeStruct((B, H), jnp.float32),
                   jax.ShapeDtypeStruct((1, 1), jnp.float32)),
        in_specs=[_vspec()] * 9,
        out_specs=(_vspec(), _vspec()),
        compiler_params=pltpu.CompilerParams(vmem_limit_bytes=_VMEM_LIMIT),
    )(h_final, w, b, eps, aT, muaT, const, lvsum, logpi)
    return z, other[0, 0]


# --------------------------------------------------------------------------
# Full forward (train=True branch).
# --------------------------------------------------------------------------
def gmvsae_forward(params, src, trg, src_lengths, trg_lengths, eps):
    B = src.shape[0]
    H = params["embedding"].shape[1]
    emb = params["embedding"]
    e_input = jnp.take(emb, src, axis=0)        # (B, T, H) embedding lookup (glue)
    d_input = jnp.take(emb, trg, axis=0)
    h0 = jnp.zeros((B, H), jnp.float32)

    enc_final = run_encoder(e_input, h0, src_lengths, params["encoder"])
    z, other_loss = run_latent(enc_final, eps, params)
    recon = run_decoder_head(d_input, z, trg_lengths, trg, params["decoder"], params)
    return recon.mean() + other_loss


# --------------------------------------------------------------------------
# Deterministic parameter init (shapes follow the PyTorch module; layer_num=1).
# --------------------------------------------------------------------------
def init_params(key, label_num, hidden_size, n_cluster):
    H, L, C = hidden_size, label_num, n_cluster
    k_gru = 1.0 / math.sqrt(H)
    ks = jax.random.split(key, 16)

    def uni(k, shape, scale):
        return jax.random.uniform(k, shape, jnp.float32, -scale, scale)

    def gru_params(key_):
        kk = jax.random.split(key_, 12)
        wn = ["wir", "wiz", "win", "whr", "whz", "whn"]
        bn = ["bir", "biz", "bin", "bhr", "bhz", "bhn"]
        p = {n: uni(kk[i], (H, H), k_gru) for i, n in enumerate(wn)}
        p.update({n: uni(kk[6 + i], (1, H), k_gru) for i, n in enumerate(bn)})
        return p

    return {
        "embedding": jax.random.normal(ks[0], (L, H), jnp.float32),
        "encoder": gru_params(ks[1]),
        "decoder": gru_params(ks[2]),
        "w_mu": uni(ks[3], (H, H), k_gru),
        "b_mu": uni(ks[4], (1, H), k_gru),
        "w_lv": uni(ks[5], (H, H), k_gru),
        "b_lv": uni(ks[6], (1, H), k_gru),
        "ln_gamma": jnp.ones((1, H), jnp.float32),
        "ln_beta": jnp.zeros((1, H), jnp.float32),
        "w_out": uni(ks[7], (H, L), k_gru),
        "b_out": uni(ks[8], (1, L), k_gru),
        "pi_prior": jnp.full((1, C), 1.0 / C, jnp.float32),
        "mu_prior": jnp.zeros((C, H), jnp.float32),
        "log_var_prior": jax.random.normal(ks[9], (C, H), jnp.float32),
    }


if __name__ == "__main__":
    key = jax.random.PRNGKey(0)
    B, T, H, L, C = 2, 8, 32, 16, 10          # batch, seq, hidden, label_num, n_cluster
    kp, ksrc, ktrg, keps = jax.random.split(key, 4)

    params = init_params(kp, L, H, C)
    src = jax.random.randint(ksrc, (B, T), 0, L, jnp.int32)
    trg = jax.random.randint(ktrg, (B, T), 0, L, jnp.int32)
    src_lengths = jnp.array([T, T - 3], jnp.int32)
    trg_lengths = jnp.array([T, T - 2], jnp.int32)
    # TODO(synk): torch.randn_like inside reparameterize -> deterministic eps passed in.
    eps = jax.random.normal(keps, (B, H), jnp.float32)

    loss = jax.jit(gmvsae_forward)(params, src, trg, src_lengths, trg_lengths, eps)
    loss = jax.block_until_ready(loss)
    assert bool(jnp.isfinite(loss)), "non-finite loss"
    print("KERNEL_OK")
</pallas_src>

<mosaic_0001>
module attributes {stable_mosaic.version = 11 : i64} {
  func.func @input_proj_kernel(%arg0: i32, %arg1: memref<8x32xf32, #tpu.memory_space<vmem>>, %arg2: memref<32x96xf32, #tpu.memory_space<vmem>>, %arg3: memref<1x96xf32, #tpu.memory_space<vmem>>, %arg4: memref<8x96xf32, #tpu.memory_space<vmem>>) attributes {dimension_semantics = [#tpu.dimension_semantics<parallel>], iteration_bounds = array<i64: 2>, scalar_prefetch = 0 : i64, scratch_operands = 0 : i64, tpu.core_type = #tpu.core_type<tc>, window_params = [{transform_indices = @transform_0, window_bounds = array<i64: 8, 32>}, {pipeline_mode = #tpu.pipeline_mode<synchronous>, transform_indices = @transform_1, window_bounds = array<i64: 32, 96>}, {pipeline_mode = #tpu.pipeline_mode<synchronous>, transform_indices = @transform_2, window_bounds = array<i64: 1, 96>}, {transform_indices = @transform_3, window_bounds = array<i64: 8, 96>}]} {
    %c0 = arith.constant 0 : index
    %c0_0 = arith.constant 0 : index
    %0 = vector.load %arg1[%c0, %c0_0] : memref<8x32xf32, #tpu.memory_space<vmem>>, vector<8x32xf32>
    %c0_1 = arith.constant 0 : index
    %c0_2 = arith.constant 0 : index
    %1 = vector.load %arg2[%c0_1, %c0_2] : memref<32x96xf32, #tpu.memory_space<vmem>>, vector<32x96xf32>
    %cst = arith.constant dense<0.000000e+00> : vector<8x96xf32>
    %2 = tpu.matmul %0, %1, %cst {dimension_numbers = #tpu.dot_dimension_numbers<[1], [0], [0], [1], [0, 0, 1, 1], [], []>} : vector<8x32xf32>, vector<32x96xf32>, vector<8x96xf32> -> vector<8x96xf32>
    %c0_3 = arith.constant 0 : index
    %c0_4 = arith.constant 0 : index
    %3 = vector.load %arg3[%c0_3, %c0_4] : memref<1x96xf32, #tpu.memory_space<vmem>>, vector<1x96xf32>
    %4 = vector.broadcast %3 : vector<1x96xf32> to vector<8x96xf32>
    %5 = arith.addf %2, %4 : vector<8x96xf32>
    %c0_5 = arith.constant 0 : index
    %c0_6 = arith.constant 0 : index
    %6 = vector.load %arg4[%c0_5, %c0_6] : memref<8x96xf32, #tpu.memory_space<vmem>>, vector<8x96xf32>
    tpu.vector_store %arg4[%c0_5, %c0_6], %5 {strides = array<i32>} : memref<8x96xf32, #tpu.memory_space<vmem>>, vector<8x96xf32>,
    return
  }
  func.func @transform_0(%arg0: i32) -> (i32, i32) {
    %c0_i32 = arith.constant 0 : i32
    %c0_i32_0 = arith.constant 0 : i32
    return %arg0, %c0_i32 : i32, i32
  }
  func.func @transform_1(%arg0: i32) -> (i32, i32) {
    %c0_i32 = arith.constant 0 : i32
    %c0_i32_0 = arith.constant 0 : i32
    %c0_i32_1 = arith.constant 0 : i32
    return %c0_i32, %c0_i32_0 : i32, i32
  }
  func.func @transform_2(%arg0: i32) -> (i32, i32) {
    %c0_i32 = arith.constant 0 : i32
    %c0_i32_0 = arith.constant 0 : i32
    %c0_i32_1 = arith.constant 0 : i32
    return %c0_i32, %c0_i32_0 : i32, i32
  }
  func.func @transform_3(%arg0: i32) -> (i32, i32) {
    %c0_i32 = arith.constant 0 : i32
    %c0_i32_0 = arith.constant 0 : i32
    return %arg0, %c0_i32 : i32, i32
  }
}

module attributes {stable_mosaic.version = 11 : i64} {
  func.func @gru_encode_kernel(%arg0: memref<8x2x96xf32, #tpu.memory_space<vmem>>, %arg1: memref<2x32xf32, #tpu.memory_space<vmem>>, %arg2: memref<2x1xi32, #tpu.memory_space<vmem>>, %arg3: memref<32x96xf32, #tpu.memory_space<vmem>>, %arg4: memref<1x32xf32, #tpu.memory_space<vmem>>, %arg5: memref<2x32xf32, #tpu.memory_space<vmem>>) attributes {dimension_semantics = [], scalar_prefetch = 0 : i64, scratch_operands = 0 : i64, tpu.core_type = #tpu.core_type<tc>} {
    %c0 = arith.constant 0 : index
    %c0_0 = arith.constant 0 : index
    %0 = vector.load %arg3[%c0, %c0_0] : memref<32x96xf32, #tpu.memory_space<vmem>>, vector<32x96xf32>
    %c0_1 = arith.constant 0 : index
    %c0_2 = arith.constant 0 : index
    %1 = vector.load %arg4[%c0_1, %c0_2] : memref<1x32xf32, #tpu.memory_space<vmem>>, vector<1x32xf32>
    %c0_3 = arith.constant 0 : index
    %c0_4 = arith.constant 0 : index
    %2 = vector.load %arg2[%c0_3, %c0_4] : memref<2x1xi32, #tpu.memory_space<vmem>>, vector<2x1xi32>
    %c0_5 = arith.constant 0 : index
    %c0_6 = arith.constant 0 : index
    %3 = vector.load %arg1[%c0_5, %c0_6] : memref<2x32xf32, #tpu.memory_space<vmem>>, vector<2x32xf32>
    %c0_i32 = arith.constant 0 : i32
    %4 = arith.index_cast %c0_i32 : i32 to index
    %c0_7 = arith.constant 0 : index
    %c0_8 = arith.constant 0 : index
    %5 = vector.load %arg0[%4, %c0_7, %c0_8] : memref<8x2x96xf32, #tpu.memory_space<vmem>>, vector<1x2x96xf32>
    %6 = vector.shape_cast %5 : vector<1x2x96xf32> to vector<2x96xf32>
    %cst = arith.constant dense<0.000000e+00> : vector<2x96xf32>
    %7 = tpu.matmul %3, %0, %cst {dimension_numbers = #tpu.dot_dimension_numbers<[1], [0], [0], [1], [0, 0, 1, 1], [], []>} : vector<2x32xf32>, vector<32x96xf32>, vector<2x96xf32> -> vector<2x96xf32>
    %8 = vector.extract_strided_slice %6 {offsets = [0, 0], sizes = [2, 32], strides = [1, 1]} : vector<2x96xf32> to vector<2x32xf32>
    %9 = vector.extract_strided_slice %7 {offsets = [0, 0], sizes = [2, 32], strides = [1, 1]} : vector<2x96xf32> to vector<2x32xf32>
    %10 = arith.addf %8, %9 : vector<2x32xf32>
    %11 = arith.negf %10 : vector<2x32xf32>
    %12 = math.exp %11 : vector<2x32xf32>
    %cst_9 = arith.constant 1.000000e+00 : f32
    %13 = vector.broadcast %cst_9 : f32 to vector<2x32xf32>
    %14 = arith.addf %13, %12 : vector<2x32xf32>
    %15 = arith.divf %13, %14 : vector<2x32xf32>
    %16 = vector.extract_strided_slice %6 {offsets = [0, 32], sizes = [2, 32], strides = [1, 1]} : vector<2x96xf32> to vector<2x32xf32>
    %17 = vector.extract_strided_slice %7 {offsets = [0, 32], sizes = [2, 32], strides = [1, 1]} : vector<2x96xf32> to vector<2x32xf32>
    %18 = arith.addf %16, %17 : vector<2x32xf32>
    %19 = arith.negf %18 : vector<2x32xf32>
    %20 = math.exp %19 : vector<2x32xf32>
    %cst_10 = arith.constant 1.000000e+00 : f32
    %21 = vector.broadcast %cst_10 : f32 to vector<2x32xf32>
    %22 = arith.addf %21, %20 : vector<2x32xf32>
    %23 = arith.divf %21, %22 : vector<2x32xf32>
    %24 = vector.extract_strided_slice %6 {offsets = [0, 64], sizes = [2, 32], strides = [1, 1]} : vector<2x96xf32> to vector<2x32xf32>
    %25 = vector.extract_strided_slice %7 {offsets = [0, 64], sizes = [2, 32], strides = [1, 1]} : vector<2x96xf32> to vector<2x32xf32>
    %26 = vector.broadcast %1 : vector<1x32xf32> to vector<2x32xf32>
    %27 = arith.addf %25, %26 : vector<2x32xf32>
    %28 = arith.mulf %15, %27 : vector<2x32xf32>
    %29 = arith.addf %24, %28 : vector<2x32xf32>
    %30 = math.tanh %29 : vector<2x32xf32>
    %cst_11 = arith.constant 1.000000e+00 : f32
    %31 = vector.broadcast %cst_11 : f32 to vector<2x32xf32>
    %32 = arith.subf %31, %23 : vector<2x32xf32>
    %33 = arith.mulf %32, %30 : vector<2x32xf32>
    %34 = arith.mulf %23, %3 : vector<2x32xf32>
    %35 = arith.addf %33, %34 : vector<2x32xf32>
    %36 = vector.broadcast %c0_i32 : i32 to vector<2x1xi32>
    %37 = arith.cmpi sgt, %2, %36 : vector<2x1xi32>
    %38 = vector.shape_cast %37 : vector<2x1xi1> to vector<2x1xi1>
    %39 = vector.broadcast %38 : vector<2x1xi1> to vector<2x32xi1>
    %40 = arith.select %39, %35, %3 : vector<2x32xi1>, vector<2x32xf32>
    %c1_i32 = arith.constant 1 : i32
    %41 = arith.index_cast %c1_i32 : i32 to index
    %c0_12 = arith.constant 0 : index
    %c0_13 = arith.constant 0 : index
    %42 = vector.load %arg0[%41, %c0_12, %c0_13] : memref<8x2x96xf32, #tpu.memory_space<vmem>>, vector<1x2x96xf32>
    %43 = vector.shape_cast %42 : vector<1x2x96xf32> to vector<2x96xf32>
    %cst_14 = arith.constant dense<0.000000e+00> : vector<2x96xf32>
    %44 = tpu.matmul %40, %0, %cst_14 {dimension_numbers = #tpu.dot_dimension_numbers<[1], [0], [0], [1], [0, 0, 1, 1], [], []>} : vector<2x32xf32>, vector<32x96xf32>, vector<2x96xf32> -> vector<2x96xf32>
    %45 = vector.extract_strided_slice %43 {offsets = [0, 0], sizes = [2, 32], strides = [1, 1]} : vector<2x96xf32> to vector<2x32xf32>
    %46 = vector.extract_strided_slice %44 {offsets = [0, 0], sizes = [2, 32], strides = [1, 1]} : vector<2x96xf32> to vector<2x32xf32>
    %47 = arith.addf %45, %46 : vector<2x32xf32>
    %48 = arith.negf %47 : vector<2x32xf32>
    %49 = math.exp %48 : vector<2x32xf32>
    %cst_15 = arith.constant 1.000000e+00 : f32
    %50 = vector.broadcast %cst_15 : f32 to vector<2x32xf32>
    %51 = arith.addf %50, %49 : vector<2x32xf32>
    %52 = arith.divf %50, %51 : vector<2x32xf32>
    %53 = vector.extract_strided_slice %43 {offsets = [0, 32], sizes = [2, 32], strides = [1, 1]} : vector<2x96xf32> to vector<2x32xf32>
    %54 = vector.extract_strided_slice %44 {offsets = [0, 32], sizes = [2, 32], strides = [1, 1]} : vector<2x96xf32> to vector<2x32xf32>
    %55 = arith.addf %53, %54 : vector<2x32xf32>
    %56 = arith.negf %55 : vector<2x32xf32>
    %57 = math.exp %56 : vector<2x32xf32>
    %cst_16 = arith.constant 1.000000e+00 : f32
    %58 = vector.broadcast %cst_16 : f32 to vector<2x32xf32>
    %59 = arith.addf %58, %57 : vector<2x32xf32>
    %60 = arith.divf %58, %59 : vector<2x32xf32>
    %61 = vector.extract_strided_slice %43 {offsets = [0, 64], sizes = [2, 32], strides = [1, 1]} : vector<2x96xf32> to vector<2x32xf32>
    %62 = vector.extract_strided_slice %44 {offsets = [0, 64], sizes = [2, 32], strides = [1, 1]} : vector<2x96xf32> to vector<2x32xf32>
    %63 = vector.broadcast %1 : vector<1x32xf32> to vector<2x32xf32>
    %64 = arith.addf %62, %63 : vector<2x32xf32>
    %65 = arith.mulf %52, %64 : vector<2x32xf32>
    %66 = arith.addf %61, %65 : vector<2x32xf32>
    %67 = math.tanh %66 : vector<2x32xf32>
    %cst_17 = arith.constant 1.000000e+00 : f32
    %68 = vector.broadcast %cst_17 : f32 to vector<2x32xf32>
    %69 = arith.subf %68, %60 : vector<2x32xf32>
    %70 = arith.mulf %69, %67 : vector<2x32xf32>
    %71 = arith.mulf %60, %40 : vector<2x32xf32>
    %72 = arith.addf %70, %71 : vector<2x32xf32>
    %73 = vector.broadcast %c1_i32 : i32 to vector<2x1xi32>
    %74 = arith.cmpi sgt, %2, %73 : vector<2x1xi32>
    %75 = vector.shape_cast %74 : vector<2x1xi1> to vector<2x1xi1>
    %76 = vector.broadcast %75 : vector<2x1xi1> to vector<2x32xi1>
    %77 = arith.select %76, %72, %40 : vector<2x32xi1>, vector<2x32xf32>
    %c2_i32 = arith.constant 2 : i32
    %78 = arith.index_cast %c2_i32 : i32 to index
    %c0_18 = arith.constant 0 : index
    %c0_19 = arith.constant 0 : index
    %79 = vector.load %arg0[%78, %c0_18, %c0_19] : memref<8x2x96xf32, #tpu.memory_space<vmem>>, vector<1x2x96xf32>
    %80 = vector.shape_cast %79 : vector<1x2x96xf32> to vector<2x96xf32>
    %cst_20 = arith.constant dense<0.000000e+00> : vector<2x96xf32>
    %81 = tpu.matmul %77, %0, %cst_20 {dimension_numbers = #tpu.dot_dimension_numbers<[1], [0], [0], [1], [0, 0, 1, 1], [], []>} : vector<2x32xf32>, vector<32x96xf32>, vector<2x96xf32> -> vector<2x96xf32>
    %82 = vector.extract_strided_slice %80 {offsets = [0, 0], sizes = [2, 32], strides = [1, 1]} : vector<2x96xf32> to vector<2x32xf32>
    %83 = vector.extract_strided_slice %81 {offsets = [0, 0], sizes = [2, 32], strides = [1, 1]} : vector<2x96xf32> to vector<2x32xf32>
    %84 = arith.addf %82, %83 : vector<2x32xf32>
    %85 = arith.negf %84 : vector<2x32xf32>
    %86 = math.exp %85 : vector<2x32xf32>
    %cst_21 = arith.constant 1.000000e+00 : f32
    %87 = vector.broadcast %cst_21 : f32 to vector<2x32xf32>
    %88 = arith.addf %87, %86 : vector<2x32xf32>
    %89 = arith.divf %87, %88 : vector<2x32xf32>
    %90 = vector.extract_strided_slice %80 {offsets = [0, 32], sizes = [2, 32], strides = [1, 1]} : vector<2x96xf32> to vector<2x32xf32>
    %91 = vector.extract_strided_slice %81 {offsets = [0, 32], sizes = [2, 32], strides = [1, 1]} : vector<2x96xf32> to vector<2x32xf32>
    %92 = arith.addf %90, %91 : vector<2x32xf32>
    %93 = arith.negf %92 : vector<2x32xf32>
    %94 = math.exp %93 : vector<2x32xf32>
    %cst_22 = arith.constant 1.000000e+00 : f32
    %95 = vector.broadcast %cst_22 : f32 to vector<2x32xf32>
    %96 = arith.addf %95, %94 : vector<2x32xf32>
    %97 = arith.divf %95, %96 : vector<2x32xf32>
    %98 = vector.extract_strided_slice %80 {offsets = [0, 64], sizes = [2, 32], strides = [1, 1]} : vector<2x96xf32> to vector<2x32xf32>
    %99 = vector.extract_strided_slice %81 {offsets = [0, 64], sizes = [2, 32], strides = [1, 1]} : vector<2x96xf32> to vector<2x32xf32>
    %100 = vector.broadcast %1 : vector<1x32xf32> to vector<2x32xf32>
    %101 = arith.addf %99, %100 : vector<2x32xf32>
    %102 = arith.mulf %89, %101 : vector<2x32xf32>
    %103 = arith.addf %98, %102 : vector<2x32xf32>
    %104 = math.tanh %103 : vector<2x32xf32>
    %cst_23 = arith.constant 1.000000e+00 : f32
    %105 = vector.broadcast %cst_23 : f32 to vector<2x32xf32>
    %106 = arith.subf %105, %97 : vector<2x32xf32>
    %107 = arith.mulf %106, %104 : vector<2x32xf32>
    %108 = arith.mulf %97, %77 : vector<2x32xf32>
    %109 = arith.addf %107, %108 : vector<2x32xf32>
    %110 = vector.broadcast %c2_i32 : i32 to vector<2x1xi32>
    %111 = arith.cmpi sgt, %2, %110 : vector<2x1xi32>
    %112 = vector.shape_cast %111 : vector<2x1xi1> to vector<2x1xi1>
    %113 = vector.broadcast %112 : vector<2x1xi1> to vector<2x32xi1>
    %114 = arith.select %113, %109, %77 : vector<2x32xi1>, vector<2x32xf32>
    %c3_i32 = arith.constant 3 : i32
    %115 = arith.index_cast %c3_i32 : i32 to index
    %c0_24 = arith.constant 0 : index
    %c0_25 = arith.constant 0 : index
    %116 = vector.load %arg0[%115, %c0_24, %c0_25] : memref<8x2x96xf32, #tpu.memory_space<vmem>>, vector<1x2x96xf32>
    %117 = vector.shape_cast %116 : vector<1x2x96xf32> to vector<2x96xf32>
    %cst_26 = arith.constant dense<0.000000e+00> : vector<2x96xf32>
    %118 = tpu.matmul %114, %0, %cst_26 {dimension_numbers = #tpu.dot_dimension_numbers<[1], [0], [0], [1], [0, 0, 1, 1], [], []>} : vector<2x32xf32>, vector<32x96xf32>, vector<2x96xf32> -> vector<2x96xf32>
    %119 = vector.extract_strided_slice %117 {offsets = [0, 0], sizes = [2, 32], strides = [1, 1]} : vector<2x96xf32> to vector<2x32xf32>
    %120 = vector.extract_strided_slice %118 {offsets = [0, 0], sizes = [2, 32], strides = [1, 1]} : vector<2x96xf32> to vector<2x32xf32>
    %121 = arith.addf %119, %120 : vector<2x32xf32>
    %122 = arith.negf %121 : vector<2x32xf32>
    %123 = math.exp %122 : vector<2x32xf32>
    %cst_27 = arith.constant 1.000000e+00 : f32
    %124 = vector.broadcast %cst_27 : f32 to vector<2x32xf32>
    %125 = arith.addf %124, %123 : vector<2x32xf32>
    %126 = arith.divf %124, %125 : vector<2x32xf32>
    %127 = vector.extract_strided_slice %117 {offsets = [0, 32], sizes = [2, 32], strides = [1, 1]} : vector<2x96xf32> to vector<2x32xf32>
    %128 = vector.extract_strided_slice %118 {offsets = [0, 32], sizes = [2, 32], strides = [1, 1]} : vector<2x96xf32> to vector<2x32xf32>
    %129 = arith.addf %127, %128 : vector<2x32xf32>
    %130 = arith.negf %129 : vector<2x32xf32>
    %131 = math.exp %130 : vector<2x32xf32>
    %cst_28 = arith.constant 1.000000e+00 : f32
    %132 = vector.broadcast %cst_28 : f32 to vector<2x32xf32>
    %133 = arith.addf %132, %131 : vector<2x32xf32>
    %134 = arith.divf %132, %133 : vector<2x32xf32>
    %135 = vector.extract_strided_slice %117 {offsets = [0, 64], sizes = [2, 32], strides = [1, 1]} : vector<2x96xf32> to vector<2x32xf32>
    %136 = vector.extract_strided_slice %118 {offsets = [0, 64], sizes = [2, 32], strides = [1, 1]} : vector<2x96xf32> to vector<2x32xf32>
    %137 = vector.broadcast %1 : vector<1x32xf32> to vector<2x32xf32>
    %138 = arith.addf %136, %137 : vector<2x32xf32>
    %139 = arith.mulf %126, %138 : vector<2x32xf32>
    %140 = arith.addf %135, %139 : vector<2x32xf32>
    %141 = math.tanh %140 : vector<2x32xf32>
    %cst_29 = arith.constant 1.000000e+00 : f32
    %142 = vector.broadcast %cst_29 : f32 to vector<2x32xf32>
    %143 = arith.subf %142, %134 : vector<2x32xf32>
    %144 = arith.mulf %143, %141 : vector<2x32xf32>
    %145 = arith.mulf %134, %114 : vector<2x32xf32>
    %146 = arith.addf %144, %145 : vector<2x32xf32>
    %147 = vector.broadcast %c3_i32 : i32 to vector<2x1xi32>
    %148 = arith.cmpi sgt, %2, %147 : vector<2x1xi32>
    %149 = vector.shape_cast %148 : vector<2x1xi1> to vector<2x1xi1>
    %150 = vector.broadcast %149 : vector<2x1xi1> to vector<2x32xi1>
    %151 = arith.select %150, %146, %114 : vector<2x32xi1>, vector<2x32xf32>
    %c4_i32 = arith.constant 4 : i32
    %152 = arith.index_cast %c4_i32 : i32 to index
    %c0_30 = arith.constant 0 : index
    %c0_31 = arith.constant 0 : index
    %153 = vector.load %arg0[%152, %c0_30, %c0_31] : memref<8x2x96xf32, #tpu.memory_space<vmem>>, vector<1x2x96xf32>
    %154 = vector.shape_cast %153 : vector<1x2x96xf32> to vector<2x96xf32>
    %cst_32 = arith.constant dense<0.000000e+00> : vector<2x96xf32>
    %155 = tpu.matmul %151, %0, %cst_32 {dimension_numbers = #tpu.dot_dimension_numbers<[1], [0], [0], [1], [0, 0, 1, 1], [], []>} : vector<2x32xf32>, vector<32x96xf32>, vector<2x96xf32> -> vector<2x96xf32>
    %156 = vector.extract_strided_slice %154 {offsets = [0, 0], sizes = [2, 32], strides = [1, 1]} : vector<2x96xf32> to vector<2x32xf32>
    %157 = vector.extract_strided_slice %155 {offsets = [0, 0], sizes = [2, 32], strides = [1, 1]} : vector<2x96xf32> to vector<2x32xf32>
    %158 = arith.addf %156, %157 : vector<2x32xf32>
    %159 = arith.negf %158 : vector<2x32xf32>
    %160 = math.exp %159 : vector<2x32xf32>
    %cst_33 = arith.constant 1.000000e+00 : f32
    %161 = vector.broadcast %cst_33 : f32 to vector<2x32xf32>
    %162 = arith.addf %161, %160 : vector<2x32xf32>
    %163 = arith.divf %161, %162 : vector<2x32xf32>
    %164 = vector.extract_strided_slice %154 {offsets = [0, 32], sizes = [2, 32], strides = [1, 1]} : vector<2x96xf32> to vector<2x32xf32>
    %165 = vector.extract_strided_slice %155 {offsets = [0, 32], sizes = [2, 32], strides = [1, 1]} : vector<2x96xf32> to vector<2x32xf32>
    %166 = arith.addf %164, %165 : vector<2x32xf32>
    %167 = arith.negf %166 : vector<2x32xf32>
    %168 = math.exp %167 : vector<2x32xf32>
    %cst_34 = arith.constant 1.000000e+00 : f32
    %169 = vector.broadcast %cst_34 : f32 to vector<2x32xf32>
    %170 = arith.addf %169, %168 : vector<2x32xf32>
    %171 = arith.divf %169, %170 : vector<2x32xf32>
    %172 = vector.extract_strided_slice %154 {offsets = [0, 64], sizes = [2, 32], strides = [1, 1]} : vector<2x96xf32> to vector<2x32xf32>
    %173 = vector.extract_strided_slice %155 {offsets = [0, 64], sizes = [2, 32], strides = [1, 1]} : vector<2x96xf32> to vector<2x32xf32>
    %174 = vector.broadcast %1 : vector<1x32xf32> to vector<2x32xf32>
    %175 = arith.addf %173, %174 : vector<2x32xf32>
    %176 = arith.mulf %163, %175 : vector<2x32xf32>
    %177 = arith.addf %172, %176 : vector<2x32xf32>
    %178 = math.tanh %177 : vector<2x32xf32>
    %cst_35 = arith.constant 1.000000e+00 : f32
    %179 = vector.broadcast %cst_35 : f32 to vector<2x32xf32>
    %180 = arith.subf %179, %171 : vector<2x32xf32>
    %181 = arith.mulf %180, %178 : vector<2x32xf32>
    %182 = arith.mulf %171, %151 : vector<2x32xf32>
    %183 = arith.addf %181, %182 : vector<2x32xf32>
    %184 = vector.broadcast %c4_i32 : i32 to vector<2x1xi32>
    %185 = arith.cmpi sgt, %2, %184 : vector<2x1xi32>
    %186 = vector.shape_cast %185 : vector<2x1xi1> to vector<2x1xi1>
    %187 = vector.broadcast %186 : vector<2x1xi1> to vector<2x32xi1>
    %188 = arith.select %187, %183, %151 : vector<2x32xi1>, vector<2x32xf32>
    %c5_i32 = arith.constant 5 : i32
    %189 = arith.index_cast %c5_i32 : i32 to index
    %c0_36 = arith.constant 0 : index
    %c0_37 = arith.constant 0 : index
    %190 = vector.load %arg0[%189, %c0_36, %c0_37] : memref<8x2x96xf32, #tpu.memory_space<vmem>>, vector<1x2x96xf32>
    %191 = vector.shape_cast %190 : vector<1x2x96xf32> to vector<2x96xf32>
    %cst_38 = arith.constant dense<0.000000e+00> : vector<2x96xf32>
    %192 = tpu.matmul %188, %0, %cst_38 {dimension_numbers = #tpu.dot_dimension_numbers<[1], [0], [0], [1], [0, 0, 1, 1], [], []>} : vector<2x32xf32>, vector<32x96xf32>, vector<2x96xf32> -> vector<2x96xf32>
    %193 = vector.extract_strided_slice %191 {offsets = [0, 0], sizes = [2, 32], strides = [1, 1]} : vector<2x96xf32> to vector<2x32xf32>
    %194 = vector.extract_strided_slice %192 {offsets = [0, 0], sizes = [2, 32], strides = [1, 1]} : vector<2x96xf32> to vector<2x32xf32>
    %195 = arith.addf %193, %194 : vector<2x32xf32>
    %196 = arith.negf %195 : vector<2x32xf32>
    %197 = math.exp %196 : vector<2x32xf32>
    %cst_39 = arith.constant 1.000000e+00 : f32
    %198 = vector.broadcast %cst_39 : f32 to vector<2x32xf32>
    %199 = arith.addf %198, %197 : vector<2x32xf32>
    %200 = arith.divf %198, %199 : vector<2x32xf32>
    %201 = vector.extract_strided_slice %191 {offsets = [0, 32], sizes = [2, 32], strides = [1, 1]} : vector<2x96xf32> to vector<2x32xf32>
    %202 = vector.extract_strided_slice %192 {offsets = [0, 32], sizes = [2, 32], strides = [1, 1]} : vector<2x96xf32> to vector<2x32xf32>
    %203 = arith.addf %201, %202 : vector<2x32xf32>
    %204 = arith.negf %203 : vector<2x32xf32>
    %205 = math.exp %204 : vector<2x32xf32>
    %cst_40 = arith.constant 1.000000e+00 : f32
    %206 = vector.broadcast %cst_40 : f32 to vector<2x32xf32>
    %207 = arith.addf %206, %205 : vector<2x32xf32>
    %208 = arith.divf %206, %207 : vector<2x32xf32>
    %209 = vector.extract_strided_slice %191 {offsets = [0, 64], sizes = [2, 32], strides = [1, 1]} : vector<2x96xf32> to vector<2x32xf32>
    %210 = vector.extract_strided_slice %192 {offsets = [0, 64], sizes = [2, 32], strides = [1, 1]} : vector<2x96xf32> to vector<2x32xf32>
    %211 = vector.broadcast %1 : vector<1x32xf32> to vector<2x32xf32>
    %212 = arith.addf %210, %211 : vector<2x32xf32>
    %213 = arith.mulf %200, %212 : vector<2x32xf32>
    %214 = arith.addf %209, %213 : vector<2x32xf32>
    %215 = math.tanh %214 : vector<2x32xf32>
    %cst_41 = arith.constant 1.000000e+00 : f32
    %216 = vector.broadcast %cst_41 : f32 to vector<2x32xf32>
    %217 = arith.subf %216, %208 : vector<2x32xf32>
    %218 = arith.mulf %217, %215 : vector<2x32xf32>
    %219 = arith.mulf %208, %188 : vector<2x32xf32>
    %220 = arith.addf %218, %219 : vector<2x32xf32>
    %221 = vector.broadcast %c5_i32 : i32 to vector<2x1xi32>
    %222 = arith.cmpi sgt, %2, %221 : vector<2x1xi32>
    %223 = vector.shape_cast %222 : vector<2x1xi1> to vector<2x1xi1>
    %224 = vector.broadcast %223 : vector<2x1xi1> to vector<2x32xi1>
    %225 = arith.select %224, %220, %188 : vector<2x32xi1>, vector<2x32xf32>
    %c6_i32 = arith.constant 6 : i32
    %226 = arith.index_cast %c6_i32 : i32 to index
    %c0_42 = arith.constant 0 : index
    %c0_43 = arith.constant 0 : index
    %227 = vector.load %arg0[%226, %c0_42, %c0_43] : memref<8x2x96xf32, #tpu.memory_space<vmem>>, vector<1x2x96xf32>
    %228 = vector.shape_cast %227 : vector<1x2x96xf32> to vector<2x96xf32>
    %cst_44 = arith.constant dense<0.000000e+00> : vector<2x96xf32>
    %229 = tpu.matmul %225, %0, %cst_44 {dimension_numbers = #tpu.dot_dimension_numbers<[1], [0], [0], [1], [0, 0, 1, 1], [], []>} : vector<2x32xf32>, vector<32x96xf32>, vector<2x96xf32> -> vector<2x96xf32>
    %230 = vector.extract_strided_slice %228 {offsets = [0, 0], sizes = [2, 32], strides = [1, 1]} : vector<2x96xf32> to vector<2x32xf32>
    %231 = vector.extract_strided_slice %229 {offsets = [0, 0], sizes = [2, 32], strides = [1, 1]} : vector<2x96xf32> to vector<2x32xf32>
    %232 = arith.addf %230, %231 : vector<2x32xf32>
    %233 = arith.negf %232 : vector<2x32xf32>
    %234 = math.exp %233 : vector<2x32xf32>
    %cst_45 = arith.constant 1.000000e+00 : f32
    %235 = vector.broadcast %cst_45 : f32 to vector<2x32xf32>
    %236 = arith.addf %235, %234 : vector<2x32xf32>
    %237 = arith.divf %235, %236 : vector<2x32xf32>
    %238 = vector.extract_strided_slice %228 {offsets = [0, 32], sizes = [2, 32], strides = [1, 1]} : vector<2x96xf32> to vector<2x32xf32>
    %239 = vector.extract_strided_slice %229 {offsets = [0, 32], sizes = [2, 32], strides = [1, 1]} : vector<2x96xf32> to vector<2x32xf32>
    %240 = arith.addf %238, %239 : vector<2x32xf32>
    %241 = arith.negf %240 : vector<2x32xf32>
    %242 = math.exp %241 : vector<2x32xf32>
    %cst_46 = arith.constant 1.000000e+00 : f32
    %243 = vector.broadcast %cst_46 : f32 to vector<2x32xf32>
    %244 = arith.addf %243, %242 : vector<2x32xf32>
    %245 = arith.divf %243, %244 : vector<2x32xf32>
    %246 = vector.extract_strided_slice %228 {offsets = [0, 64], sizes = [2, 32], strides = [1, 1]} : vector<2x96xf32> to vector<2x32xf32>
    %247 = vector.extract_strided_slice %229 {offsets = [0, 64], sizes = [2, 32], strides = [1, 1]} : vector<2x96xf32> to vector<2x32xf32>
    %248 = vector.broadcast %1 : vector<1x32xf32> to vector<2x32xf32>
    %249 = arith.addf %247, %248 : vector<2x32xf32>
    %250 = arith.mulf %237, %249 : vector<2x32xf32>
    %251 = arith.addf %246, %250 : vector<2x32xf32>
    %252 = math.tanh %251 : vector<2x32xf32>
    %cst_47 = arith.constant 1.000000e+00 : f32
    %253 = vector.broadcast %cst_47 : f32 to vector<2x32xf32>
    %254 = arith.subf %253, %245 : vector<2x32xf32>
    %255 = arith.mulf %254, %252 : vector<2x32xf32>
    %256 = arith.mulf %245, %225 : vector<2x32xf32>
    %257 = arith.addf %255, %256 : vector<2x32xf32>
    %258 = vector.broadcast %c6_i32 : i32 to vector<2x1xi32>
    %259 = arith.cmpi sgt, %2, %258 : vector<2x1xi32>
    %260 = vector.shape_cast %259 : vector<2x1xi1> to vector<2x1xi1>
    %261 = vector.broadcast %260 : vector<2x1xi1> to vector<2x32xi1>
    %262 = arith.select %261, %257, %225 : vector<2x32xi1>, vector<2x32xf32>
    %c7_i32 = arith.constant 7 : i32
    %263 = arith.index_cast %c7_i32 : i32 to index
    %c0_48 = arith.constant 0 : index
    %c0_49 = arith.constant 0 : index
    %264 = vector.load %arg0[%263, %c0_48, %c0_49] : memref<8x2x96xf32, #tpu.memory_space<vmem>>, vector<1x2x96xf32>
    %265 = vector.shape_cast %264 : vector<1x2x96xf32> to vector<2x96xf32>
    %cst_50 = arith.constant dense<0.000000e+00> : vector<2x96xf32>
    %266 = tpu.matmul %262, %0, %cst_50 {dimension_numbers = #tpu.dot_dimension_numbers<[1], [0], [0], [1], [0, 0, 1, 1], [], []>} : vector<2x32xf32>, vector<32x96xf32>, vector<2x96xf32> -> vector<2x96xf32>
    %267 = vector.extract_strided_slice %265 {offsets = [0, 0], sizes = [2, 32], strides = [1, 1]} : vector<2x96xf32> to vector<2x32xf32>
    %268 = vector.extract_strided_slice %266 {offsets = [0, 0], sizes = [2, 32], strides = [1, 1]} : vector<2x96xf32> to vector<2x32xf32>
    %269 = arith.addf %267, %268 : vector<2x32xf32>
    %270 = arith.negf %269 : vector<2x32xf32>
    %271 = math.exp %270 : vector<2x32xf32>
    %cst_51 = arith.constant 1.000000e+00 : f32
    %272 = vector.broadcast %cst_51 : f32 to vector<2x32xf32>
    %273 = arith.addf %272, %271 : vector<2x32xf32>
    %274 = arith.divf %272, %273 : vector<2x32xf32>
    %275 = vector.extract_strided_slice %265 {offsets = [0, 32], sizes = [2, 32], strides = [1, 1]} : vector<2x96xf32> to vector<2x32xf32>
    %276 = vector.extract_strided_slice %266 {offsets = [0, 32], sizes = [2, 32], strides = [1, 1]} : vector<2x96xf32> to vector<2x32xf32>
    %277 = arith.addf %275, %276 : vector<2x32xf32>
    %278 = arith.negf %277 : vector<2x32xf32>
    %279 = math.exp %278 : vector<2x32xf32>
    %cst_52 = arith.constant 1.000000e+00 : f32
    %280 = vector.broadcast %cst_52 : f32 to vector<2x32xf32>
    %281 = arith.addf %280, %279 : vector<2x32xf32>
    %282 = arith.divf %280, %281 : vector<2x32xf32>
    %283 = vector.extract_strided_slice %265 {offsets = [0, 64], sizes = [2, 32], strides = [1, 1]} : vector<2x96xf32> to vector<2x32xf32>
    %284 = vector.extract_strided_slice %266 {offsets = [0, 64], sizes = [2, 32], strides = [1, 1]} : vector<2x96xf32> to vector<2x32xf32>
    %285 = vector.broadcast %1 : vector<1x32xf32> to vector<2x32xf32>
    %286 = arith.addf %284, %285 : vector<2x32xf32>
    %287 = arith.mulf %274, %286 : vector<2x32xf32>
    %288 = arith.addf %283, %287 : vector<2x32xf32>
    %289 = math.tanh %288 : vector<2x32xf32>
    %cst_53 = arith.constant 1.000000e+00 : f32
    %290 = vector.broadcast %cst_53 : f32 to vector<2x32xf32>
    %291 = arith.subf %290, %282 : vector<2x32xf32>
    %292 = arith.mulf %291, %289 : vector<2x32xf32>
    %293 = arith.mulf %282, %262 : vector<2x32xf32>
    %294 = arith.addf %292, %293 : vector<2x32xf32>
    %295 = vector.broadcast %c7_i32 : i32 to vector<2x1xi32>
    %296 = arith.cmpi sgt, %2, %295 : vector<2x1xi32>
    %297 = vector.shape_cast %296 : vector<2x1xi1> to vector<2x1xi1>
    %298 = vector.broadcast %297 : vector<2x1xi1> to vector<2x32xi1>
    %299 = arith.select %298, %294, %262 : vector<2x32xi1>, vector<2x32xf32>
    %c8_i32 = arith.constant 8 : i32
    %c0_54 = arith.constant 0 : index
    %c0_55 = arith.constant 0 : index
    %300 = vector.load %arg5[%c0_54, %c0_55] : memref<2x32xf32, #tpu.memory_space<vmem>>, vector<2x32xf32>
    tpu.vector_store %arg5[%c0_54, %c0_55], %299 {strides = array<i32>} : memref<2x32xf32, #tpu.memory_space<vmem>>, vector<2x32xf32>,
    return
  }
}

module attributes {stable_mosaic.version = 11 : i64} {
  func.func @latent_kernel(%arg0: memref<2x32xf32, #tpu.memory_space<vmem>>, %arg1: memref<32x64xf32, #tpu.memory_space<vmem>>, %arg2: memref<1x64xf32, #tpu.memory_space<vmem>>, %arg3: memref<2x32xf32, #tpu.memory_space<vmem>>, %arg4: memref<32x10xf32, #tpu.memory_space<vmem>>, %arg5: memref<32x10xf32, #tpu.memory_space<vmem>>, %arg6: memref<1x10xf32, #tpu.memory_space<vmem>>, %arg7: memref<1x10xf32, #tpu.memory_space<vmem>>, %arg8: memref<1x10xf32, #tpu.memory_space<vmem>>, %arg9: memref<2x32xf32, #tpu.memory_space<vmem>>, %arg10: memref<1x1xf32, #tpu.memory_space<vmem>>) attributes {dimension_semantics = [], scalar_prefetch = 0 : i64, scratch_operands = 0 : i64, tpu.core_type = #tpu.core_type<tc>} {
    %c0 = arith.constant 0 : index
    %c0_0 = arith.constant 0 : index
    %0 = vector.load %arg0[%c0, %c0_0] : memref<2x32xf32, #tpu.memory_space<vmem>>, vector<2x32xf32>
    %c0_1 = arith.constant 0 : index
    %c0_2 = arith.constant 0 : index
    %1 = vector.load %arg1[%c0_1, %c0_2] : memref<32x64xf32, #tpu.memory_space<vmem>>, vector<32x64xf32>
    %cst = arith.constant dense<0.000000e+00> : vector<2x64xf32>
    %2 = tpu.matmul %0, %1, %cst {dimension_numbers = #tpu.dot_dimension_numbers<[1], [0], [0], [1], [0, 0, 1, 1], [], []>} : vector<2x32xf32>, vector<32x64xf32>, vector<2x64xf32> -> vector<2x64xf32>
    %c0_3 = arith.constant 0 : index
    %c0_4 = arith.constant 0 : index
    %3 = vector.load %arg2[%c0_3, %c0_4] : memref<1x64xf32, #tpu.memory_space<vmem>>, vector<1x64xf32>
    %4 = vector.broadcast %3 : vector<1x64xf32> to vector<2x64xf32>
    %5 = arith.addf %2, %4 : vector<2x64xf32>
    %6 = vector.extract_strided_slice %5 {offsets = [0, 0], sizes = [2, 32], strides = [1, 1]} : vector<2x64xf32> to vector<2x32xf32>
    %7 = vector.extract_strided_slice %5 {offsets = [0, 32], sizes = [2, 32], strides = [1, 1]} : vector<2x64xf32> to vector<2x32xf32>
    %c0_5 = arith.constant 0 : index
    %c0_6 = arith.constant 0 : index
    %8 = vector.load %arg3[%c0_5, %c0_6] : memref<2x32xf32, #tpu.memory_space<vmem>>, vector<2x32xf32>
    %cst_7 = arith.constant 5.000000e-01 : f32
    %9 = vector.broadcast %cst_7 : f32 to vector<2x32xf32>
    %10 = arith.mulf %9, %7 : vector<2x32xf32>
    %11 = math.exp %10 : vector<2x32xf32>
    %12 = arith.mulf %8, %11 : vector<2x32xf32>
    %13 = arith.addf %6, %12 : vector<2x32xf32>
    %c0_8 = arith.constant 0 : index
    %c0_9 = arith.constant 0 : index
    %14 = vector.load %arg9[%c0_8, %c0_9] : memref<2x32xf32, #tpu.memory_space<vmem>>, vector<2x32xf32>
    tpu.vector_store %arg9[%c0_8, %c0_9], %13 {strides = array<i32>} : memref<2x32xf32, #tpu.memory_space<vmem>>, vector<2x32xf32>,
    %15 = arith.mulf %13, %13 : vector<2x32xf32>
    %c0_10 = arith.constant 0 : index
    %c0_11 = arith.constant 0 : index
    %16 = vector.load %arg4[%c0_10, %c0_11] : memref<32x10xf32, #tpu.memory_space<vmem>>, vector<32x10xf32>
    %cst_12 = arith.constant dense<0.000000e+00> : vector<2x10xf32>
    %17 = tpu.matmul %15, %16, %cst_12 {dimension_numbers = #tpu.dot_dimension_numbers<[1], [0], [0], [1], [0, 0, 1, 1], [], []>} : vector<2x32xf32>, vector<32x10xf32>, vector<2x10xf32> -> vector<2x10xf32>
    %c0_13 = arith.constant 0 : index
    %c0_14 = arith.constant 0 : index
    %18 = vector.load %arg5[%c0_13, %c0_14] : memref<32x10xf32, #tpu.memory_space<vmem>>, vector<32x10xf32>
    %cst_15 = arith.constant dense<0.000000e+00> : vector<2x10xf32>
    %19 = tpu.matmul %13, %18, %cst_15 {dimension_numbers = #tpu.dot_dimension_numbers<[1], [0], [0], [1], [0, 0, 1, 1], [], []>} : vector<2x32xf32>, vector<32x10xf32>, vector<2x10xf32> -> vector<2x10xf32>
    %cst_16 = arith.constant 2.000000e+00 : f32
    %20 = vector.broadcast %cst_16 : f32 to vector<2x10xf32>
    %21 = arith.mulf %20, %19 : vector<2x10xf32>
    %22 = arith.subf %17, %21 : vector<2x10xf32>
    %c0_17 = arith.constant 0 : index
    %c0_18 = arith.constant 0 : index
    %23 = vector.load %arg6[%c0_17, %c0_18] : memref<1x10xf32, #tpu.memory_space<vmem>>, vector<1x10xf32>
    %24 = vector.broadcast %23 : vector<1x10xf32> to vector<2x10xf32>
    %25 = arith.addf %22, %24 : vector<2x10xf32>
    %cst_19 = arith.constant -5.000000e-01 : f32
    %26 = vector.broadcast %cst_19 : f32 to vector<2x10xf32>
    %27 = arith.mulf %26, %25 : vector<2x10xf32>
    %cst_20 = arith.constant dense<0xFF800000> : vector<2xf32>
    %28 = vector.multi_reduction <maximumf>, %27, %cst_20 [1] : vector<2x10xf32> to vector<2xf32>
    %29 = vector.shape_cast %28 : vector<2xf32> to vector<2x1xf32>
    %30 = vector.broadcast %29 : vector<2x1xf32> to vector<2x10xf32>
    %31 = arith.subf %27, %30 : vector<2x10xf32>
    %32 = math.exp %31 : vector<2x10xf32>
    %cst_21 = arith.constant dense<0.000000e+00> : vector<2xf32>
    %33 = vector.multi_reduction <add>, %32, %cst_21 [1] : vector<2x10xf32> to vector<2xf32>
    %34 = vector.shape_cast %33 : vector<2xf32> to vector<2x1xf32>
    %35 = vector.broadcast %34 : vector<2x1xf32> to vector<2x10xf32>
    %36 = arith.divf %32, %35 : vector<2x10xf32>
    %cst_22 = arith.constant 1.000000e-10 : f32
    %37 = vector.broadcast %cst_22 : f32 to vector<2x10xf32>
    %38 = arith.addf %36, %37 : vector<2x10xf32>
    %39 = math.log %38 : vector<2x10xf32>
    %c0_23 = arith.constant 0 : index
    %c0_24 = arith.constant 0 : index
    %40 = vector.load %arg8[%c0_23, %c0_24] : memref<1x10xf32, #tpu.memory_space<vmem>>, vector<1x10xf32>
    %41 = vector.broadcast %40 : vector<1x10xf32> to vector<2x10xf32>
    %42 = arith.subf %39, %41 : vector<2x10xf32>
    %43 = arith.mulf %38, %42 : vector<2x10xf32>
    %44 = vector.shape_cast %43 : vector<2x10xf32> to vector<1x2x10xf32>
    %cst_25 = arith.constant dense<0.000000e+00> : vector<1xf32>
    %45 = vector.multi_reduction <add>, %44, %cst_25 [1, 2] : vector<1x2x10xf32> to vector<1xf32>
    %46 = vector.shape_cast %45 : vector<1xf32> to vector<1x1x1xf32>
    %47 = vector.extract %46[0, 0, 0] : f32 from vector<1x1x1xf32>
    %cst_26 = arith.constant 2.000000e+00 : f32
    %48 = arith.divf %47, %cst_26 : f32
    %cst_27 = arith.constant 1.83787704 : f32
    %49 = vector.broadcast %cst_27 : f32 to vector<2x32xf32>
    %50 = arith.addf %49, %7 : vector<2x32xf32>
    %51 = arith.subf %13, %6 : vector<2x32xf32>
    %52 = arith.mulf %51, %51 : vector<2x32xf32>
    %cst_28 = arith.constant 0.000000e+00 : f32
    %53 = vector.broadcast %cst_28 : f32 to vector<2x32xf32>
    %54 = arith.subf %53, %7 : vector<2x32xf32>
    %55 = math.exp %54 : vector<2x32xf32>
    %56 = arith.mulf %52, %55 : vector<2x32xf32>
    %57 = arith.addf %50, %56 : vector<2x32xf32>
    %cst_29 = arith.constant dense<0.000000e+00> : vector<2xf32>
    %58 = vector.multi_reduction <add>, %57, %cst_29 [1] : vector<2x32xf32> to vector<2xf32>
    %59 = vector.shape_cast %58 : vector<2xf32> to vector<2x1xf32>
    %cst_30 = arith.constant -5.000000e-01 : f32
    %60 = vector.broadcast %cst_30 : f32 to vector<2x1xf32>
    %61 = arith.mulf %60, %59 : vector<2x1xf32>
    %c0_31 = arith.constant 0 : index
    %c0_32 = arith.constant 0 : index
    %62 = vector.load %arg7[%c0_31, %c0_32] : memref<1x10xf32, #tpu.memory_space<vmem>>, vector<1x10xf32>
    %cst_33 = arith.constant 58.8120651 : f32
    %63 = vector.broadcast %cst_33 : f32 to vector<1x10xf32>
    %64 = arith.addf %63, %62 : vector<1x10xf32>
    %65 = vector.broadcast %64 : vector<1x10xf32> to vector<2x10xf32>
    %66 = arith.addf %65, %25 : vector<2x10xf32>
    %cst_34 = arith.constant -5.000000e-01 : f32
    %67 = vector.broadcast %cst_34 : f32 to vector<2x10xf32>
    %68 = arith.mulf %67, %66 : vector<2x10xf32>
    %69 = vector.broadcast %61 : vector<2x1xf32> to vector<2x10xf32>
    %70 = arith.subf %69, %68 : vector<2x10xf32>
    %71 = vector.shape_cast %70 : vector<2x10xf32> to vector<1x2x10xf32>
    %cst_35 = arith.constant dense<0.000000e+00> : vector<1xf32>
    %72 = vector.multi_reduction <add>, %71, %cst_35 [1, 2] : vector<1x2x10xf32> to vector<1xf32>
    %73 = vector.shape_cast %72 : vector<1xf32> to vector<1x1x1xf32>
    %74 = vector.extract %73[0, 0, 0] : f32 from vector<1x1x1xf32>
    %cst_36 = arith.constant 2.000000e+01 : f32
    %75 = arith.divf %74, %cst_36 : f32
    %cst_37 = arith.constant 0.000000e+00 : f32
    %76 = vector.broadcast %cst_37 : f32 to vector<1x1xf32>
    %cst_38 = arith.constant 3.200000e+01 : f32
    %77 = arith.divf %75, %cst_38 : f32
    %78 = arith.addf %48, %77 : f32
    %79 = vector.broadcast %78 : f32 to vector<1x1xf32>
    %80 = arith.addf %76, %79 : vector<1x1xf32>
    %c0_39 = arith.constant 0 : index
    %c0_40 = arith.constant 0 : index
    %81 = vector.load %arg10[%c0_39, %c0_40] : memref<1x1xf32, #tpu.memory_space<vmem>>, vector<1x1xf32>
    tpu.vector_store %arg10[%c0_39, %c0_40], %80 {strides = array<i32>} : memref<1x1xf32, #tpu.memory_space<vmem>>, vector<1x1xf32>,
    return
  }
}

module attributes {stable_mosaic.version = 11 : i64} {
  func.func @gru_decode_head_kernel(%arg0: memref<8x2x96xf32, #tpu.memory_space<vmem>>, %arg1: memref<2x32xf32, #tpu.memory_space<vmem>>, %arg2: memref<2x1xi32, #tpu.memory_space<vmem>>, %arg3: memref<32x96xf32, #tpu.memory_space<vmem>>, %arg4: memref<1x32xf32, #tpu.memory_space<vmem>>, %arg5: memref<1x32xf32, #tpu.memory_space<vmem>>, %arg6: memref<1x32xf32, #tpu.memory_space<vmem>>, %arg7: memref<32x16xf32, #tpu.memory_space<vmem>>, %arg8: memref<1x16xf32, #tpu.memory_space<vmem>>, %arg9: memref<8x2x1xi32, #tpu.memory_space<vmem>>, %arg10: memref<2x1xf32, #tpu.memory_space<vmem>>) attributes {dimension_semantics = [], scalar_prefetch = 0 : i64, scratch_operands = 0 : i64, tpu.core_type = #tpu.core_type<tc>} {
    %c0 = arith.constant 0 : index
    %c0_0 = arith.constant 0 : index
    %0 = vector.load %arg3[%c0, %c0_0] : memref<32x96xf32, #tpu.memory_space<vmem>>, vector<32x96xf32>
    %c0_1 = arith.constant 0 : index
    %c0_2 = arith.constant 0 : index
    %1 = vector.load %arg4[%c0_1, %c0_2] : memref<1x32xf32, #tpu.memory_space<vmem>>, vector<1x32xf32>
    %c0_3 = arith.constant 0 : index
    %c0_4 = arith.constant 0 : index
    %2 = vector.load %arg5[%c0_3, %c0_4] : memref<1x32xf32, #tpu.memory_space<vmem>>, vector<1x32xf32>
    %c0_5 = arith.constant 0 : index
    %c0_6 = arith.constant 0 : index
    %3 = vector.load %arg6[%c0_5, %c0_6] : memref<1x32xf32, #tpu.memory_space<vmem>>, vector<1x32xf32>
    %c0_7 = arith.constant 0 : index
    %c0_8 = arith.constant 0 : index
    %4 = vector.load %arg7[%c0_7, %c0_8] : memref<32x16xf32, #tpu.memory_space<vmem>>, vector<32x16xf32>
    %c0_9 = arith.constant 0 : index
    %c0_10 = arith.constant 0 : index
    %5 = vector.load %arg8[%c0_9, %c0_10] : memref<1x16xf32, #tpu.memory_space<vmem>>, vector<1x16xf32>
    %c0_11 = arith.constant 0 : index
    %c0_12 = arith.constant 0 : index
    %6 = vector.load %arg2[%c0_11, %c0_12] : memref<2x1xi32, #tpu.memory_space<vmem>>, vector<2x1xi32>
    %7 = tpu.iota {dimensions = array<i32: 1>} : vector<2x16xi32>
    %c0_13 = arith.constant 0 : index
    %c0_14 = arith.constant 0 : index
    %8 = vector.load %arg1[%c0_13, %c0_14] : memref<2x32xf32, #tpu.memory_space<vmem>>, vector<2x32xf32>
    %cst = arith.constant 0.000000e+00 : f32
    %9 = vector.broadcast %cst : f32 to vector<2x1xf32>
    %c0_i32 = arith.constant 0 : i32
    %10 = arith.index_cast %c0_i32 : i32 to index
    %c0_15 = arith.constant 0 : index
    %c0_16 = arith.constant 0 : index
    %11 = vector.load %arg0[%10, %c0_15, %c0_16] : memref<8x2x96xf32, #tpu.memory_space<vmem>>, vector<1x2x96xf32>
    %12 = vector.shape_cast %11 : vector<1x2x96xf32> to vector<2x96xf32>
    %cst_17 = arith.constant dense<0.000000e+00> : vector<2x96xf32>
    %13 = tpu.matmul %8, %0, %cst_17 {dimension_numbers = #tpu.dot_dimension_numbers<[1], [0], [0], [1], [0, 0, 1, 1], [], []>} : vector<2x32xf32>, vector<32x96xf32>, vector<2x96xf32> -> vector<2x96xf32>
    %14 = vector.extract_strided_slice %12 {offsets = [0, 0], sizes = [2, 32], strides = [1, 1]} : vector<2x96xf32> to vector<2x32xf32>
    %15 = vector.extract_strided_slice %13 {offsets = [0, 0], sizes = [2, 32], strides = [1, 1]} : vector<2x96xf32> to vector<2x32xf32>
    %16 = arith.addf %14, %15 : vector<2x32xf32>
    %17 = arith.negf %16 : vector<2x32xf32>
    %18 = math.exp %17 : vector<2x32xf32>
    %cst_18 = arith.constant 1.000000e+00 : f32
    %19 = vector.broadcast %cst_18 : f32 to vector<2x32xf32>
    %20 = arith.addf %19, %18 : vector<2x32xf32>
    %21 = arith.divf %19, %20 : vector<2x32xf32>
    %22 = vector.extract_strided_slice %12 {offsets = [0, 32], sizes = [2, 32], strides = [1, 1]} : vector<2x96xf32> to vector<2x32xf32>
    %23 = vector.extract_strided_slice %13 {offsets = [0, 32], sizes = [2, 32], strides = [1, 1]} : vector<2x96xf32> to vector<2x32xf32>
    %24 = arith.addf %22, %23 : vector<2x32xf32>
    %25 = arith.negf %24 : vector<2x32xf32>
    %26 = math.exp %25 : vector<2x32xf32>
    %cst_19 = arith.constant 1.000000e+00 : f32
    %27 = vector.broadcast %cst_19 : f32 to vector<2x32xf32>
    %28 = arith.addf %27, %26 : vector<2x32xf32>
    %29 = arith.divf %27, %28 : vector<2x32xf32>
    %30 = vector.extract_strided_slice %12 {offsets = [0, 64], sizes = [2, 32], strides = [1, 1]} : vector<2x96xf32> to vector<2x32xf32>
    %31 = vector.extract_strided_slice %13 {offsets = [0, 64], sizes = [2, 32], strides = [1, 1]} : vector<2x96xf32> to vector<2x32xf32>
    %32 = vector.broadcast %1 : vector<1x32xf32> to vector<2x32xf32>
    %33 = arith.addf %31, %32 : vector<2x32xf32>
    %34 = arith.mulf %21, %33 : vector<2x32xf32>
    %35 = arith.addf %30, %34 : vector<2x32xf32>
    %36 = math.tanh %35 : vector<2x32xf32>
    %cst_20 = arith.constant 1.000000e+00 : f32
    %37 = vector.broadcast %cst_20 : f32 to vector<2x32xf32>
    %38 = arith.subf %37, %29 : vector<2x32xf32>
    %39 = arith.mulf %38, %36 : vector<2x32xf32>
    %40 = arith.mulf %29, %8 : vector<2x32xf32>
    %41 = arith.addf %39, %40 : vector<2x32xf32>
    %42 = vector.broadcast %c0_i32 : i32 to vector<2x1xi32>
    %43 = arith.cmpi sgt, %6, %42 : vector<2x1xi32>
    %44 = vector.shape_cast %43 : vector<2x1xi1> to vector<2x1xi1>
    %45 = vector.broadcast %44 : vector<2x1xi1> to vector<2x32xi1>
    %46 = arith.select %45, %41, %8 : vector<2x32xi1>, vector<2x32xf32>
    %cst_21 = arith.constant 0.000000e+00 : f32
    %47 = vector.shape_cast %43 : vector<2x1xi1> to vector<2x1xi1>
    %48 = vector.broadcast %47 : vector<2x1xi1> to vector<2x32xi1>
    %49 = vector.broadcast %cst_21 : f32 to vector<2x32xf32>
    %50 = arith.select %48, %41, %49 : vector<2x32xi1>, vector<2x32xf32>
    %cst_22 = arith.constant dense<0.000000e+00> : vector<2xf32>
    %51 = vector.multi_reduction <add>, %50, %cst_22 [1] : vector<2x32xf32> to vector<2xf32>
    %52 = vector.shape_cast %51 : vector<2xf32> to vector<2x1xf32>
    %cst_23 = arith.constant 3.200000e+01 : f32
    %53 = vector.broadcast %cst_23 : f32 to vector<2x1xf32>
    %54 = arith.divf %52, %53 : vector<2x1xf32>
    %55 = vector.broadcast %54 : vector<2x1xf32> to vector<2x32xf32>
    %56 = arith.subf %50, %55 : vector<2x32xf32>
    %57 = arith.mulf %56, %56 : vector<2x32xf32>
    %cst_24 = arith.constant dense<0.000000e+00> : vector<2xf32>
    %58 = vector.multi_reduction <add>, %57, %cst_24 [1] : vector<2x32xf32> to vector<2xf32>
    %59 = vector.shape_cast %58 : vector<2xf32> to vector<2x1xf32>
    %cst_25 = arith.constant 3.200000e+01 : f32
    %60 = vector.broadcast %cst_25 : f32 to vector<2x1xf32>
    %61 = arith.divf %59, %60 : vector<2x1xf32>
    %62 = vector.broadcast %54 : vector<2x1xf32> to vector<2x32xf32>
    %63 = arith.subf %50, %62 : vector<2x32xf32>
    %cst_26 = arith.constant 9.99999974E-6 : f32
    %64 = vector.broadcast %cst_26 : f32 to vector<2x1xf32>
    %65 = arith.addf %61, %64 : vector<2x1xf32>
    %66 = math.rsqrt %65 : vector<2x1xf32>
    %67 = vector.broadcast %66 : vector<2x1xf32> to vector<2x32xf32>
    %68 = arith.mulf %63, %67 : vector<2x32xf32>
    %69 = vector.broadcast %2 : vector<1x32xf32> to vector<2x32xf32>
    %70 = arith.mulf %68, %69 : vector<2x32xf32>
    %71 = vector.broadcast %3 : vector<1x32xf32> to vector<2x32xf32>
    %72 = arith.addf %70, %71 : vector<2x32xf32>
    %cst_27 = arith.constant dense<0.000000e+00> : vector<2x16xf32>
    %73 = tpu.matmul %72, %4, %cst_27 {dimension_numbers = #tpu.dot_dimension_numbers<[1], [0], [0], [1], [0, 0, 1, 1], [], []>} : vector<2x32xf32>, vector<32x16xf32>, vector<2x16xf32> -> vector<2x16xf32>
    %74 = vector.broadcast %5 : vector<1x16xf32> to vector<2x16xf32>
    %75 = arith.addf %73, %74 : vector<2x16xf32>
    %cst_28 = arith.constant dense<0xFF800000> : vector<2xf32>
    %76 = vector.multi_reduction <maximumf>, %75, %cst_28 [1] : vector<2x16xf32> to vector<2xf32>
    %77 = vector.shape_cast %76 : vector<2xf32> to vector<2x1xf32>
    %78 = vector.broadcast %77 : vector<2x1xf32> to vector<2x16xf32>
    %79 = arith.subf %75, %78 : vector<2x16xf32>
    %80 = math.exp %79 : vector<2x16xf32>
    %cst_29 = arith.constant dense<0.000000e+00> : vector<2xf32>
    %81 = vector.multi_reduction <add>, %80, %cst_29 [1] : vector<2x16xf32> to vector<2xf32>
    %82 = vector.shape_cast %81 : vector<2xf32> to vector<2x1xf32>
    %83 = math.log %82 : vector<2x1xf32>
    %84 = arith.addf %77, %83 : vector<2x1xf32>
    %85 = arith.index_cast %c0_i32 : i32 to index
    %c0_30 = arith.constant 0 : index
    %c0_31 = arith.constant 0 : index
    %86 = vector.load %arg9[%85, %c0_30, %c0_31] : memref<8x2x1xi32, #tpu.memory_space<vmem>>, vector<1x2x1xi32>
    %87 = vector.shape_cast %86 : vector<1x2x1xi32> to vector<2x1xi32>
    %88 = vector.broadcast %87 : vector<2x1xi32> to vector<2x16xi32>
    %89 = arith.cmpi eq, %7, %88 : vector<2x16xi32>
    %90 = arith.extui %89 : vector<2x16xi1> to vector<2x16xi32>
    %91 = arith.sitofp %90 : vector<2x16xi32> to vector<2x16xf32>
    %92 = arith.mulf %75, %91 : vector<2x16xf32>
    %cst_32 = arith.constant dense<0.000000e+00> : vector<2xf32>
    %93 = vector.multi_reduction <add>, %92, %cst_32 [1] : vector<2x16xf32> to vector<2xf32>
    %94 = vector.shape_cast %93 : vector<2xf32> to vector<2x1xf32>
    %c0_i32_33 = arith.constant 0 : i32
    %95 = vector.broadcast %c0_i32_33 : i32 to vector<2x1xi32>
    %96 = arith.cmpi sge, %87, %95 : vector<2x1xi32>
    %97 = arith.extui %96 : vector<2x1xi1> to vector<2x1xi32>
    %98 = arith.sitofp %97 : vector<2x1xi32> to vector<2x1xf32>
    %99 = arith.subf %84, %94 : vector<2x1xf32>
    %100 = arith.mulf %99, %98 : vector<2x1xf32>
    %101 = arith.addf %9, %100 : vector<2x1xf32>
    %c1_i32 = arith.constant 1 : i32
    %102 = arith.index_cast %c1_i32 : i32 to index
    %c0_34 = arith.constant 0 : index
    %c0_35 = arith.constant 0 : index
    %103 = vector.load %arg0[%102, %c0_34, %c0_35] : memref<8x2x96xf32, #tpu.memory_space<vmem>>, vector<1x2x96xf32>
    %104 = vector.shape_cast %103 : vector<1x2x96xf32> to vector<2x96xf32>
    %cst_36 = arith.constant dense<0.000000e+00> : vector<2x96xf32>
    %105 = tpu.matmul %46, %0, %cst_36 {dimension_numbers = #tpu.dot_dimension_numbers<[1], [0], [0], [1], [0, 0, 1, 1], [], []>} : vector<2x32xf32>, vector<32x96xf32>, vector<2x96xf32> -> vector<2x96xf32>
    %106 = vector.extract_strided_slice %104 {offsets = [0, 0], sizes = [2, 32], strides = [1, 1]} : vector<2x96xf32> to vector<2x32xf32>
    %107 = vector.extract_strided_slice %105 {offsets = [0, 0], sizes = [2, 32], strides = [1, 1]} : vector<2x96xf32> to vector<2x32xf32>
    %108 = arith.addf %106, %107 : vector<2x32xf32>
    %109 = arith.negf %108 : vector<2x32xf32>
    %110 = math.exp %109 : vector<2x32xf32>
    %cst_37 = arith.constant 1.000000e+00 : f32
    %111 = vector.broadcast %cst_37 : f32 to vector<2x32xf32>
    %112 = arith.addf %111, %110 : vector<2x32xf32>
    %113 = arith.divf %111, %112 : vector<2x32xf32>
    %114 = vector.extract_strided_slice %104 {offsets = [0, 32], sizes = [2, 32], strides = [1, 1]} : vector<2x96xf32> to vector<2x32xf32>
    %115 = vector.extract_strided_slice %105 {offsets = [0, 32], sizes = [2, 32], strides = [1, 1]} : vector<2x96xf32> to vector<2x32xf32>
    %116 = arith.addf %114, %115 : vector<2x32xf32>
    %117 = arith.negf %116 : vector<2x32xf32>
    %118 = math.exp %117 : vector<2x32xf32>
    %cst_38 = arith.constant 1.000000e+00 : f32
    %119 = vector.broadcast %cst_38 : f32 to vector<2x32xf32>
    %120 = arith.addf %119, %118 : vector<2x32xf32>
    %121 = arith.divf %119, %120 : vector<2x32xf32>
    %122 = vector.extract_strided_slice %104 {offsets = [0, 64], sizes = [2, 32], strides = [1, 1]} : vector<2x96xf32> to vector<2x32xf32>
    %123 = vector.extract_strided_slice %105 {offsets = [0, 64], sizes = [2, 32], strides = [1, 1]} : vector<2x96xf32> to vector<2x32xf32>
    %124 = vector.broadcast %1 : vector<1x32xf32> to vector<2x32xf32>
    %125 = arith.addf %123, %124 : vector<2x32xf32>
    %126 = arith.mulf %113, %125 : vector<2x32xf32>
    %127 = arith.addf %122, %126 : vector<2x32xf32>
    %128 = math.tanh %127 : vector<2x32xf32>
    %cst_39 = arith.constant 1.000000e+00 : f32
    %129 = vector.broadcast %cst_39 : f32 to vector<2x32xf32>
    %130 = arith.subf %129, %121 : vector<2x32xf32>
    %131 = arith.mulf %130, %128 : vector<2x32xf32>
    %132 = arith.mulf %121, %46 : vector<2x32xf32>
    %133 = arith.addf %131, %132 : vector<2x32xf32>
    %134 = vector.broadcast %c1_i32 : i32 to vector<2x1xi32>
    %135 = arith.cmpi sgt, %6, %134 : vector<2x1xi32>
    %136 = vector.shape_cast %135 : vector<2x1xi1> to vector<2x1xi1>
    %137 = vector.broadcast %136 : vector<2x1xi1> to vector<2x32xi1>
    %138 = arith.select %137, %133, %46 : vector<2x32xi1>, vector<2x32xf32>
    %cst_40 = arith.constant 0.000000e+00 : f32
    %139 = vector.shape_cast %135 : vector<2x1xi1> to vector<2x1xi1>
    %140 = vector.broadcast %139 : vector<2x1xi1> to vector<2x32xi1>
    %141 = vector.broadcast %cst_40 : f32 to vector<2x32xf32>
    %142 = arith.select %140, %133, %141 : vector<2x32xi1>, vector<2x32xf32>
    %cst_41 = arith.constant dense<0.000000e+00> : vector<2xf32>
    %143 = vector.multi_reduction <add>, %142, %cst_41 [1] : vector<2x32xf32> to vector<2xf32>
    %144 = vector.shape_cast %143 : vector<2xf32> to vector<2x1xf32>
    %cst_42 = arith.constant 3.200000e+01 : f32
    %145 = vector.broadcast %cst_42 : f32 to vector<2x1xf32>
    %146 = arith.divf %144, %145 : vector<2x1xf32>
    %147 = vector.broadcast %146 : vector<2x1xf32> to vector<2x32xf32>
    %148 = arith.subf %142, %147 : vector<2x32xf32>
    %149 = arith.mulf %148, %148 : vector<2x32xf32>
    %cst_43 = arith.constant dense<0.000000e+00> : vector<2xf32>
    %150 = vector.multi_reduction <add>, %149, %cst_43 [1] : vector<2x32xf32> to vector<2xf32>
    %151 = vector.shape_cast %150 : vector<2xf32> to vector<2x1xf32>
    %cst_44 = arith.constant 3.200000e+01 : f32
    %152 = vector.broadcast %cst_44 : f32 to vector<2x1xf32>
    %153 = arith.divf %151, %152 : vector<2x1xf32>
    %154 = vector.broadcast %146 : vector<2x1xf32> to vector<2x32xf32>
    %155 = arith.subf %142, %154 : vector<2x32xf32>
    %cst_45 = arith.constant 9.99999974E-6 : f32
    %156 = vector.broadcast %cst_45 : f32 to vector<2x1xf32>
    %157 = arith.addf %153, %156 : vector<2x1xf32>
    %158 = math.rsqrt %157 : vector<2x1xf32>
    %159 = vector.broadcast %158 : vector<2x1xf32> to vector<2x32xf32>
    %160 = arith.mulf %155, %159 : vector<2x32xf32>
    %161 = vector.broadcast %2 : vector<1x32xf32> to vector<2x32xf32>
    %162 = arith.mulf %160, %161 : vector<2x32xf32>
    %163 = vector.broadcast %3 : vector<1x32xf32> to vector<2x32xf32>
    %164 = arith.addf %162, %163 : vector<2x32xf32>
    %cst_46 = arith.constant dense<0.000000e+00> : vector<2x16xf32>
    %165 = tpu.matmul %164, %4, %cst_46 {dimension_numbers = #tpu.dot_dimension_numbers<[1], [0], [0], [1], [0, 0, 1, 1], [], []>} : vector<2x32xf32>, vector<32x16xf32>, vector<2x16xf32> -> vector<2x16xf32>
    %166 = vector.broadcast %5 : vector<1x16xf32> to vector<2x16xf32>
    %167 = arith.addf %165, %166 : vector<2x16xf32>
    %cst_47 = arith.constant dense<0xFF800000> : vector<2xf32>
    %168 = vector.multi_reduction <maximumf>, %167, %cst_47 [1] : vector<2x16xf32> to vector<2xf32>
    %169 = vector.shape_cast %168 : vector<2xf32> to vector<2x1xf32>
    %170 = vector.broadcast %169 : vector<2x1xf32> to vector<2x16xf32>
    %171 = arith.subf %167, %170 : vector<2x16xf32>
    %172 = math.exp %171 : vector<2x16xf32>
    %cst_48 = arith.constant dense<0.000000e+00> : vector<2xf32>
    %173 = vector.multi_reduction <add>, %172, %cst_48 [1] : vector<2x16xf32> to vector<2xf32>
    %174 = vector.shape_cast %173 : vector<2xf32> to vector<2x1xf32>
    %175 = math.log %174 : vector<2x1xf32>
    %176 = arith.addf %169, %175 : vector<2x1xf32>
    %177 = arith.index_cast %c1_i32 : i32 to index
    %c0_49 = arith.constant 0 : index
    %c0_50 = arith.constant 0 : index
    %178 = vector.load %arg9[%177, %c0_49, %c0_50] : memref<8x2x1xi32, #tpu.memory_space<vmem>>, vector<1x2x1xi32>
    %179 = vector.shape_cast %178 : vector<1x2x1xi32> to vector<2x1xi32>
    %180 = vector.broadcast %179 : vector<2x1xi32> to vector<2x16xi32>
    %181 = arith.cmpi eq, %7, %180 : vector<2x16xi32>
    %182 = arith.extui %181 : vector<2x16xi1> to vector<2x16xi32>
    %183 = arith.sitofp %182 : vector<2x16xi32> to vector<2x16xf32>
    %184 = arith.mulf %167, %183 : vector<2x16xf32>
    %cst_51 = arith.constant dense<0.000000e+00> : vector<2xf32>
    %185 = vector.multi_reduction <add>, %184, %cst_51 [1] : vector<2x16xf32> to vector<2xf32>
    %186 = vector.shape_cast %185 : vector<2xf32> to vector<2x1xf32>
    %c0_i32_52 = arith.constant 0 : i32
    %187 = vector.broadcast %c0_i32_52 : i32 to vector<2x1xi32>
    %188 = arith.cmpi sge, %179, %187 : vector<2x1xi32>
    %189 = arith.extui %188 : vector<2x1xi1> to vector<2x1xi32>
    %190 = arith.sitofp %189 : vector<2x1xi32> to vector<2x1xf32>
    %191 = arith.subf %176, %186 : vector<2x1xf32>
    %192 = arith.mulf %191, %190 : vector<2x1xf32>
    %193 = arith.addf %101, %192 : vector<2x1xf32>
    %c2_i32 = arith.constant 2 : i32
    %194 = arith.index_cast %c2_i32 : i32 to index
    %c0_53 = arith.constant 0 : index
    %c0_54 = arith.constant 0 : index
    %195 = vector.load %arg0[%194, %c0_53, %c0_54] : memref<8x2x96xf32, #tpu.memory_space<vmem>>, vector<1x2x96xf32>
    %196 = vector.shape_cast %195 : vector<1x2x96xf32> to vector<2x96xf32>
    %cst_55 = arith.constant dense<0.000000e+00> : vector<2x96xf32>
    %197 = tpu.matmul %138, %0, %cst_55 {dimension_numbers = #tpu.dot_dimension_numbers<[1], [0], [0], [1], [0, 0, 1, 1], [], []>} : vector<2x32xf32>, vector<32x96xf32>, vector<2x96xf32> -> vector<2x96xf32>
    %198 = vector.extract_strided_slice %196 {offsets = [0, 0], sizes = [2, 32], strides = [1, 1]} : vector<2x96xf32> to vector<2x32xf32>
    %199 = vector.extract_strided_slice %197 {offsets = [0, 0], sizes = [2, 32], strides = [1, 1]} : vector<2x96xf32> to vector<2x32xf32>
    %200 = arith.addf %198, %199 : vector<2x32xf32>
    %201 = arith.negf %200 : vector<2x32xf32>
    %202 = math.exp %201 : vector<2x32xf32>
    %cst_56 = arith.constant 1.000000e+00 : f32
    %203 = vector.broadcast %cst_56 : f32 to vector<2x32xf32>
    %204 = arith.addf %203, %202 : vector<2x32xf32>
    %205 = arith.divf %203, %204 : vector<2x32xf32>
    %206 = vector.extract_strided_slice %196 {offsets = [0, 32], sizes = [2, 32], strides = [1, 1]} : vector<2x96xf32> to vector<2x32xf32>
    %207 = vector.extract_strided_slice %197 {offsets = [0, 32], sizes = [2, 32], strides = [1, 1]} : vector<2x96xf32> to vector<2x32xf32>
    %208 = arith.addf %206, %207 : vector<2x32xf32>
    %209 = arith.negf %208 : vector<2x32xf32>
    %210 = math.exp %209 : vector<2x32xf32>
    %cst_57 = arith.constant 1.000000e+00 : f32
    %211 = vector.broadcast %cst_57 : f32 to vector<2x32xf32>
    %212 = arith.addf %211, %210 : vector<2x32xf32>
    %213 = arith.divf %211, %212 : vector<2x32xf32>
    %214 = vector.extract_strided_slice %196 {offsets = [0, 64], sizes = [2, 32], strides = [1, 1]} : vector<2x96xf32> to vector<2x32xf32>
    %215 = vector.extract_strided_slice %197 {offsets = [0, 64], sizes = [2, 32], strides = [1, 1]} : vector<2x96xf32> to vector<2x32xf32>
    %216 = vector.broadcast %1 : vector<1x32xf32> to vector<2x32xf32>
    %217 = arith.addf %215, %216 : vector<2x32xf32>
    %218 = arith.mulf %205, %217 : vector<2x32xf32>
    %219 = arith.addf %214, %218 : vector<2x32xf32>
    %220 = math.tanh %219 : vector<2x32xf32>
    %cst_58 = arith.constant 1.000000e+00 : f32
    %221 = vector.broadcast %cst_58 : f32 to vector<2x32xf32>
    %222 = arith.subf %221, %213 : vector<2x32xf32>
    %223 = arith.mulf %222, %220 : vector<2x32xf32>
    %224 = arith.mulf %213, %138 : vector<2x32xf32>
    %225 = arith.addf %223, %224 : vector<2x32xf32>
    %226 = vector.broadcast %c2_i32 : i32 to vector<2x1xi32>
    %227 = arith.cmpi sgt, %6, %226 : vector<2x1xi32>
    %228 = vector.shape_cast %227 : vector<2x1xi1> to vector<2x1xi1>
    %229 = vector.broadcast %228 : vector<2x1xi1> to vector<2x32xi1>
    %230 = arith.select %229, %225, %138 : vector<2x32xi1>, vector<2x32xf32>
    %cst_59 = arith.constant 0.000000e+00 : f32
    %231 = vector.shape_cast %227 : vector<2x1xi1> to vector<2x1xi1>
    %232 = vector.broadcast %231 : vector<2x1xi1> to vector<2x32xi1>
    %233 = vector.broadcast %cst_59 : f32 to vector<2x32xf32>
    %234 = arith.select %232, %225, %233 : vector<2x32xi1>, vector<2x32xf32>
    %cst_60 = arith.constant dense<0.000000e+00> : vector<2xf32>
    %235 = vector.multi_reduction <add>, %234, %cst_60 [1] : vector<2x32xf32> to vector<2xf32>
    %236 = vector.shape_cast %235 : vector<2xf32> to vector<2x1xf32>
    %cst_61 = arith.constant 3.200000e+01 : f32
    %237 = vector.broadcast %cst_61 : f32 to vector<2x1xf32>
    %238 = arith.divf %236, %237 : vector<2x1xf32>
    %239 = vector.broadcast %238 : vector<2x1xf32> to vector<2x32xf32>
    %240 = arith.subf %234, %239 : vector<2x32xf32>
    %241 = arith.mulf %240, %240 : vector<2x32xf32>
    %cst_62 = arith.constant dense<0.000000e+00> : vector<2xf32>
    %242 = vector.multi_reduction <add>, %241, %cst_62 [1] : vector<2x32xf32> to vector<2xf32>
    %243 = vector.shape_cast %242 : vector<2xf32> to vector<2x1xf32>
    %cst_63 = arith.constant 3.200000e+01 : f32
    %244 = vector.broadcast %cst_63 : f32 to vector<2x1xf32>
    %245 = arith.divf %243, %244 : vector<2x1xf32>
    %246 = vector.broadcast %238 : vector<2x1xf32> to vector<2x32xf32>
    %247 = arith.subf %234, %246 : vector<2x32xf32>
    %cst_64 = arith.constant 9.99999974E-6 : f32
    %248 = vector.broadcast %cst_64 : f32 to vector<2x1xf32>
    %249 = arith.addf %245, %248 : vector<2x1xf32>
    %250 = math.rsqrt %249 : vector<2x1xf32>
    %251 = vector.broadcast %250 : vector<2x1xf32> to vector<2x32xf32>
    %252 = arith.mulf %247, %251 : vector<2x32xf32>
    %253 = vector.broadcast %2 : vector<1x32xf32> to vector<2x32xf32>
    %254 = arith.mulf %252, %253 : vector<2x32xf32>
    %255 = vector.broadcast %3 : vector<1x32xf32> to vector<2x32xf32>
    %256 = arith.addf %254, %255 : vector<2x32xf32>
    %cst_65 = arith.constant dense<0.000000e+00> : vector<2x16xf32>
    %257 = tpu.matmul %256, %4, %cst_65 {dimension_numbers = #tpu.dot_dimension_numbers<[1], [0], [0], [1], [0, 0, 1, 1], [], []>} : vector<2x32xf32>, vector<32x16xf32>, vector<2x16xf32> -> vector<2x16xf32>
    %258 = vector.broadcast %5 : vector<1x16xf32> to vector<2x16xf32>
    %259 = arith.addf %257, %258 : vector<2x16xf32>
    %cst_66 = arith.constant dense<0xFF800000> : vector<2xf32>
    %260 = vector.multi_reduction <maximumf>, %259, %cst_66 [1] : vector<2x16xf32> to vector<2xf32>
    %261 = vector.shape_cast %260 : vector<2xf32> to vector<2x1xf32>
    %262 = vector.broadcast %261 : vector<2x1xf32> to vector<2x16xf32>
    %263 = arith.subf %259, %262 : vector<2x16xf32>
    %264 = math.exp %263 : vector<2x16xf32>
    %cst_67 = arith.constant dense<0.000000e+00> : vector<2xf32>
    %265 = vector.multi_reduction <add>, %264, %cst_67 [1] : vector<2x16xf32> to vector<2xf32>
    %266 = vector.shape_cast %265 : vector<2xf32> to vector<2x1xf32>
    %267 = math.log %266 : vector<2x1xf32>
    %268 = arith.addf %261, %267 : vector<2x1xf32>
    %269 = arith.index_cast %c2_i32 : i32 to index
    %c0_68 = arith.constant 0 : index
    %c0_69 = arith.constant 0 : index
    %270 = vector.load %arg9[%269, %c0_68, %c0_69] : memref<8x2x1xi32, #tpu.memory_space<vmem>>, vector<1x2x1xi32>
    %271 = vector.shape_cast %270 : vector<1x2x1xi32> to vector<2x1xi32>
    %272 = vector.broadcast %271 : vector<2x1xi32> to vector<2x16xi32>
    %273 = arith.cmpi eq, %7, %272 : vector<2x16xi32>
    %274 = arith.extui %273 : vector<2x16xi1> to vector<2x16xi32>
    %275 = arith.sitofp %274 : vector<2x16xi32> to vector<2x16xf32>
    %276 = arith.mulf %259, %275 : vector<2x16xf32>
    %cst_70 = arith.constant dense<0.000000e+00> : vector<2xf32>
    %277 = vector.multi_reduction <add>, %276, %cst_70 [1] : vector<2x16xf32> to vector<2xf32>
    %278 = vector.shape_cast %277 : vector<2xf32> to vector<2x1xf32>
    %c0_i32_71 = arith.constant 0 : i32
    %279 = vector.broadcast %c0_i32_71 : i32 to vector<2x1xi32>
    %280 = arith.cmpi sge, %271, %279 : vector<2x1xi32>
    %281 = arith.extui %280 : vector<2x1xi1> to vector<2x1xi32>
    %282 = arith.sitofp %281 : vector<2x1xi32> to vector<2x1xf32>
    %283 = arith.subf %268, %278 : vector<2x1xf32>
    %284 = arith.mulf %283, %282 : vector<2x1xf32>
    %285 = arith.addf %193, %284 : vector<2x1xf32>
    %c3_i32 = arith.constant 3 : i32
    %286 = arith.index_cast %c3_i32 : i32 to index
    %c0_72 = arith.constant 0 : index
    %c0_73 = arith.constant 0 : index
    %287 = vector.load %arg0[%286, %c0_72, %c0_73] : memref<8x2x96xf32, #tpu.memory_space<vmem>>, vector<1x2x96xf32>
    %288 = vector.shape_cast %287 : vector<1x2x96xf32> to vector<2x96xf32>
    %cst_74 = arith.constant dense<0.000000e+00> : vector<2x96xf32>
    %289 = tpu.matmul %230, %0, %cst_74 {dimension_numbers = #tpu.dot_dimension_numbers<[1], [0], [0], [1], [0, 0, 1, 1], [], []>} : vector<2x32xf32>, vector<32x96xf32>, vector<2x96xf32> -> vector<2x96xf32>
    %290 = vector.extract_strided_slice %288 {offsets = [0, 0], sizes = [2, 32], strides = [1, 1]} : vector<2x96xf32> to vector<2x32xf32>
    %291 = vector.extract_strided_slice %289 {offsets = [0, 0], sizes = [2, 32], strides = [1, 1]} : vector<2x96xf32> to vector<2x32xf32>
    %292 = arith.addf %290, %291 : vector<2x32xf32>
    %293 = arith.negf %292 : vector<2x32xf32>
    %294 = math.exp %293 : vector<2x32xf32>
    %cst_75 = arith.constant 1.000000e+00 : f32
    %295 = vector.broadcast %cst_75 : f32 to vector<2x32xf32>
    %296 = arith.addf %295, %294 : vector<2x32xf32>
    %297 = arith.divf %295, %296 : vector<2x32xf32>
    %298 = vector.extract_strided_slice %288 {offsets = [0, 32], sizes = [2, 32], strides = [1, 1]} : vector<2x96xf32> to vector<2x32xf32>
    %299 = vector.extract_strided_slice %289 {offsets = [0, 32], sizes = [2, 32], strides = [1, 1]} : vector<2x96xf32> to vector<2x32xf32>
    %300 = arith.addf %298, %299 : vector<2x32xf32>
    %301 = arith.negf %300 : vector<2x32xf32>
    %302 = math.exp %301 : vector<2x32xf32>
    %cst_76 = arith.constant 1.000000e+00 : f32
    %303 = vector.broadcast %cst_76 : f32 to vector<2x32xf32>
    %304 = arith.addf %303, %302 : vector<2x32xf32>
    %305 = arith.divf %303, %304 : vector<2x32xf32>
    %306 = vector.extract_strided_slice %288 {offsets = [0, 64], sizes = [2, 32], strides = [1, 1]} : vector<2x96xf32> to vector<2x32xf32>
    %307 = vector.extract_strided_slice %289 {offsets = [0, 64], sizes = [2, 32], strides = [1, 1]} : vector<2x96xf32> to vector<2x32xf32>
    %308 = vector.broadcast %1 : vector<1x32xf32> to vector<2x32xf32>
    %309 = arith.addf %307, %308 : vector<2x32xf32>
    %310 = arith.mulf %297, %309 : vector<2x32xf32>
    %311 = arith.addf %306, %310 : vector<2x32xf32>
    %312 = math.tanh %311 : vector<2x32xf32>
    %cst_77 = arith.constant 1.000000e+00 : f32
    %313 = vector.broadcast %cst_77 : f32 to vector<2x32xf32>
    %314 = arith.subf %313, %305 : vector<2x32xf32>
    %315 = arith.mulf %314, %312 : vector<2x32xf32>
    %316 = arith.mulf %305, %230 : vector<2x32xf32>
    %317 = arith.addf %315, %316 : vector<2x32xf32>
    %318 = vector.broadcast %c3_i32 : i32 to vector<2x1xi32>
    %319 = arith.cmpi sgt, %6, %318 : vector<2x1xi32>
    %320 = vector.shape_cast %319 : vector<2x1xi1> to vector<2x1xi1>
    %321 = vector.broadcast %320 : vector<2x1xi1> to vector<2x32xi1>
    %322 = arith.select %321, %317, %230 : vector<2x32xi1>, vector<2x32xf32>
    %cst_78 = arith.constant 0.000000e+00 : f32
    %323 = vector.shape_cast %319 : vector<2x1xi1> to vector<2x1xi1>
    %324 = vector.broadcast %323 : vector<2x1xi1> to vector<2x32xi1>
    %325 = vector.broadcast %cst_78 : f32 to vector<2x32xf32>
    %326 = arith.select %324, %317, %325 : vector<2x32xi1>, vector<2x32xf32>
    %cst_79 = arith.constant dense<0.000000e+00> : vector<2xf32>
    %327 = vector.multi_reduction <add>, %326, %cst_79 [1] : vector<2x32xf32> to vector<2xf32>
    %328 = vector.shape_cast %327 : vector<2xf32> to vector<2x1xf32>
    %cst_80 = arith.constant 3.200000e+01 : f32
    %329 = vector.broadcast %cst_80 : f32 to vector<2x1xf32>
    %330 = arith.divf %328, %329 : vector<2x1xf32>
    %331 = vector.broadcast %330 : vector<2x1xf32> to vector<2x32xf32>
    %332 = arith.subf %326, %331 : vector<2x32xf32>
    %333 = arith.mulf %332, %332 : vector<2x32xf32>
    %cst_81 = arith.constant dense<0.000000e+00> : vector<2xf32>
    %334 = vector.multi_reduction <add>, %333, %cst_81 [1] : vector<2x32xf32> to vector<2xf32>
    %335 = vector.shape_cast %334 : vector<2xf32> to vector<2x1xf32>
    %cst_82 = arith.constant 3.200000e+01 : f32
    %336 = vector.broadcast %cst_82 : f32 to vector<2x1xf32>
    %337 = arith.divf %335, %336 : vector<2x1xf32>
    %338 = vector.broadcast %330 : vector<2x1xf32> to vector<2x32xf32>
    %339 = arith.subf %326, %338 : vector<2x32xf32>
    %cst_83 = arith.constant 9.99999974E-6 : f32
    %340 = vector.broadcast %cst_83 : f32 to vector<2x1xf32>
    %341 = arith.addf %337, %340 : vector<2x1xf32>
    %342 = math.rsqrt %341 : vector<2x1xf32>
    %343 = vector.broadcast %342 : vector<2x1xf32> to vector<2x32xf32>
    %344 = arith.mulf %339, %343 : vector<2x32xf32>
    %345 = vector.broadcast %2 : vector<1x32xf32> to vector<2x32xf32>
    %346 = arith.mulf %344, %345 : vector<2x32xf32>
    %347 = vector.broadcast %3 : vector<1x32xf32> to vector<2x32xf32>
    %348 = arith.addf %346, %347 : vector<2x32xf32>
    %cst_84 = arith.constant dense<0.000000e+00> : vector<2x16xf32>
    %349 = tpu.matmul %348, %4, %cst_84 {dimension_numbers = #tpu.dot_dimension_numbers<[1], [0], [0], [1], [0, 0, 1, 1], [], []>} : vector<2x32xf32>, vector<32x16xf32>, vector<2x16xf32> -> vector<2x16xf32>
    %350 = vector.broadcast %5 : vector<1x16xf32> to vector<2x16xf32>
    %351 = arith.addf %349, %350 : vector<2x16xf32>
    %cst_85 = arith.constant dense<0xFF800000> : vector<2xf32>
    %352 = vector.multi_reduction <maximumf>, %351, %cst_85 [1] : vector<2x16xf32> to vector<2xf32>
    %353 = vector.shape_cast %352 : vector<2xf32> to vector<2x1xf32>
    %354 = vector.broadcast %353 : vector<2x1xf32> to vector<2x16xf32>
    %355 = arith.subf %351, %354 : vector<2x16xf32>
    %356 = math.exp %355 : vector<2x16xf32>
    %cst_86 = arith.constant dense<0.000000e+00> : vector<2xf32>
    %357 = vector.multi_reduction <add>, %356, %cst_86 [1] : vector<2x16xf32> to vector<2xf32>
    %358 = vector.shape_cast %357 : vector<2xf32> to vector<2x1xf32>
    %359 = math.log %358 : vector<2x1xf32>
    %360 = arith.addf %353, %359 : vector<2x1xf32>
    %361 = arith.index_cast %c3_i32 : i32 to index
    %c0_87 = arith.constant 0 : index
    %c0_88 = arith.constant 0 : index
    %362 = vector.load %arg9[%361, %c0_87, %c0_88] : memref<8x2x1xi32, #tpu.memory_space<vmem>>, vector<1x2x1xi32>
    %363 = vector.shape_cast %362 : vector<1x2x1xi32> to vector<2x1xi32>
    %364 = vector.broadcast %363 : vector<2x1xi32> to vector<2x16xi32>
    %365 = arith.cmpi eq, %7, %364 : vector<2x16xi32>
    %366 = arith.extui %365 : vector<2x16xi1> to vector<2x16xi32>
    %367 = arith.sitofp %366 : vector<2x16xi32> to vector<2x16xf32>
    %368 = arith.mulf %351, %367 : vector<2x16xf32>
    %cst_89 = arith.constant dense<0.000000e+00> : vector<2xf32>
    %369 = vector.multi_reduction <add>, %368, %cst_89 [1] : vector<2x16xf32> to vector<2xf32>
    %370 = vector.shape_cast %369 : vector<2xf32> to vector<2x1xf32>
    %c0_i32_90 = arith.constant 0 : i32
    %371 = vector.broadcast %c0_i32_90 : i32 to vector<2x1xi32>
    %372 = arith.cmpi sge, %363, %371 : vector<2x1xi32>
    %373 = arith.extui %372 : vector<2x1xi1> to vector<2x1xi32>
    %374 = arith.sitofp %373 : vector<2x1xi32> to vector<2x1xf32>
    %375 = arith.subf %360, %370 : vector<2x1xf32>
    %376 = arith.mulf %375, %374 : vector<2x1xf32>
    %377 = arith.addf %285, %376 : vector<2x1xf32>
    %c4_i32 = arith.constant 4 : i32
    %378 = arith.index_cast %c4_i32 : i32 to index
    %c0_91 = arith.constant 0 : index
    %c0_92 = arith.constant 0 : index
    %379 = vector.load %arg0[%378, %c0_91, %c0_92] : memref<8x2x96xf32, #tpu.memory_space<vmem>>, vector<1x2x96xf32>
    %380 = vector.shape_cast %379 : vector<1x2x96xf32> to vector<2x96xf32>
    %cst_93 = arith.constant dense<0.000000e+00> : vector<2x96xf32>
    %381 = tpu.matmul %322, %0, %cst_93 {dimension_numbers = #tpu.dot_dimension_numbers<[1], [0], [0], [1], [0, 0, 1, 1], [], []>} : vector<2x32xf32>, vector<32x96xf32>, vector<2x96xf32> -> vector<2x96xf32>
    %382 = vector.extract_strided_slice %380 {offsets = [0, 0], sizes = [2, 32], strides = [1, 1]} : vector<2x96xf32> to vector<2x32xf32>
    %383 = vector.extract_strided_slice %381 {offsets = [0, 0], sizes = [2, 32], strides = [1, 1]} : vector<2x96xf32> to vector<2x32xf32>
    %384 = arith.addf %382, %383 : vector<2x32xf32>
    %385 = arith.negf %384 : vector<2x32xf32>
    %386 = math.exp %385 : vector<2x32xf32>
    %cst_94 = arith.constant 1.000000e+00 : f32
    %387 = vector.broadcast %cst_94 : f32 to vector<2x32xf32>
    %388 = arith.addf %387, %386 : vector<2x32xf32>
    %389 = arith.divf %387, %388 : vector<2x32xf32>
    %390 = vector.extract_strided_slice %380 {offsets = [0, 32], sizes = [2, 32], strides = [1, 1]} : vector<2x96xf32> to vector<2x32xf32>
    %391 = vector.extract_strided_slice %381 {offsets = [0, 32], sizes = [2, 32], strides = [1, 1]} : vector<2x96xf32> to vector<2x32xf32>
    %392 = arith.addf %390, %391 : vector<2x32xf32>
    %393 = arith.negf %392 : vector<2x32xf32>
    %394 = math.exp %393 : vector<2x32xf32>
    %cst_95 = arith.constant 1.000000e+00 : f32
    %395 = vector.broadcast %cst_95 : f32 to vector<2x32xf32>
    %396 = arith.addf %395, %394 : vector<2x32xf32>
    %397 = arith.divf %395, %396 : vector<2x32xf32>
    %398 = vector.extract_strided_slice %380 {offsets = [0, 64], sizes = [2, 32], strides = [1, 1]} : vector<2x96xf32> to vector<2x32xf32>
    %399 = vector.extract_strided_slice %381 {offsets = [0, 64], sizes = [2, 32], strides = [1, 1]} : vector<2x96xf32> to vector<2x32xf32>
    %400 = vector.broadcast %1 : vector<1x32xf32> to vector<2x32xf32>
    %401 = arith.addf %399, %400 : vector<2x32xf32>
    %402 = arith.mulf %389, %401 : vector<2x32xf32>
    %403 = arith.addf %398, %402 : vector<2x32xf32>
    %404 = math.tanh %403 : vector<2x32xf32>
    %cst_96 = arith.constant 1.000000e+00 : f32
    %405 = vector.broadcast %cst_96 : f32 to vector<2x32xf32>
    %406 = arith.subf %405, %397 : vector<2x32xf32>
    %407 = arith.mulf %406, %404 : vector<2x32xf32>
    %408 = arith.mulf %397, %322 : vector<2x32xf32>
    %409 = arith.addf %407, %408 : vector<2x32xf32>
    %410 = vector.broadcast %c4_i32 : i32 to vector<2x1xi32>
    %411 = arith.cmpi sgt, %6, %410 : vector<2x1xi32>
    %412 = vector.shape_cast %411 : vector<2x1xi1> to vector<2x1xi1>
    %413 = vector.broadcast %412 : vector<2x1xi1> to vector<2x32xi1>
    %414 = arith.select %413, %409, %322 : vector<2x32xi1>, vector<2x32xf32>
    %cst_97 = arith.constant 0.000000e+00 : f32
    %415 = vector.shape_cast %411 : vector<2x1xi1> to vector<2x1xi1>
    %416 = vector.broadcast %415 : vector<2x1xi1> to vector<2x32xi1>
    %417 = vector.broadcast %cst_97 : f32 to vector<2x32xf32>
    %418 = arith.select %416, %409, %417 : vector<2x32xi1>, vector<2x32xf32>
    %cst_98 = arith.constant dense<0.000000e+00> : vector<2xf32>
    %419 = vector.multi_reduction <add>, %418, %cst_98 [1] : vector<2x32xf32> to vector<2xf32>
    %420 = vector.shape_cast %419 : vector<2xf32> to vector<2x1xf32>
    %cst_99 = arith.constant 3.200000e+01 : f32
    %421 = vector.broadcast %cst_99 : f32 to vector<2x1xf32>
    %422 = arith.divf %420, %421 : vector<2x1xf32>
    %423 = vector.broadcast %422 : vector<2x1xf32> to vector<2x32xf32>
    %424 = arith.subf %418, %423 : vector<2x32xf32>
    %425 = arith.mulf %424, %424 : vector<2x32xf32>
    %cst_100 = arith.constant dense<0.000000e+00> : vector<2xf32>
    %426 = vector.multi_reduction <add>, %425, %cst_100 [1] : vector<2x32xf32> to vector<2xf32>
    %427 = vector.shape_cast %426 : vector<2xf32> to vector<2x1xf32>
    %cst_101 = arith.constant 3.200000e+01 : f32
    %428 = vector.broadcast %cst_101 : f32 to vector<2x1xf32>
    %429 = arith.divf %427, %428 : vector<2x1xf32>
    %430 = vector.broadcast %422 : vector<2x1xf32> to vector<2x32xf32>
    %431 = arith.subf %418, %430 : vector<2x32xf32>
    %cst_102 = arith.constant 9.99999974E-6 : f32
    %432 = vector.broadcast %cst_102 : f32 to vector<2x1xf32>
    %433 = arith.addf %429, %432 : vector<2x1xf32>
    %434 = math.rsqrt %433 : vector<2x1xf32>
    %435 = vector.broadcast %434 : vector<2x1xf32> to vector<2x32xf32>
    %436 = arith.mulf %431, %435 : vector<2x32xf32>
    %437 = vector.broadcast %2 : vector<1x32xf32> to vector<2x32xf32>
    %438 = arith.mulf %436, %437 : vector<2x32xf32>
    %439 = vector.broadcast %3 : vector<1x32xf32> to vector<2x32xf32>
    %440 = arith.addf %438, %439 : vector<2x32xf32>
    %cst_103 = arith.constant dense<0.000000e+00> : vector<2x16xf32>
    %441 = tpu.matmul %440, %4, %cst_103 {dimension_numbers = #tpu.dot_dimension_numbers<[1], [0], [0], [1], [0, 0, 1, 1], [], []>} : vector<2x32xf32>, vector<32x16xf32>, vector<2x16xf32> -> vector<2x16xf32>
    %442 = vector.broadcast %5 : vector<1x16xf32> to vector<2x16xf32>
    %443 = arith.addf %441, %442 : vector<2x16xf32>
    %cst_104 = arith.constant dense<0xFF800000> : vector<2xf32>
    %444 = vector.multi_reduction <maximumf>, %443, %cst_104 [1] : vector<2x16xf32> to vector<2xf32>
    %445 = vector.shape_cast %444 : vector<2xf32> to vector<2x1xf32>
    %446 = vector.broadcast %445 : vector<2x1xf32> to vector<2x16xf32>
    %447 = arith.subf %443, %446 : vector<2x16xf32>
    %448 = math.exp %447 : vector<2x16xf32>
    %cst_105 = arith.constant dense<0.000000e+00> : vector<2xf32>
    %449 = vector.multi_reduction <add>, %448, %cst_105 [1] : vector<2x16xf32> to vector<2xf32>
    %450 = vector.shape_cast %449 : vector<2xf32> to vector<2x1xf32>
    %451 = math.log %450 : vector<2x1xf32>
    %452 = arith.addf %445, %451 : vector<2x1xf32>
    %453 = arith.index_cast %c4_i32 : i32 to index
    %c0_106 = arith.constant 0 : index
    %c0_107 = arith.constant 0 : index
    %454 = vector.load %arg9[%453, %c0_106, %c0_107] : memref<8x2x1xi32, #tpu.memory_space<vmem>>, vector<1x2x1xi32>
    %455 = vector.shape_cast %454 : vector<1x2x1xi32> to vector<2x1xi32>
    %456 = vector.broadcast %455 : vector<2x1xi32> to vector<2x16xi32>
    %457 = arith.cmpi eq, %7, %456 : vector<2x16xi32>
    %458 = arith.extui %457 : vector<2x16xi1> to vector<2x16xi32>
    %459 = arith.sitofp %458 : vector<2x16xi32> to vector<2x16xf32>
    %460 = arith.mulf %443, %459 : vector<2x16xf32>
    %cst_108 = arith.constant dense<0.000000e+00> : vector<2xf32>
    %461 = vector.multi_reduction <add>, %460, %cst_108 [1] : vector<2x16xf32> to vector<2xf32>
    %462 = vector.shape_cast %461 : vector<2xf32> to vector<2x1xf32>
    %c0_i32_109 = arith.constant 0 : i32
    %463 = vector.broadcast %c0_i32_109 : i32 to vector<2x1xi32>
    %464 = arith.cmpi sge, %455, %463 : vector<2x1xi32>
    %465 = arith.extui %464 : vector<2x1xi1> to vector<2x1xi32>
    %466 = arith.sitofp %465 : vector<2x1xi32> to vector<2x1xf32>
    %467 = arith.subf %452, %462 : vector<2x1xf32>
    %468 = arith.mulf %467, %466 : vector<2x1xf32>
    %469 = arith.addf %377, %468 : vector<2x1xf32>
    %c5_i32 = arith.constant 5 : i32
    %470 = arith.index_cast %c5_i32 : i32 to index
    %c0_110 = arith.constant 0 : index
    %c0_111 = arith.constant 0 : index
    %471 = vector.load %arg0[%470, %c0_110, %c0_111] : memref<8x2x96xf32, #tpu.memory_space<vmem>>, vector<1x2x96xf32>
    %472 = vector.shape_cast %471 : vector<1x2x96xf32> to vector<2x96xf32>
    %cst_112 = arith.constant dense<0.000000e+00> : vector<2x96xf32>
    %473 = tpu.matmul %414, %0, %cst_112 {dimension_numbers = #tpu.dot_dimension_numbers<[1], [0], [0], [1], [0, 0, 1, 1], [], []>} : vector<2x32xf32>, vector<32x96xf32>, vector<2x96xf32> -> vector<2x96xf32>
    %474 = vector.extract_strided_slice %472 {offsets = [0, 0], sizes = [2, 32], strides = [1, 1]} : vector<2x96xf32> to vector<2x32xf32>
    %475 = vector.extract_strided_slice %473 {offsets = [0, 0], sizes = [2, 32], strides = [1, 1]} : vector<2x96xf32> to vector<2x32xf32>
    %476 = arith.addf %474, %475 : vector<2x32xf32>
    %477 = arith.negf %476 : vector<2x32xf32>
    %478 = math.exp %477 : vector<2x32xf32>
    %cst_113 = arith.constant 1.000000e+00 : f32
    %479 = vector.broadcast %cst_113 : f32 to vector<2x32xf32>
    %480 = arith.addf %479, %478 : vector<2x32xf32>
    %481 = arith.divf %479, %480 : vector<2x32xf32>
    %482 = vector.extract_strided_slice %472 {offsets = [0, 32], sizes = [2, 32], strides = [1, 1]} : vector<2x96xf32> to vector<2x32xf32>
    %483 = vector.extract_strided_slice %473 {offsets = [0, 32], sizes = [2, 32], strides = [1, 1]} : vector<2x96xf32> to vector<2x32xf32>
    %484 = arith.addf %482, %483 : vector<2x32xf32>
    %485 = arith.negf %484 : vector<2x32xf32>
    %486 = math.exp %485 : vector<2x32xf32>
    %cst_114 = arith.constant 1.000000e+00 : f32
    %487 = vector.broadcast %cst_114 : f32 to vector<2x32xf32>
    %488 = arith.addf %487, %486 : vector<2x32xf32>
    %489 = arith.divf %487, %488 : vector<2x32xf32>
    %490 = vector.extract_strided_slice %472 {offsets = [0, 64], sizes = [2, 32], strides = [1, 1]} : vector<2x96xf32> to vector<2x32xf32>
    %491 = vector.extract_strided_slice %473 {offsets = [0, 64], sizes = [2, 32], strides = [1, 1]} : vector<2x96xf32> to vector<2x32xf32>
    %492 = vector.broadcast %1 : vector<1x32xf32> to vector<2x32xf32>
    %493 = arith.addf %491, %492 : vector<2x32xf32>
    %494 = arith.mulf %481, %493 : vector<2x32xf32>
    %495 = arith.addf %490, %494 : vector<2x32xf32>
    %496 = math.tanh %495 : vector<2x32xf32>
    %cst_115 = arith.constant 1.000000e+00 : f32
    %497 = vector.broadcast %cst_115 : f32 to vector<2x32xf32>
    %498 = arith.subf %497, %489 : vector<2x32xf32>
    %499 = arith.mulf %498, %496 : vector<2x32xf32>
    %500 = arith.mulf %489, %414 : vector<2x32xf32>
    %501 = arith.addf %499, %500 : vector<2x32xf32>
    %502 = vector.broadcast %c5_i32 : i32 to vector<2x1xi32>
    %503 = arith.cmpi sgt, %6, %502 : vector<2x1xi32>
    %504 = vector.shape_cast %503 : vector<2x1xi1> to vector<2x1xi1>
    %505 = vector.broadcast %504 : vector<2x1xi1> to vector<2x32xi1>
    %506 = arith.select %505, %501, %414 : vector<2x32xi1>, vector<2x32xf32>
    %cst_116 = arith.constant 0.000000e+00 : f32
    %507 = vector.shape_cast %503 : vector<2x1xi1> to vector<2x1xi1>
    %508 = vector.broadcast %507 : vector<2x1xi1> to vector<2x32xi1>
    %509 = vector.broadcast %cst_116 : f32 to vector<2x32xf32>
    %510 = arith.select %508, %501, %509 : vector<2x32xi1>, vector<2x32xf32>
    %cst_117 = arith.constant dense<0.000000e+00> : vector<2xf32>
    %511 = vector.multi_reduction <add>, %510, %cst_117 [1] : vector<2x32xf32> to vector<2xf32>
    %512 = vector.shape_cast %511 : vector<2xf32> to vector<2x1xf32>
    %cst_118 = arith.constant 3.200000e+01 : f32
    %513 = vector.broadcast %cst_118 : f32 to vector<2x1xf32>
    %514 = arith.divf %512, %513 : vector<2x1xf32>
    %515 = vector.broadcast %514 : vector<2x1xf32> to vector<2x32xf32>
    %516 = arith.subf %510, %515 : vector<2x32xf32>
    %517 = arith.mulf %516, %516 : vector<2x32xf32>
    %cst_119 = arith.constant dense<0.000000e+00> : vector<2xf32>
    %518 = vector.multi_reduction <add>, %517, %cst_119 [1] : vector<2x32xf32> to vector<2xf32>
    %519 = vector.shape_cast %518 : vector<2xf32> to vector<2x1xf32>
    %cst_120 = arith.constant 3.200000e+01 : f32
    %520 = vector.broadcast %cst_120 : f32 to vector<2x1xf32>
    %521 = arith.divf %519, %520 : vector<2x1xf32>
    %522 = vector.broadcast %514 : vector<2x1xf32> to vector<2x32xf32>
    %523 = arith.subf %510, %522 : vector<2x32xf32>
    %cst_121 = arith.constant 9.99999974E-6 : f32
    %524 = vector.broadcast %cst_121 : f32 to vector<2x1xf32>
    %525 = arith.addf %521, %524 : vector<2x1xf32>
    %526 = math.rsqrt %525 : vector<2x1xf32>
    %527 = vector.broadcast %526 : vector<2x1xf32> to vector<2x32xf32>
    %528 = arith.mulf %523, %527 : vector<2x32xf32>
    %529 = vector.broadcast %2 : vector<1x32xf32> to vector<2x32xf32>
    %530 = arith.mulf %528, %529 : vector<2x32xf32>
    %531 = vector.broadcast %3 : vector<1x32xf32> to vector<2x32xf32>
    %532 = arith.addf %530, %531 : vector<2x32xf32>
    %cst_122 = arith.constant dense<0.000000e+00> : vector<2x16xf32>
    %533 = tpu.matmul %532, %4, %cst_122 {dimension_numbers = #tpu.dot_dimension_numbers<[1], [0], [0], [1], [0, 0, 1, 1], [], []>} : vector<2x32xf32>, vector<32x16xf32>, vector<2x16xf32> -> vector<2x16xf32>
    %534 = vector.broadcast %5 : vector<1x16xf32> to vector<2x16xf32>
    %535 = arith.addf %533, %534 : vector<2x16xf32>
    %cst_123 = arith.constant dense<0xFF800000> : vector<2xf32>
    %536 = vector.multi_reduction <maximumf>, %535, %cst_123 [1] : vector<2x16xf32> to vector<2xf32>
    %537 = vector.shape_cast %536 : vector<2xf32> to vector<2x1xf32>
    %538 = vector.broadcast %537 : vector<2x1xf32> to vector<2x16xf32>
    %539 = arith.subf %535, %538 : vector<2x16xf32>
    %540 = math.exp %539 : vector<2x16xf32>
    %cst_124 = arith.constant dense<0.000000e+00> : vector<2xf32>
    %541 = vector.multi_reduction <add>, %540, %cst_124 [1] : vector<2x16xf32> to vector<2xf32>
    %542 = vector.shape_cast %541 : vector<2xf32> to vector<2x1xf32>
    %543 = math.log %542 : vector<2x1xf32>
    %544 = arith.addf %537, %543 : vector<2x1xf32>
    %545 = arith.index_cast %c5_i32 : i32 to index
    %c0_125 = arith.constant 0 : index
    %c0_126 = arith.constant 0 : index
    %546 = vector.load %arg9[%545, %c0_125, %c0_126] : memref<8x2x1xi32, #tpu.memory_space<vmem>>, vector<1x2x1xi32>
    %547 = vector.shape_cast %546 : vector<1x2x1xi32> to vector<2x1xi32>
    %548 = vector.broadcast %547 : vector<2x1xi32> to vector<2x16xi32>
    %549 = arith.cmpi eq, %7, %548 : vector<2x16xi32>
    %550 = arith.extui %549 : vector<2x16xi1> to vector<2x16xi32>
    %551 = arith.sitofp %550 : vector<2x16xi32> to vector<2x16xf32>
    %552 = arith.mulf %535, %551 : vector<2x16xf32>
    %cst_127 = arith.constant dense<0.000000e+00> : vector<2xf32>
    %553 = vector.multi_reduction <add>, %552, %cst_127 [1] : vector<2x16xf32> to vector<2xf32>
    %554 = vector.shape_cast %553 : vector<2xf32> to vector<2x1xf32>
    %c0_i32_128 = arith.constant 0 : i32
    %555 = vector.broadcast %c0_i32_128 : i32 to vector<2x1xi32>
    %556 = arith.cmpi sge, %547, %555 : vector<2x1xi32>
    %557 = arith.extui %556 : vector<2x1xi1> to vector<2x1xi32>
    %558 = arith.sitofp %557 : vector<2x1xi32> to vector<2x1xf32>
    %559 = arith.subf %544, %554 : vector<2x1xf32>
    %560 = arith.mulf %559, %558 : vector<2x1xf32>
    %561 = arith.addf %469, %560 : vector<2x1xf32>
    %c6_i32 = arith.constant 6 : i32
    %562 = arith.index_cast %c6_i32 : i32 to index
    %c0_129 = arith.constant 0 : index
    %c0_130 = arith.constant 0 : index
    %563 = vector.load %arg0[%562, %c0_129, %c0_130] : memref<8x2x96xf32, #tpu.memory_space<vmem>>, vector<1x2x96xf32>
    %564 = vector.shape_cast %563 : vector<1x2x96xf32> to vector<2x96xf32>
    %cst_131 = arith.constant dense<0.000000e+00> : vector<2x96xf32>
    %565 = tpu.matmul %506, %0, %cst_131 {dimension_numbers = #tpu.dot_dimension_numbers<[1], [0], [0], [1], [0, 0, 1, 1], [], []>} : vector<2x32xf32>, vector<32x96xf32>, vector<2x96xf32> -> vector<2x96xf32>
    %566 = vector.extract_strided_slice %564 {offsets = [0, 0], sizes = [2, 32], strides = [1, 1]} : vector<2x96xf32> to vector<2x32xf32>
    %567 = vector.extract_strided_slice %565 {offsets = [0, 0], sizes = [2, 32], strides = [1, 1]} : vector<2x96xf32> to vector<2x32xf32>
    %568 = arith.addf %566, %567 : vector<2x32xf32>
    %569 = arith.negf %568 : vector<2x32xf32>
    %570 = math.exp %569 : vector<2x32xf32>
    %cst_132 = arith.constant 1.000000e+00 : f32
    %571 = vector.broadcast %cst_132 : f32 to vector<2x32xf32>
    %572 = arith.addf %571, %570 : vector<2x32xf32>
    %573 = arith.divf %571, %572 : vector<2x32xf32>
    %574 = vector.extract_strided_slice %564 {offsets = [0, 32], sizes = [2, 32], strides = [1, 1]} : vector<2x96xf32> to vector<2x32xf32>
    %575 = vector.extract_strided_slice %565 {offsets = [0, 32], sizes = [2, 32], strides = [1, 1]} : vector<2x96xf32> to vector<2x32xf32>
    %576 = arith.addf %574, %575 : vector<2x32xf32>
    %577 = arith.negf %576 : vector<2x32xf32>
    %578 = math.exp %577 : vector<2x32xf32>
    %cst_133 = arith.constant 1.000000e+00 : f32
    %579 = vector.broadcast %cst_133 : f32 to vector<2x32xf32>
    %580 = arith.addf %579, %578 : vector<2x32xf32>
    %581 = arith.divf %579, %580 : vector<2x32xf32>
    %582 = vector.extract_strided_slice %564 {offsets = [0, 64], sizes = [2, 32], strides = [1, 1]} : vector<2x96xf32> to vector<2x32xf32>
    %583 = vector.extract_strided_slice %565 {offsets = [0, 64], sizes = [2, 32], strides = [1, 1]} : vector<2x96xf32> to vector<2x32xf32>
    %584 = vector.broadcast %1 : vector<1x32xf32> to vector<2x32xf32>
    %585 = arith.addf %583, %584 : vector<2x32xf32>
    %586 = arith.mulf %573, %585 : vector<2x32xf32>
    %587 = arith.addf %582, %586 : vector<2x32xf32>
    %588 = math.tanh %587 : vector<2x32xf32>
    %cst_134 = arith.constant 1.000000e+00 : f32
    %589 = vector.broadcast %cst_134 : f32 to vector<2x32xf32>
    %590 = arith.subf %589, %581 : vector<2x32xf32>
    %591 = arith.mulf %590, %588 : vector<2x32xf32>
    %592 = arith.mulf %581, %506 : vector<2x32xf32>
    %593 = arith.addf %591, %592 : vector<2x32xf32>
    %594 = vector.broadcast %c6_i32 : i32 to vector<2x1xi32>
    %595 = arith.cmpi sgt, %6, %594 : vector<2x1xi32>
    %596 = vector.shape_cast %595 : vector<2x1xi1> to vector<2x1xi1>
    %597 = vector.broadcast %596 : vector<2x1xi1> to vector<2x32xi1>
    %598 = arith.select %597, %593, %506 : vector<2x32xi1>, vector<2x32xf32>
    %cst_135 = arith.constant 0.000000e+00 : f32
    %599 = vector.shape_cast %595 : vector<2x1xi1> to vector<2x1xi1>
    %600 = vector.broadcast %599 : vector<2x1xi1> to vector<2x32xi1>
    %601 = vector.broadcast %cst_135 : f32 to vector<2x32xf32>
    %602 = arith.select %600, %593, %601 : vector<2x32xi1>, vector<2x32xf32>
    %cst_136 = arith.constant dense<0.000000e+00> : vector<2xf32>
    %603 = vector.multi_reduction <add>, %602, %cst_136 [1] : vector<2x32xf32> to vector<2xf32>
    %604 = vector.shape_cast %603 : vector<2xf32> to vector<2x1xf32>
    %cst_137 = arith.constant 3.200000e+01 : f32
    %605 = vector.broadcast %cst_137 : f32 to vector<2x1xf32>
    %606 = arith.divf %604, %605 : vector<2x1xf32>
    %607 = vector.broadcast %606 : vector<2x1xf32> to vector<2x32xf32>
    %608 = arith.subf %602, %607 : vector<2x32xf32>
    %609 = arith.mulf %608, %608 : vector<2x32xf32>
    %cst_138 = arith.constant dense<0.000000e+00> : vector<2xf32>
    %610 = vector.multi_reduction <add>, %609, %cst_138 [1] : vector<2x32xf32> to vector<2xf32>
    %611 = vector.shape_cast %610 : vector<2xf32> to vector<2x1xf32>
    %cst_139 = arith.constant 3.200000e+01 : f32
    %612 = vector.broadcast %cst_139 : f32 to vector<2x1xf32>
    %613 = arith.divf %611, %612 : vector<2x1xf32>
    %614 = vector.broadcast %606 : vector<2x1xf32> to vector<2x32xf32>
    %615 = arith.subf %602, %614 : vector<2x32xf32>
    %cst_140 = arith.constant 9.99999974E-6 : f32
    %616 = vector.broadcast %cst_140 : f32 to vector<2x1xf32>
    %617 = arith.addf %613, %616 : vector<2x1xf32>
    %618 = math.rsqrt %617 : vector<2x1xf32>
    %619 = vector.broadcast %618 : vector<2x1xf32> to vector<2x32xf32>
    %620 = arith.mulf %615, %619 : vector<2x32xf32>
    %621 = vector.broadcast %2 : vector<1x32xf32> to vector<2x32xf32>
    %622 = arith.mulf %620, %621 : vector<2x32xf32>
    %623 = vector.broadcast %3 : vector<1x32xf32> to vector<2x32xf32>
    %624 = arith.addf %622, %623 : vector<2x32xf32>
    %cst_141 = arith.constant dense<0.000000e+00> : vector<2x16xf32>
    %625 = tpu.matmul %624, %4, %cst_141 {dimension_numbers = #tpu.dot_dimension_numbers<[1], [0], [0], [1], [0, 0, 1, 1], [], []>} : vector<2x32xf32>, vector<32x16xf32>, vector<2x16xf32> -> vector<2x16xf32>
    %626 = vector.broadcast %5 : vector<1x16xf32> to vector<2x16xf32>
    %627 = arith.addf %625, %626 : vector<2x16xf32>
    %cst_142 = arith.constant dense<0xFF800000> : vector<2xf32>
    %628 = vector.multi_reduction <maximumf>, %627, %cst_142 [1] : vector<2x16xf32> to vector<2xf32>
    %629 = vector.shape_cast %628 : vector<2xf32> to vector<2x1xf32>
    %630 = vector.broadcast %629 : vector<2x1xf32> to vector<2x16xf32>
    %631 = arith.subf %627, %630 : vector<2x16xf32>
    %632 = math.exp %631 : vector<2x16xf32>
    %cst_143 = arith.constant dense<0.000000e+00> : vector<2xf32>
    %633 = vector.multi_reduction <add>, %632, %cst_143 [1] : vector<2x16xf32> to vector<2xf32>
    %634 = vector.shape_cast %633 : vector<2xf32> to vector<2x1xf32>
    %635 = math.log %634 : vector<2x1xf32>
    %636 = arith.addf %629, %635 : vector<2x1xf32>
    %637 = arith.index_cast %c6_i32 : i32 to index
    %c0_144 = arith.constant 0 : index
    %c0_145 = arith.constant 0 : index
    %638 = vector.load %arg9[%637, %c0_144, %c0_145] : memref<8x2x1xi32, #tpu.memory_space<vmem>>, vector<1x2x1xi32>
    %639 = vector.shape_cast %638 : vector<1x2x1xi32> to vector<2x1xi32>
    %640 = vector.broadcast %639 : vector<2x1xi32> to vector<2x16xi32>
    %641 = arith.cmpi eq, %7, %640 : vector<2x16xi32>
    %642 = arith.extui %641 : vector<2x16xi1> to vector<2x16xi32>
    %643 = arith.sitofp %642 : vector<2x16xi32> to vector<2x16xf32>
    %644 = arith.mulf %627, %643 : vector<2x16xf32>
    %cst_146 = arith.constant dense<0.000000e+00> : vector<2xf32>
    %645 = vector.multi_reduction <add>, %644, %cst_146 [1] : vector<2x16xf32> to vector<2xf32>
    %646 = vector.shape_cast %645 : vector<2xf32> to vector<2x1xf32>
    %c0_i32_147 = arith.constant 0 : i32
    %647 = vector.broadcast %c0_i32_147 : i32 to vector<2x1xi32>
    %648 = arith.cmpi sge, %639, %647 : vector<2x1xi32>
    %649 = arith.extui %648 : vector<2x1xi1> to vector<2x1xi32>
    %650 = arith.sitofp %649 : vector<2x1xi32> to vector<2x1xf32>
    %651 = arith.subf %636, %646 : vector<2x1xf32>
    %652 = arith.mulf %651, %650 : vector<2x1xf32>
    %653 = arith.addf %561, %652 : vector<2x1xf32>
    %c7_i32 = arith.constant 7 : i32
    %654 = arith.index_cast %c7_i32 : i32 to index
    %c0_148 = arith.constant 0 : index
    %c0_149 = arith.constant 0 : index
    %655 = vector.load %arg0[%654, %c0_148, %c0_149] : memref<8x2x96xf32, #tpu.memory_space<vmem>>, vector<1x2x96xf32>
    %656 = vector.shape_cast %655 : vector<1x2x96xf32> to vector<2x96xf32>
    %cst_150 = arith.constant dense<0.000000e+00> : vector<2x96xf32>
    %657 = tpu.matmul %598, %0, %cst_150 {dimension_numbers = #tpu.dot_dimension_numbers<[1], [0], [0], [1], [0, 0, 1, 1], [], []>} : vector<2x32xf32>, vector<32x96xf32>, vector<2x96xf32> -> vector<2x96xf32>
    %658 = vector.extract_strided_slice %656 {offsets = [0, 0], sizes = [2, 32], strides = [1, 1]} : vector<2x96xf32> to vector<2x32xf32>
    %659 = vector.extract_strided_slice %657 {offsets = [0, 0], sizes = [2, 32], strides = [1, 1]} : vector<2x96xf32> to vector<2x32xf32>
    %660 = arith.addf %658, %659 : vector<2x32xf32>
    %661 = arith.negf %660 : vector<2x32xf32>
    %662 = math.exp %661 : vector<2x32xf32>
    %cst_151 = arith.constant 1.000000e+00 : f32
    %663 = vector.broadcast %cst_151 : f32 to vector<2x32xf32>
    %664 = arith.addf %663, %662 : vector<2x32xf32>
    %665 = arith.divf %663, %664 : vector<2x32xf32>
    %666 = vector.extract_strided_slice %656 {offsets = [0, 32], sizes = [2, 32], strides = [1, 1]} : vector<2x96xf32> to vector<2x32xf32>
    %667 = vector.extract_strided_slice %657 {offsets = [0, 32], sizes = [2, 32], strides = [1, 1]} : vector<2x96xf32> to vector<2x32xf32>
    %668 = arith.addf %666, %667 : vector<2x32xf32>
    %669 = arith.negf %668 : vector<2x32xf32>
    %670 = math.exp %669 : vector<2x32xf32>
    %cst_152 = arith.constant 1.000000e+00 : f32
    %671 = vector.broadcast %cst_152 : f32 to vector<2x32xf32>
    %672 = arith.addf %671, %670 : vector<2x32xf32>
    %673 = arith.divf %671, %672 : vector<2x32xf32>
    %674 = vector.extract_strided_slice %656 {offsets = [0, 64], sizes = [2, 32], strides = [1, 1]} : vector<2x96xf32> to vector<2x32xf32>
    %675 = vector.extract_strided_slice %657 {offsets = [0, 64], sizes = [2, 32], strides = [1, 1]} : vector<2x96xf32> to vector<2x32xf32>
    %676 = vector.broadcast %1 : vector<1x32xf32> to vector<2x32xf32>
    %677 = arith.addf %675, %676 : vector<2x32xf32>
    %678 = arith.mulf %665, %677 : vector<2x32xf32>
    %679 = arith.addf %674, %678 : vector<2x32xf32>
    %680 = math.tanh %679 : vector<2x32xf32>
    %cst_153 = arith.constant 1.000000e+00 : f32
    %681 = vector.broadcast %cst_153 : f32 to vector<2x32xf32>
    %682 = arith.subf %681, %673 : vector<2x32xf32>
    %683 = arith.mulf %682, %680 : vector<2x32xf32>
    %684 = arith.mulf %673, %598 : vector<2x32xf32>
    %685 = arith.addf %683, %684 : vector<2x32xf32>
    %686 = vector.broadcast %c7_i32 : i32 to vector<2x1xi32>
    %687 = arith.cmpi sgt, %6, %686 : vector<2x1xi32>
    %688 = vector.shape_cast %687 : vector<2x1xi1> to vector<2x1xi1>
    %689 = vector.broadcast %688 : vector<2x1xi1> to vector<2x32xi1>
    %690 = arith.select %689, %685, %598 : vector<2x32xi1>, vector<2x32xf32>
    %cst_154 = arith.constant 0.000000e+00 : f32
    %691 = vector.shape_cast %687 : vector<2x1xi1> to vector<2x1xi1>
    %692 = vector.broadcast %691 : vector<2x1xi1> to vector<2x32xi1>
    %693 = vector.broadcast %cst_154 : f32 to vector<2x32xf32>
    %694 = arith.select %692, %685, %693 : vector<2x32xi1>, vector<2x32xf32>
    %cst_155 = arith.constant dense<0.000000e+00> : vector<2xf32>
    %695 = vector.multi_reduction <add>, %694, %cst_155 [1] : vector<2x32xf32> to vector<2xf32>
    %696 = vector.shape_cast %695 : vector<2xf32> to vector<2x1xf32>
    %cst_156 = arith.constant 3.200000e+01 : f32
    %697 = vector.broadcast %cst_156 : f32 to vector<2x1xf32>
    %698 = arith.divf %696, %697 : vector<2x1xf32>
    %699 = vector.broadcast %698 : vector<2x1xf32> to vector<2x32xf32>
    %700 = arith.subf %694, %699 : vector<2x32xf32>
    %701 = arith.mulf %700, %700 : vector<2x32xf32>
    %cst_157 = arith.constant dense<0.000000e+00> : vector<2xf32>
    %702 = vector.multi_reduction <add>, %701, %cst_157 [1] : vector<2x32xf32> to vector<2xf32>
    %703 = vector.shape_cast %702 : vector<2xf32> to vector<2x1xf32>
    %cst_158 = arith.constant 3.200000e+01 : f32
    %704 = vector.broadcast %cst_158 : f32 to vector<2x1xf32>
    %705 = arith.divf %703, %704 : vector<2x1xf32>
    %706 = vector.broadcast %698 : vector<2x1xf32> to vector<2x32xf32>
    %707 = arith.subf %694, %706 : vector<2x32xf32>
    %cst_159 = arith.constant 9.99999974E-6 : f32
    %708 = vector.broadcast %cst_159 : f32 to vector<2x1xf32>
    %709 = arith.addf %705, %708 : vector<2x1xf32>
    %710 = math.rsqrt %709 : vector<2x1xf32>
    %711 = vector.broadcast %710 : vector<2x1xf32> to vector<2x32xf32>
    %712 = arith.mulf %707, %711 : vector<2x32xf32>
    %713 = vector.broadcast %2 : vector<1x32xf32> to vector<2x32xf32>
    %714 = arith.mulf %712, %713 : vector<2x32xf32>
    %715 = vector.broadcast %3 : vector<1x32xf32> to vector<2x32xf32>
    %716 = arith.addf %714, %715 : vector<2x32xf32>
    %cst_160 = arith.constant dense<0.000000e+00> : vector<2x16xf32>
    %717 = tpu.matmul %716, %4, %cst_160 {dimension_numbers = #tpu.dot_dimension_numbers<[1], [0], [0], [1], [0, 0, 1, 1], [], []>} : vector<2x32xf32>, vector<32x16xf32>, vector<2x16xf32> -> vector<2x16xf32>
    %718 = vector.broadcast %5 : vector<1x16xf32> to vector<2x16xf32>
    %719 = arith.addf %717, %718 : vector<2x16xf32>
    %cst_161 = arith.constant dense<0xFF800000> : vector<2xf32>
    %720 = vector.multi_reduction <maximumf>, %719, %cst_161 [1] : vector<2x16xf32> to vector<2xf32>
    %721 = vector.shape_cast %720 : vector<2xf32> to vector<2x1xf32>
    %722 = vector.broadcast %721 : vector<2x1xf32> to vector<2x16xf32>
    %723 = arith.subf %719, %722 : vector<2x16xf32>
    %724 = math.exp %723 : vector<2x16xf32>
    %cst_162 = arith.constant dense<0.000000e+00> : vector<2xf32>
    %725 = vector.multi_reduction <add>, %724, %cst_162 [1] : vector<2x16xf32> to vector<2xf32>
    %726 = vector.shape_cast %725 : vector<2xf32> to vector<2x1xf32>
    %727 = math.log %726 : vector<2x1xf32>
    %728 = arith.addf %721, %727 : vector<2x1xf32>
    %729 = arith.index_cast %c7_i32 : i32 to index
    %c0_163 = arith.constant 0 : index
    %c0_164 = arith.constant 0 : index
    %730 = vector.load %arg9[%729, %c0_163, %c0_164] : memref<8x2x1xi32, #tpu.memory_space<vmem>>, vector<1x2x1xi32>
    %731 = vector.shape_cast %730 : vector<1x2x1xi32> to vector<2x1xi32>
    %732 = vector.broadcast %731 : vector<2x1xi32> to vector<2x16xi32>
    %733 = arith.cmpi eq, %7, %732 : vector<2x16xi32>
    %734 = arith.extui %733 : vector<2x16xi1> to vector<2x16xi32>
    %735 = arith.sitofp %734 : vector<2x16xi32> to vector<2x16xf32>
    %736 = arith.mulf %719, %735 : vector<2x16xf32>
    %cst_165 = arith.constant dense<0.000000e+00> : vector<2xf32>
    %737 = vector.multi_reduction <add>, %736, %cst_165 [1] : vector<2x16xf32> to vector<2xf32>
    %738 = vector.shape_cast %737 : vector<2xf32> to vector<2x1xf32>
    %c0_i32_166 = arith.constant 0 : i32
    %739 = vector.broadcast %c0_i32_166 : i32 to vector<2x1xi32>
    %740 = arith.cmpi sge, %731, %739 : vector<2x1xi32>
    %741 = arith.extui %740 : vector<2x1xi1> to vector<2x1xi32>
    %742 = arith.sitofp %741 : vector<2x1xi32> to vector<2x1xf32>
    %743 = arith.subf %728, %738 : vector<2x1xf32>
    %744 = arith.mulf %743, %742 : vector<2x1xf32>
    %745 = arith.addf %653, %744 : vector<2x1xf32>
    %c8_i32 = arith.constant 8 : i32
    %c0_167 = arith.constant 0 : index
    %c0_168 = arith.constant 0 : index
    %746 = vector.load %arg10[%c0_167, %c0_168] : memref<2x1xf32, #tpu.memory_space<vmem>>, vector<2x1xf32>
    tpu.vector_store %arg10[%c0_167, %c0_168], %745 {strides = array<i32>} : memref<2x1xf32, #tpu.memory_space<vmem>>, vector<2x1xf32>,
    return
  }
}

</mosaic_0001>

<llo_original>
// kernel: gmvsae_forward.5
$region0: #{gmvsae_forward.5}
  #allocation0 [shape = 'u32[]', space=smem, size = 0x4, offset = 0x4, fixed_abs, tag = 'smem constant byte address 0x4 - core index']
  #allocation1 [shape = 'u32[144,128]{1,0:T(1,128)}', space=vmem, size = 0x12000, scoped, tag = 'internal scratch']
  %s0 = inlined_call_operand.vmem [shape: f32[16,32], index: 0, kind: input, shape index: {}]
  %s1 = inlined_call_operand.vmem [shape: f32[32,96], index: 1, kind: input, shape index: {}]
  %s2 = inlined_call_operand.vmem [shape: f32[1,96], index: 2, kind: input, shape index: {}]
  %s3 = inlined_call_operand.vmem [shape: f32[16,96], index: 3, kind: output, shape index: {}]
  %s4 = sld [smem:[#allocation0]]
  $region45: #{gmvsae_forward.5} parent=0
    _
  %s6 = ssub.s32 1, %s4
  %s7 = scalar_select 0, %s6, %s4
  loop: start=0, step=1, limit=4
  $region2: #{gmvsae_forward.5} parent=0 // loop_pre_header
    _
  $region3: #{gmvsae_forward.5} parent=0 // loop_header
    %s9 = sphi 0, %s13
    %p10 = scmp.ge.s32.totalorder %s9, 4
    %s19 = sphi 0, %s21
    %s22 = sphi 0, %s19
    %s23 = sphi 0, %s22
    %s39 = sphi 0, %s23
    %s43 = sphi 0, %s43
    %s45 = sphi 0, %s43
    %s46 = sphi 0, %s45
    %s60 = sphi 0, %s46
    %s64 = sphi 0, %s64
    %s66 = sphi 0, %s64
    %s67 = sphi 0, %s66
    %s81 = sphi 0, %s67
    %s87 = sphi 0, %s89
    %s90 = sphi 0, %s87
    %s91 = sphi 0, %s90
    %s107 = sphi 0, %s91
  $region4: #{gmvsae_forward.5} parent=0 // loop_header_branch
    %12 = sbr.rel (%p10) target = $region8
  $region5: #{gmvsae_forward.5} parent=0 // loop_body
    %s14 = ssub.s32 %s9, 1
    %s15 = ssub.s32 %s9, 2
    %s16 = sadd.s32 %s9, 1
    %s17 = ssub.s32 %s9, %s16
    %p18 = scmp.eq.s32.totalorder %s17, 0
    %s20 = sadd.s32 %s19, 1
    %s21 = scalar_select %p18, %s19, %s20
    %p24 = pneg %p18
    %p25 = scmp.eq.s32.totalorder %s9, 1
    %p26 = por %p24, %p25
    %p27 = scmp.ne.s32.totalorder %s19, %s22
    %p28 = scmp.eq.s32.totalorder %s9, 0
    %p29 = por %p27, %p28
    %p30 = scmp.ne.s32.totalorder %s19, %s22
    %p31 = scmp.eq.s32.totalorder %s14, 1
    %p32 = por %p30, %p31
    %p33 = scmp.ne.s32.totalorder %s22, %s23
    %p34 = scmp.eq.s32.totalorder %s14, 0
    %p35 = por %p33, %p34
    %p36 = scmp.ne.s32.totalorder %s22, %s23
    %p37 = scmp.eq.s32.totalorder %s15, 1
    %p38 = por %p36, %p37
    %p40 = scmp.ne.s32.totalorder %s23, %s39
    %p41 = scmp.eq.s32.totalorder %s15, 0
    %p42 = por %p40, %p41
    %s44 = sadd.s32 %s43, 1
    %p47 = scmp.eq.s32.totalorder %s9, 1
    %p48 = scmp.ne.s32.totalorder %s43, %s45
    %p49 = scmp.eq.s32.totalorder %s9, 0
    %p50 = por %p48, %p49
    %p51 = scmp.ne.s32.totalorder %s43, %s45
    %p52 = scmp.eq.s32.totalorder %s14, 1
    %p53 = por %p51, %p52
    %p54 = scmp.ne.s32.totalorder %s45, %s46
    %p55 = scmp.eq.s32.totalorder %s14, 0
    %p56 = por %p54, %p55
    %p57 = scmp.ne.s32.totalorder %s45, %s46
    %p58 = scmp.eq.s32.totalorder %s15, 1
    %p59 = por %p57, %p58
    %p61 = scmp.ne.s32.totalorder %s46, %s60
    %p62 = scmp.eq.s32.totalorder %s15, 0
    %p63 = por %p61, %p62
    %s65 = sadd.s32 %s64, 1
    %p68 = scmp.eq.s32.totalorder %s9, 1
    %p69 = scmp.ne.s32.totalorder %s64, %s66
    %p70 = scmp.eq.s32.totalorder %s9, 0
    %p71 = por %p69, %p70
    %p72 = scmp.ne.s32.totalorder %s64, %s66
    %p73 = scmp.eq.s32.totalorder %s14, 1
    %p74 = por %p72, %p73
    %p75 = scmp.ne.s32.totalorder %s66, %s67
    %p76 = scmp.eq.s32.totalorder %s14, 0
    %p77 = por %p75, %p76
    %p78 = scmp.ne.s32.totalorder %s66, %s67
    %p79 = scmp.eq.s32.totalorder %s15, 1
    %p80 = por %p78, %p79
    %p82 = scmp.ne.s32.totalorder %s67, %s81
    %p83 = scmp.eq.s32.totalorder %s15, 0
    %p84 = por %p82, %p83
    %s85 = ssub.s32 %s9, %s16
    %p86 = scmp.eq.s32.totalorder %s85, 0
    %s88 = sadd.s32 %s87, 1
    %s89 = scalar_select %p86, %s87, %s88
    %p92 = pneg %p86
    %p93 = scmp.eq.s32.totalorder %s9, 1
    %p94 = por %p92, %p93
    %p95 = scmp.ne.s32.totalorder %s87, %s90
    %p96 = scmp.eq.s32.totalorder %s9, 0
    %p97 = por %p95, %p96
    %p98 = scmp.ne.s32.totalorder %s87, %s90
    %p99 = scmp.eq.s32.totalorder %s14, 1
    %p100 = por %p98, %p99
    %p101 = scmp.ne.s32.totalorder %s90, %s91
    %p102 = scmp.eq.s32.totalorder %s14, 0
    %p103 = por %p101, %p102
    %p104 = scmp.ne.s32.totalorder %s90, %s91
    %p105 = scmp.eq.s32.totalorder %s15, 1
    %p106 = por %p104, %p105
    %p108 = scmp.ne.s32.totalorder %s91, %s107
    %p109 = scmp.eq.s32.totalorder %s15, 0
    %p110 = por %p108, %p109
    %p111 = scmp.le.s32.totalorder 1, %s9
    %p112 = scmp.lt.s32.totalorder %s9, 3
    %p113 = pnand %p111, %p112
    %p114 = pneg %p113
    // Predicated region
    $region9: #{gmvsae_forward.5} parent=5 // pred_check
      _
    $region10: #{gmvsae_forward.5} parent=5 // pred_check_branch
      %116 = sbr.rel (%p113) target = $region12
    $region11: #{gmvsae_forward.5} parent=5 // pred_region
      %s117 = ssub.s32 %s9, 1
      // Predicated region
      $region13: #{gmvsae_forward.5} parent=11 // pred_check
        %p118 = pneg %p56
      $region14: #{gmvsae_forward.5} parent=11 // pred_check_branch
        %120 = sbr.rel (%p118) target = $region16
      $region15: #{gmvsae_forward.5} parent=11 // pred_region
        _
      $region16: #{gmvsae_forward.5} parent=11 // pred_fallthru
        _
      // Predicated region
      $region17: #{gmvsae_forward.5} parent=11 // pred_check
        %p121 = pneg %p77
      $region18: #{gmvsae_forward.5} parent=11 // pred_check_branch
        %123 = sbr.rel (%p121) target = $region20
      $region19: #{gmvsae_forward.5} parent=11 // pred_region
        _
      $region20: #{gmvsae_forward.5} parent=11 // pred_fallthru
        _
    $region12: #{gmvsae_forward.5} parent=5 // pred_fallthru
      _
    %p124 = scmp.lt.s32.totalorder %s9, 2
    // Predicated region
    $region21: #{gmvsae_forward.5} parent=5 // pred_check
      %p125 = pneg %p124
    $region22: #{gmvsae_forward.5} parent=5 // pred_check_branch
      %127 = sbr.rel (%p125) target = $region24
    $region23: #{gmvsae_forward.5} parent=5 // pred_region
      // Predicated region
      $region25: #{gmvsae_forward.5} parent=23 // pred_check
        %p128 = pneg %p29
      $region26: #{gmvsae_forward.5} parent=23 // pred_check_branch
        %130 = sbr.rel (%p128) target = $region28
      $region27: #{gmvsae_forward.5} parent=23 // pred_region
        %p131 = scmp.lt.s32.totalorder %s9, 1
        %s132 = scalar_select %p131, %s9, 1
        %s133 = smul.addr %s132, 8
        %s134 = scalar_lea.vmem %s0, %s133
      $region28: #{gmvsae_forward.5} parent=23 // pred_fallthru
        _
    $region24: #{gmvsae_forward.5} parent=5 // pred_fallthru
      _
    %p135 = scmp.le.s32.totalorder 1, %s9
    %p136 = scmp.lt.s32.totalorder %s9, 3
    %p137 = pnand %p135, %p136
    %p138 = pneg %p137
    // Predicated region
    $region29: #{gmvsae_forward.5} parent=5 // pred_check
      _
    $region30: #{gmvsae_forward.5} parent=5 // pred_check_branch
      %140 = sbr.rel (%p137) target = $region32
    $region31: #{gmvsae_forward.5} parent=5 // pred_region
      %s141 = ssub.s32 %s9, 1
      %p142 = scmp.lt.s32.totalorder %s14, 1
      %s143 = scalar_select %p142, %s14, 1
      %s144 = smul.addr %s143, 8
      %s145 = scalar_lea.vmem %s0, %s144
      %p146 = pneg %p35
      %p147 = pneg %p32
      %p148 = pneg %p56
      %p149 = pneg %p53
      %p150 = pneg %p77
      %p151 = pneg %p74
      %p152 = pneg %p103
      %p153 = pneg %p100
      %p154 = scmp.lt.s32.totalorder %s14, 1
      %s155 = scalar_select %p154, %s14, 1
      %s156 = smul.addr %s155, 8
      %s157 = scalar_lea.vmem %s3, %s156
      %p158 = scmp.lt.s32.totalorder %s14, 1
      %s159 = scalar_select %p158, %s14, 1
      %s160 = smul.addr %s159, 8
      %s161 = scalar_lea.vmem %s0, %s160
      %p162 = scmp.lt.s32.totalorder %s14, 1
      %s163 = scalar_select %p162, %s14, 1
      %s164 = smul.addr %s163, 8
      %s165 = scalar_lea.vmem %s3, %s164
      %v166 = vld [vmem:[%s161] sm:$0xff]
      %v167 = vld [vmem:[%s1] sm:$0xff]
      %v168 = vld [vmem:[%s1 + $0x8] sm:$0xff]
      %v169 = vld [vmem:[%s1 + $0x10] sm:$0xff]
      %v170 = vld [vmem:[%s1 + $0x18] sm:$0xff]
      %v171 = vld [vmem:[%s2] sm:$0x1]
      %v173 = vlaneseq
      %v174 = vshrl.u32 %v173, 7
      %v175 = vsub.s32 0, %v174
      %v176 = vrot.slane %v171, %v175
      %vm178 = vcmask 261120
      %v180 = vsel %vm178, %v166, 0
      %182 = vmatprep.subr.mxu0 0.0
      %183 = vmatpush1.msra.mxu0 %v167
      %184 = vmatprep.subr.mxu0 0.0
      %185 = vmatpush1.msra.mxu0 %v168
      %186 = vmatprep.subr.mxu0 0.0
      %187 = vmatpush1.msra.mxu0 %v169
      %188 = vmatprep.subr.mxu0 0.0
      %189 = vmatpush1.msra.mxu0 %v170
      %190 = vmatprep.subr.mxu0 0.0
      %191 = vmatpush1.msra.mxu0 0.0
      %192 = vmatprep.subr.mxu0 0.0
      %193 = vmatpush1.msra.mxu0 0.0
      %194 = vmatprep.subr.mxu0 0.0
      %195 = vmatpush1.msra.mxu0 0.0
      %196 = vmatprep.subr.mxu0 0.0
      %197 = vmatpush1.msra.mxu0 0.0
      %198 = vmatprep.subr.mxu0 0.0
      %199 = vmatpush1.msra.mxu0 0.0
      %200 = vmatprep.subr.mxu0 0.0
      %201 = vmatpush1.msra.mxu0 0.0
      %202 = vmatprep.subr.mxu0 0.0
      %203 = vmatpush1.msra.mxu0 0.0
      %204 = vmatprep.subr.mxu0 0.0
      %205 = vmatpush1.msra.mxu0 0.0
      %206 = vmatprep.subr.mxu0 0.0
      %207 = vmatpush1.msra.mxu0 0.0
      %208 = vmatprep.subr.mxu0 0.0
      %209 = vmatpush1.msra.mxu0 0.0
      %210 = vmatprep.subr.mxu0 0.0
      %211 = vmatpush1.msra.mxu0 0.0
      %212 = vmatprep.subr.mxu0 0.0
      %213 = vmatpush1.msra.mxu0 0.0
      %214 = vmatprep.subr.mxu0 0.0
      %215 = vmatpush1.msra.mxu0 0.0
      %216 = vmatprep.subr.mxu0 0.0
      %217 = vmatpush1.msra.mxu0 0.0
      %218 = vmatprep.subr.mxu0 0.0
      %219 = vmatpush1.msra.mxu0 0.0
      %220 = vmatprep.subr.mxu0 0.0
      %221 = vmatpush1.msra.mxu0 0.0
      %222 = vmatprep.subr.mxu0 0.0
      %223 = vmatpush1.msra.mxu0 0.0
      %224 = vmatprep.subr.mxu0 0.0
      %225 = vmatpush1.msra.mxu0 0.0
      %226 = vmatprep.subr.mxu0 0.0
      %227 = vmatpush1.msra.mxu0 0.0
      %228 = vmatprep.subr.mxu0 0.0
      %229 = vmatpush1.msra.mxu0 0.0
      %230 = vmatprep.subr.mxu0 0.0
      %231 = vmatpush1.msra.mxu0 0.0
      %232 = vmatprep.subr.mxu0 0.0
      %233 = vmatpush1.msra.mxu0 0.0
      %234 = vmatprep.subr.mxu0 0.0
      %235 = vmatpush1.msra.mxu0 0.0
      %236 = vmatprep.subr.mxu0 0.0
      %237 = vmatpush1.msra.mxu0 0.0
      %238 = vmatprep.subr.mxu0 0.0
      %239 = vmatpush1.msra.mxu0 0.0
      %240 = vmatprep.subr.mxu0 0.0
      %241 = vmatpush1.msra.mxu0 0.0
      %242 = vmatprep.subr.mxu0 0.0
      %243 = vmatpush1.msra.mxu0 0.0
      %244 = vmatprep.subr.mxu0 0.0
      %245 = vmatpush1.msra.mxu0 0.0
      %246 = vmatprep.mubr.f32.mxu0 0.0
      %247 = vmatmul.mubr.f32.gmra.mrb[0].mxu0 %v180
      %v248 = vpop.f32.mrb[0].mxu0
      %v249 = vadd.f32 %v176, %v248
      %v250 = vpop.f32.mrb[0].mxu0
      %251 = vdwg.mxu0
      %vm252 = vcmask 785408
      %253 = vst.msk [vmem:[%s165] sm:$0xff] %vm252, %v249
      %p254 = scmp.lt.s32.totalorder %s14, 1
      %s255 = scalar_select %p254, %s14, 1
      %s256 = smul.addr %s255, 8
      %s257 = scalar_lea.vmem %s3, %s256
      // Predicated region
      $region33: #{gmvsae_forward.5} parent=31 // pred_check
        %p258 = pneg %p100
      $region34: #{gmvsae_forward.5} parent=31 // pred_check_branch
        %260 = sbr.rel (%p258) target = $region36
      $region35: #{gmvsae_forward.5} parent=31 // pred_region
        _
      $region36: #{gmvsae_forward.5} parent=31 // pred_fallthru
        _
    $region32: #{gmvsae_forward.5} parent=5 // pred_fallthru
      _
    %p261 = scmp.le.s32.totalorder 2, %s9
    // Predicated region
    $region37: #{gmvsae_forward.5} parent=5 // pred_check
      %p262 = pneg %p261
    $region38: #{gmvsae_forward.5} parent=5 // pred_check_branch
      %264 = sbr.rel (%p262) target = $region40
    $region39: #{gmvsae_forward.5} parent=5 // pred_region
      %s265 = ssub.s32 %s9, 2
      // Predicated region
      $region41: #{gmvsae_forward.5} parent=39 // pred_check
        %p266 = pneg %p106
      $region42: #{gmvsae_forward.5} parent=39 // pred_check_branch
        %268 = sbr.rel (%p266) target = $region44
      $region43: #{gmvsae_forward.5} parent=39 // pred_region
        %p269 = scmp.lt.s32.totalorder %s15, 1
        %s270 = scalar_select %p269, %s15, 1
        %s271 = smul.addr %s270, 8
        %s272 = scalar_lea.vmem %s3, %s271
      $region44: #{gmvsae_forward.5} parent=39 // pred_fallthru
        _
    $region40: #{gmvsae_forward.5} parent=5 // pred_fallthru
      _
  $region6: #{gmvsae_forward.5} parent=0 // loop_footer
    %s13 = sadd.s32 1, %s9
  $region7: #{gmvsae_forward.5} parent=0 // loop_footer_branch
    %8 = sbr.rel target = $region3
  $region8: #{gmvsae_forward.5} parent=0 // loop_exit
    _

// kernel: gmvsae_forward.7
$region0: #{gmvsae_forward.7}
  #allocation0 [shape = 'u32[]', space=smem, size = 0x4, offset = 0x4, fixed_abs, tag = 'smem constant byte address 0x4 - core index']
  #allocation1 [shape = 'u32[144,128]{1,0:T(1,128)}', space=vmem, size = 0x12000, scoped, tag = 'internal scratch']
  %s0 = inlined_call_operand.vmem [shape: f32[2,32], index: 0, kind: input, shape index: {}]
  %s1 = inlined_call_operand.vmem [shape: f32[32,64], index: 1, kind: input, shape index: {}]
  %s2 = inlined_call_operand.vmem [shape: f32[1,64], index: 2, kind: input, shape index: {}]
  %s3 = inlined_call_operand.vmem [shape: f32[2,32], index: 3, kind: input, shape index: {}]
  %s4 = inlined_call_operand.vmem [shape: f32[32,10], index: 4, kind: input, shape index: {}]
  %s5 = inlined_call_operand.vmem [shape: f32[32,10], index: 5, kind: input, shape index: {}]
  %s6 = inlined_call_operand.vmem [shape: f32[1,10], index: 6, kind: input, shape index: {}]
  %s7 = inlined_call_operand.vmem [shape: f32[1,10], index: 7, kind: input, shape index: {}]
  %s8 = inlined_call_operand.vmem [shape: f32[1,10], index: 8, kind: input, shape index: {}]
  %s9 = inlined_call_operand.vmem [shape: f32[2,32], index: 9, kind: output, shape index: {0}]
  %s10 = inlined_call_operand.hbm [shape: f32[1,1], index: 10, kind: output, shape index: {1}]
  %11 = xla_tuple %s9, %s10
  %s12 = sld [smem:[#allocation0]]
  $region54: #{gmvsae_forward.7} parent=0
    _
  %s14 = ssub.s32 1, %s12
  %s15 = scalar_select 0, %s14, %s12
  $region1: #{gmvsae_forward.7} parent=0
    #allocation2 [shape = 'u8[512]{0}', space=vmem, size = 0x400, scoped, tag = 'output window, operand 1, single buffered']
    #allocation3 [shape = 's32[1]{0}', space=sflag, size = 0x4, scoped, tag = 'scoped memory for gmvsae_forward.7']
    %16 = vsyncpa [#allocation3], 0
    // Predicated region
    $region2: #{gmvsae_forward.7} parent=1 // pred_check
      _
    $region3: #{gmvsae_forward.7} parent=1 // pred_check_branch
      %18 = sbr.rel (0) target = $region5
    $region4: #{gmvsae_forward.7} parent=1 // pred_region
      _
    $region5: #{gmvsae_forward.7} parent=1 // pred_fallthru
      _
    // Predicated region
    $region6: #{gmvsae_forward.7} parent=1 // pred_check
      _
    $region7: #{gmvsae_forward.7} parent=1 // pred_check_branch
      %20 = sbr.rel (0) target = $region9
    $region8: #{gmvsae_forward.7} parent=1 // pred_region
      _
    $region9: #{gmvsae_forward.7} parent=1 // pred_fallthru
      _
    // Predicated region
    $region10: #{gmvsae_forward.7} parent=1 // pred_check
      _
    $region11: #{gmvsae_forward.7} parent=1 // pred_check_branch
      %22 = sbr.rel (0) target = $region13
    $region12: #{gmvsae_forward.7} parent=1 // pred_region
      _
    $region13: #{gmvsae_forward.7} parent=1 // pred_fallthru
      _
    // Predicated region
    $region14: #{gmvsae_forward.7} parent=1 // pred_check
      _
    $region15: #{gmvsae_forward.7} parent=1 // pred_check_branch
      %24 = sbr.rel (0) target = $region17
    $region16: #{gmvsae_forward.7} parent=1 // pred_region
      _
    $region17: #{gmvsae_forward.7} parent=1 // pred_fallthru
      _
    // Predicated region
    $region18: #{gmvsae_forward.7} parent=1 // pred_check
      _
    $region19: #{gmvsae_forward.7} parent=1 // pred_check_branch
      %26 = sbr.rel (0) target = $region21
    $region20: #{gmvsae_forward.7} parent=1 // pred_region
      _
    $region21: #{gmvsae_forward.7} parent=1 // pred_fallthru
      _
    // Predicated region
    $region22: #{gmvsae_forward.7} parent=1 // pred_check
      _
    $region23: #{gmvsae_forward.7} parent=1 // pred_check_branch
      %28 = sbr.rel (0) target = $region25
    $region24: #{gmvsae_forward.7} parent=1 // pred_region
      _
    $region25: #{gmvsae_forward.7} parent=1 // pred_fallthru
      _
    // Predicated region
    $region26: #{gmvsae_forward.7} parent=1 // pred_check
      _
    $region27: #{gmvsae_forward.7} parent=1 // pred_check_branch
      %30 = sbr.rel (0) target = $region29
    $region28: #{gmvsae_forward.7} parent=1 // pred_region
      _
    $region29: #{gmvsae_forward.7} parent=1 // pred_fallthru
      _
    // Predicated region
    $region30: #{gmvsae_forward.7} parent=1 // pred_check
      _
    $region31: #{gmvsae_forward.7} parent=1 // pred_check_branch
      %32 = sbr.rel (0) target = $region33
    $region32: #{gmvsae_forward.7} parent=1 // pred_region
      _
    $region33: #{gmvsae_forward.7} parent=1 // pred_fallthru
      _
    // Predicated region
    $region34: #{gmvsae_forward.7} parent=1 // pred_check
      _
    $region35: #{gmvsae_forward.7} parent=1 // pred_check_branch
      %34 = sbr.rel (0) target = $region37
    $region36: #{gmvsae_forward.7} parent=1 // pred_region
      _
    $region37: #{gmvsae_forward.7} parent=1 // pred_fallthru
      _
    %v35 = vld [vmem:[%s0] sm:$0x3]
    %v36 = vld [vmem:[%s1] sm:$0xff]
    %v37 = vld [vmem:[%s1 + $0x8] sm:$0xff]
    %v38 = vld [vmem:[%s1 + $0x10] sm:$0xff]
    %v39 = vld [vmem:[%s1 + $0x18] sm:$0xff]
    %v40 = vld [vmem:[%s2] sm:$0x1]
    %v42 = vlaneseq
    %v43 = vshrl.u32 %v42, 7
    %v44 = vsub.s32 0, %v43
    %v45 = vrot.slane %v40, %v44
    %vm47 = vcmask 261120
    %v49 = vsel %vm47, %v35, 0
    %51 = vmatprep.subr.mxu0 0.0
    %52 = vmatpush1.msra.mxu0 %v36
    %53 = vmatprep.subr.mxu0 0.0
    %54 = vmatpush1.msra.mxu0 %v37
    %55 = vmatprep.subr.mxu0 0.0
    %56 = vmatpush1.msra.mxu0 %v38
    %57 = vmatprep.subr.mxu0 0.0
    %58 = vmatpush1.msra.mxu0 %v39
    %59 = vmatprep.subr.mxu0 0.0
    %60 = vmatpush1.msra.mxu0 0.0
    %61 = vmatprep.subr.mxu0 0.0
    %62 = vmatpush1.msra.mxu0 0.0
    %63 = vmatprep.subr.mxu0 0.0
    %64 = vmatpush1.msra.mxu0 0.0
    %65 = vmatprep.subr.mxu0 0.0
    %66 = vmatpush1.msra.mxu0 0.0
    %67 = vmatprep.subr.mxu0 0.0
    %68 = vmatpush1.msra.mxu0 0.0
    %69 = vmatprep.subr.mxu0 0.0
    %70 = vmatpush1.msra.mxu0 0.0
    %71 = vmatprep.subr.mxu0 0.0
    %72 = vmatpush1.msra.mxu0 0.0
    %73 = vmatprep.subr.mxu0 0.0
    %74 = vmatpush1.msra.mxu0 0.0
    %75 = vmatprep.subr.mxu0 0.0
    %76 = vmatpush1.msra.mxu0 0.0
    %77 = vmatprep.subr.mxu0 0.0
    %78 = vmatpush1.msra.mxu0 0.0
    %79 = vmatprep.subr.mxu0 0.0
    %80 = vmatpush1.msra.mxu0 0.0
    %81 = vmatprep.subr.mxu0 0.0
    %82 = vmatpush1.msra.mxu0 0.0
    %83 = vmatprep.subr.mxu0 0.0
    %84 = vmatpush1.msra.mxu0 0.0
    %85 = vmatprep.subr.mxu0 0.0
    %86 = vmatpush1.msra.mxu0 0.0
    %87 = vmatprep.subr.mxu0 0.0
    %88 = vmatpush1.msra.mxu0 0.0
    %89 = vmatprep.subr.mxu0 0.0
    %90 = vmatpush1.msra.mxu0 0.0
    %91 = vmatprep.subr.mxu0 0.0
    %92 = vmatpush1.msra.mxu0 0.0
    %93 = vmatprep.subr.mxu0 0.0
    %94 = vmatpush1.msra.mxu0 0.0
    %95 = vmatprep.subr.mxu0 0.0
    %96 = vmatpush1.msra.mxu0 0.0
    %97 = vmatprep.subr.mxu0 0.0
    %98 = vmatpush1.msra.mxu0 0.0
    %99 = vmatprep.subr.mxu0 0.0
    %100 = vmatpush1.msra.mxu0 0.0
    %101 = vmatprep.subr.mxu0 0.0
    %102 = vmatpush1.msra.mxu0 0.0
    %103 = vmatprep.subr.mxu0 0.0
    %104 = vmatpush1.msra.mxu0 0.0
    %105 = vmatprep.subr.mxu0 0.0
    %106 = vmatpush1.msra.mxu0 0.0
    %107 = vmatprep.subr.mxu0 0.0
    %108 = vmatpush1.msra.mxu0 0.0
    %109 = vmatprep.subr.mxu0 0.0
    %110 = vmatpush1.msra.mxu0 0.0
    %111 = vmatprep.subr.mxu0 0.0
    %112 = vmatpush1.msra.mxu0 0.0
    %113 = vmatprep.subr.mxu0 0.0
    %114 = vmatpush1.msra.mxu0 0.0
    %115 = vmatprep.mubr.f32.mxu0 0.0
    %116 = vmatmul.mubr.f32.gmra.mrb[0].mxu0 %v49
    %v117 = vpop.f32.mrb[0].mxu0
    %v118 = vadd.f32 %v45, %v117
    %v119 = vpop.f32.mrb[0].mxu0
    %120 = vdwg.mxu0
    %v121 = vld [vmem:[%s3] sm:$0x3]
    %v122 = vmul.f32 %v118, 0.5
    %v123 = vmul.f32 %v122, 1.442695
    %v124 = vpow.pop %v123
    %126 = vrot.lane.b32.xlu0 %v124, 96
    %v127 = vpop.permute.xlu0 %126
    %v129 = vmul.f32 %v121, %v127
    %v130 = vadd.f32 %v118, %v129
    %vm131 = vcmask 254976
    %132 = vst.msk [vmem:[%s9] sm:$0x3] %vm131, %v130
    %v133 = vmul.f32 %v130, %v130
    %v134 = vld [vmem:[%s4] sm:$0xff]
    %v135 = vld [vmem:[%s4 + $0x8] sm:$0xff]
    %v136 = vld [vmem:[%s4 + $0x10] sm:$0xff]
    %v137 = vld [vmem:[%s4 + $0x18] sm:$0xff]
    %v139 = vsel %vm47, %v133, 0
    %141 = vmatprep.subr.mxu0 0.0
    %142 = vmatpush1.msra.mxu0 %v134
    %143 = vmatprep.subr.mxu0 0.0
    %144 = vmatpush1.msra.mxu0 %v135
    %145 = vmatprep.subr.mxu0 0.0
    %146 = vmatpush1.msra.mxu0 %v136
    %147 = vmatprep.subr.mxu0 0.0
    %148 = vmatpush1.msra.mxu0 %v137
    %149 = vmatprep.subr.mxu0 0.0
    %150 = vmatpush1.msra.mxu0 0.0
    %151 = vmatprep.subr.mxu0 0.0
    %152 = vmatpush1.msra.mxu0 0.0
    %153 = vmatprep.subr.mxu0 0.0
    %154 = vmatpush1.msra.mxu0 0.0
    %155 = vmatprep.subr.mxu0 0.0
    %156 = vmatpush1.msra.mxu0 0.0
    %157 = vmatprep.subr.mxu0 0.0
    %158 = vmatpush1.msra.mxu0 0.0
    %159 = vmatprep.subr.mxu0 0.0
    %160 = vmatpush1.msra.mxu0 0.0
    %161 = vmatprep.subr.mxu0 0.0
    %162 = vmatpush1.msra.mxu0 0.0
    %163 = vmatprep.subr.mxu0 0.0
    %164 = vmatpush1.msra.mxu0 0.0
    %165 = vmatprep.subr.mxu0 0.0
    %166 = vmatpush1.msra.mxu0 0.0
    %167 = vmatprep.subr.mxu0 0.0
    %168 = vmatpush1.msra.mxu0 0.0
    %169 = vmatprep.subr.mxu0 0.0
    %170 = vmatpush1.msra.mxu0 0.0
    %171 = vmatprep.subr.mxu0 0.0
    %172 = vmatpush1.msra.mxu0 0.0
    %173 = vmatprep.subr.mxu0 0.0
    %174 = vmatpush1.msra.mxu0 0.0
    %175 = vmatprep.subr.mxu0 0.0
    %176 = vmatpush1.msra.mxu0 0.0
    %177 = vmatprep.subr.mxu0 0.0
    %178 = vmatpush1.msra.mxu0 0.0
    %179 = vmatprep.subr.mxu0 0.0
    %180 = vmatpush1.msra.mxu0 0.0
    %181 = vmatprep.subr.mxu0 0.0
    %182 = vmatpush1.msra.mxu0 0.0
    %183 = vmatprep.subr.mxu0 0.0
    %184 = vmatpush1.msra.mxu0 0.0
    %185 = vmatprep.subr.mxu0 0.0
    %186 = vmatpush1.msra.mxu0 0.0
    %187 = vmatprep.subr.mxu0 0.0
    %188 = vmatpush1.msra.mxu0 0.0
    %189 = vmatprep.subr.mxu0 0.0
    %190 = vmatpush1.msra.mxu0 0.0
    %191 = vmatprep.subr.mxu0 0.0
    %192 = vmatpush1.msra.mxu0 0.0
    %193 = vmatprep.subr.mxu0 0.0
    %194 = vmatpush1.msra.mxu0 0.0
    %195 = vmatprep.subr.mxu0 0.0
    %196 = vmatpush1.msra.mxu0 0.0
    %197 = vmatprep.subr.mxu0 0.0
    %198 = vmatpush1.msra.mxu0 0.0
    %199 = vmatprep.subr.mxu0 0.0
    %200 = vmatpush1.msra.mxu0 0.0
    %201 = vmatprep.subr.mxu0 0.0
    %202 = vmatpush1.msra.mxu0 0.0
    %203 = vmatprep.subr.mxu0 0.0
    %204 = vmatpush1.msra.mxu0 0.0
    %205 = vmatprep.mubr.f32.mxu0 0.0
    %206 = vmatmul.mubr.f32.gmra.mrb[0].mxu0 %v139
    %v207 = vpop.f32.mrb[0].mxu0
    %v208 = vadd.f32 0.0, %v207
    %v209 = vpop.f32.mrb[0].mxu0
    %210 = vdwg.mxu0
    %v211 = vld [vmem:[%s5] sm:$0xff]
    %v212 = vld [vmem:[%s5 + $0x8] sm:$0xff]
    %v213 = vld [vmem:[%s5 + $0x10] sm:$0xff]
    %v214 = vld [vmem:[%s5 + $0x18] sm:$0xff]
    %v216 = vsel %vm47, %v130, 0
    %218 = vmatprep.subr.mxu0 0.0
    %219 = vmatpush1.msra.mxu0 %v211
    %220 = vmatprep.subr.mxu0 0.0
    %221 = vmatpush1.msra.mxu0 %v212
    %222 = vmatprep.subr.mxu0 0.0
    %223 = vmatpush1.msra.mxu0 %v213
    %224 = vmatprep.subr.mxu0 0.0
    %225 = vmatpush1.msra.mxu0 %v214
    %226 = vmatprep.subr.mxu0 0.0
    %227 = vmatpush1.msra.mxu0 0.0
    %228 = vmatprep.subr.mxu0 0.0
    %229 = vmatpush1.msra.mxu0 0.0
    %230 = vmatprep.subr.mxu0 0.0
    %231 = vmatpush1.msra.mxu0 0.0
    %232 = vmatprep.subr.mxu0 0.0
    %233 = vmatpush1.msra.mxu0 0.0
    %234 = vmatprep.subr.mxu0 0.0
    %235 = vmatpush1.msra.mxu0 0.0
    %236 = vmatprep.subr.mxu0 0.0
    %237 = vmatpush1.msra.mxu0 0.0
    %238 = vmatprep.subr.mxu0 0.0
    %239 = vmatpush1.msra.mxu0 0.0
    %240 = vmatprep.subr.mxu0 0.0
    %241 = vmatpush1.msra.mxu0 0.0
    %242 = vmatprep.subr.mxu0 0.0
    %243 = vmatpush1.msra.mxu0 0.0
    %244 = vmatprep.subr.mxu0 0.0
    %245 = vmatpush1.msra.mxu0 0.0
    %246 = vmatprep.subr.mxu0 0.0
    %247 = vmatpush1.msra.mxu0 0.0
    %248 = vmatprep.subr.mxu0 0.0
    %249 = vmatpush1.msra.mxu0 0.0
    %250 = vmatprep.subr.mxu0 0.0
    %251 = vmatpush1.msra.mxu0 0.0
    %252 = vmatprep.subr.mxu0 0.0
    %253 = vmatpush1.msra.mxu0 0.0
    %254 = vmatprep.subr.mxu0 0.0
    %255 = vmatpush1.msra.mxu0 0.0
    %256 = vmatprep.subr.mxu0 0.0
    %257 = vmatpush1.msra.mxu0 0.0
    %258 = vmatprep.subr.mxu0 0.0
    %259 = vmatpush1.msra.mxu0 0.0
    %260 = vmatprep.subr.mxu0 0.0
    %261 = vmatpush1.msra.mxu0 0.0
    %262 = vmatprep.subr.mxu0 0.0
    %263 = vmatpush1.msra.mxu0 0.0
    %264 = vmatprep.subr.mxu0 0.0
    %265 = vmatpush1.msra.mxu0 0.0
    %266 = vmatprep.subr.mxu0 0.0
    %267 = vmatpush1.msra.mxu0 0.0
    %268 = vmatprep.subr.mxu0 0.0
    %269 = vmatpush1.msra.mxu0 0.0
    %270 = vmatprep.subr.mxu0 0.0
    %271 = vmatpush1.msra.mxu0 0.0
    %272 = vmatprep.subr.mxu0 0.0
    %273 = vmatpush1.msra.mxu0 0.0
    %274 = vmatprep.subr.mxu0 0.0
    %275 = vmatpush1.msra.mxu0 0.0
    %276 = vmatprep.subr.mxu0 0.0
    %277 = vmatpush1.msra.mxu0 0.0
    %278 = vmatprep.subr.mxu0 0.0
    %279 = vmatpush1.msra.mxu0 0.0
    %280 = vmatprep.subr.mxu0 0.0
    %281 = vmatpush1.msra.mxu0 0.0
    %282 = vmatprep.mubr.f32.mxu0 0.0
    %283 = vmatmul.mubr.f32.gmra.mrb[0].mxu0 %v216
    %v284 = vpop.f32.mrb[0].mxu0
    %v285 = vadd.f32 0.0, %v284
    %v286 = vpop.f32.mrb[0].mxu0
    %287 = vdwg.mxu0
    %v288 = vmul.f32 %v285, 2.0
    %v289 = vsub.f32 %v208, %v288
    %v290 = vld [vmem:[%s6] sm:$0x1]
    %v292 = vlaneseq
    %v293 = vshrl.u32 %v292, 7
    %v294 = vsub.s32 0, %v293
    %v295 = vrot.slane %v290, %v294
    %v297 = vadd.f32 %v289, %v295
    %v298 = vmul.f32 %v297, -0.5
    %vm299 = vcmask 74752
    %v300 = vsel %vm299, %v298, -inf
    %301 = vmax.xlane.f32.xlu0 %v300
    %v302 = vpop.xlane.xlu0 %301
    %v303 = vsub.f32 %v298, %v302
    %v304 = vmul.f32 %v303, 1.442695
    %v305 = vpow.pop %v304
    %v306 = vsel %vm299, %v305, 0.0
    %307 = vadd.xlane.f32.xlu0 %v306
    %v308 = vpop.xlane.xlu0 %307
    %v309 = vrcp.pop %v308
    %v310 = vmul.f32 %v305, %v309
    %v311 = vadd.f32 %v310, 1e-10
    %v312 = vlog2.pop %v311
    %v313 = vmul.f32 %v312, 0.6931472
    %v314 = vld [vmem:[%s8] sm:$0x1]
    %v316 = vlaneseq
    %v317 = vshrl.u32 %v316, 7
    %v318 = vsub.s32 0, %v317
    %v319 = vrot.slane %v314, %v318
    %v321 = vsub.f32 %v313, %v319
    %v322 = vmul.f32 %v311, %v321
    %v323 = vsel %vm299, %v322, 0.0
    %324 = vadd.xlane.f32.xlu0 %v323
    %v325 = vpop.xlane.xlu0 %324
    %v326 = vrot.slane %v325, 4
    %v327 = vadd.f32 %v325, %v326
    %v328 = vrot.slane %v327, 2
    %v329 = vadd.f32 %v327, %v328
    %v330 = vrot.slane %v329, 1
    %v331 = vadd.f32 %v329, %v330
    %s332 = vtos %v331
    %v333 = vrcp.pop 2.0
    %s334 = vtos %v333
    %s335 = smul.f32 %s332, %s334
    %v336 = vadd.f32 %v118, 1.837877
    %v337 = vsub.f32 %v130, %v118
    %v338 = vmul.f32 %v337, %v337
    %v339 = vsub.f32 0.0, %v118
    %v340 = vmul.f32 %v339, 1.442695
    %v341 = vpow.pop %v340
    %343 = vrot.lane.b32.xlu0 %v341, 96
    %v344 = vpop.permute.xlu0 %343
    %v346 = vmul.f32 %v338, %v344
    %348 = vrot.lane.b32.xlu0 %v346, 32
    %v349 = vpop.permute.xlu0 %348
    %v351 = vadd.f32 %v336, %v349
    %353 = vrot.lane.b32.xlu0 %v351, 96
    %v354 = vpop.permute.xlu0 %353
    %v356 = vsel %vm131, %v354, 0.0
    %357 = vadd.xlane.f32.xlu0 %v356
    %v358 = vpop.xlane.xlu0 %357
    %v359 = vmul.f32 %v358, -0.5
    %v360 = vld [vmem:[%s7] sm:$0x1]
    %v361 = vadd.f32 %v360, 58.812065
    %v363 = vlaneseq
    %v364 = vshrl.u32 %v363, 7
    %v365 = vsub.s32 0, %v364
    %v366 = vrot.slane %v361, %v365
    %v368 = vadd.f32 %v366, %v297
    %v369 = vmul.f32 %v368, -0.5
    %v370 = vsub.f32 %v359, %v369
    %v371 = vsel %vm299, %v370, 0.0
    %372 = vadd.xlane.f32.xlu0 %v371
    %v373 = vpop.xlane.xlu0 %372
    %v374 = vrot.slane %v373, 4
    %v375 = vadd.f32 %v373, %v374
    %v376 = vrot.slane %v375, 2
    %v377 = vadd.f32 %v375, %v376
    %v378 = vrot.slane %v377, 1
    %v379 = vadd.f32 %v377, %v378
    %s380 = vtos %v379
    %v381 = vrcp.pop 20.0
    %s382 = vtos %v381
    %s383 = smul.f32 %s380, %s382
    %v384 = vrcp.pop 32.0
    %s385 = vtos %v384
    %s386 = smul.f32 %s383, %s385
    %s387 = sadd.f32 %s335, %s386
    %v388 = vstv %s387
    %v389 = vadd.f32 %v388, 0.0
    %vm390 = vcmask 0
    %391 = vst.msk [vmem:[#allocation2] sm:$0x1] %vm390, %v389
    // Predicated region
    $region38: #{gmvsae_forward.7} parent=1 // pred_check
      _
    $region39: #{gmvsae_forward.7} parent=1 // pred_check_branch
      %393 = sbr.rel (0) target = $region41
    $region40: #{gmvsae_forward.7} parent=1 // pred_region
      _
    $region41: #{gmvsae_forward.7} parent=1 // pred_fallthru
      _
    // Predicated region
    $region42: #{gmvsae_forward.7} parent=1 // pred_check
      _
    $region43: #{gmvsae_forward.7} parent=1 // pred_check_branch
      %395 = sbr.rel (0) target = $region45
    $region44: #{gmvsae_forward.7} parent=1 // pred_region
      %s397 = ssub.s32 16, 16
      %398 = vsyncadd [#allocation3], %s397
      %s400 = sshll.u32 [#allocation2], 4
      %s401 = int_to_ptr.vmem [resolvable:$true] %s400
      %403 = dma.vmem_to_hbm [thread:$0]  %s401, 16, %s10, [#allocation3]
    $region45: #{gmvsae_forward.7} parent=1 // pred_fallthru
      _
    // Predicated region
    $region46: #{gmvsae_forward.7} parent=1 // pred_check
      _
    $region47: #{gmvsae_forward.7} parent=1 // pred_check_branch
      %405 = sbr.rel (0) target = $region49
    $region48: #{gmvsae_forward.7} parent=1 // pred_region
      _
    $region49: #{gmvsae_forward.7} parent=1 // pred_fallthru
      _
    // Predicated region
    $region50: #{gmvsae_forward.7} parent=1 // pred_check
      _
    $region51: #{gmvsae_forward.7} parent=1 // pred_check_branch
      %407 = sbr.rel (0) target = $region53
    $region52: #{gmvsae_forward.7} parent=1 // pred_region
      %408 = dma.done [#allocation3], 16
    $region53: #{gmvsae_forward.7} parent=1 // pred_fallthru
      _
    %409 = vsyncpa [#allocation3], 1

// kernel: gmvsae_forward.6
$region0: #{gmvsae_forward.6}
  #allocation0 [shape = 'u32[]', space=smem, size = 0x4, offset = 0x4, fixed_abs, tag = 'smem constant byte address 0x4 - core index']
  #allocation1 [shape = 'u32[144,128]{1,0:T(1,128)}', space=vmem, size = 0x12000, scoped, tag = 'internal scratch']
  %s0 = inlined_call_operand.vmem [shape: f32[8,2,96], index: 0, kind: input, shape index: {}]
  %s1 = inlined_call_operand.vmem [shape: f32[2,32], index: 1, kind: input, shape index: {}]
  %s2 = inlined_call_operand.vmem [shape: s32[2,1], index: 2, kind: input, shape index: {}]
  %s3 = inlined_call_operand.vmem [shape: f32[32,96], index: 3, kind: input, shape index: {}]
  %s4 = inlined_call_operand.vmem [shape: f32[1,32], index: 4, kind: input, shape index: {}]
  %s5 = inlined_call_operand.vmem [shape: f32[2,32], index: 5, kind: output, shape index: {}]
  %s6 = sld [smem:[#allocation0]]
  $region30: #{gmvsae_forward.6} parent=0
    _
  %s8 = ssub.s32 1, %s6
  %s9 = scalar_select 0, %s8, %s6
  // Predicated region
  $region2: #{gmvsae_forward.6} parent=0 // pred_check
    _
  $region3: #{gmvsae_forward.6} parent=0 // pred_check_branch
    %11 = sbr.rel (0) target = $region5
  $region4: #{gmvsae_forward.6} parent=0 // pred_region
    _
  $region5: #{gmvsae_forward.6} parent=0 // pred_fallthru
    _
  // Predicated region
  $region6: #{gmvsae_forward.6} parent=0 // pred_check
    _
  $region7: #{gmvsae_forward.6} parent=0 // pred_check_branch
    %13 = sbr.rel (0) target = $region9
  $region8: #{gmvsae_forward.6} parent=0 // pred_region
    _
  $region9: #{gmvsae_forward.6} parent=0 // pred_fallthru
    _
  // Predicated region
  $region10: #{gmvsae_forward.6} parent=0 // pred_check
    _
  $region11: #{gmvsae_forward.6} parent=0 // pred_check_branch
    %15 = sbr.rel (0) target = $region13
  $region12: #{gmvsae_forward.6} parent=0 // pred_region
    _
  $region13: #{gmvsae_forward.6} parent=0 // pred_fallthru
    _
  // Predicated region
  $region14: #{gmvsae_forward.6} parent=0 // pred_check
    _
  $region15: #{gmvsae_forward.6} parent=0 // pred_check_branch
    %17 = sbr.rel (0) target = $region17
  $region16: #{gmvsae_forward.6} parent=0 // pred_region
    _
  $region17: #{gmvsae_forward.6} parent=0 // pred_fallthru
    _
  // Predicated region
  $region18: #{gmvsae_forward.6} parent=0 // pred_check
    _
  $region19: #{gmvsae_forward.6} parent=0 // pred_check_branch
    %19 = sbr.rel (0) target = $region21
  $region20: #{gmvsae_forward.6} parent=0 // pred_region
    _
  $region21: #{gmvsae_forward.6} parent=0 // pred_fallthru
    _
  %v20 = vld [vmem:[%s3] sm:$0xff]
  %v21 = vld [vmem:[%s3 + $0x8] sm:$0xff]
  %v22 = vld [vmem:[%s3 + $0x10] sm:$0xff]
  %v23 = vld [vmem:[%s3 + $0x18] sm:$0xff]
  %v24 = vld [vmem:[%s4] sm:$0x1]
  %v25 = vld [vmem:[%s2] sm:$0x3]
  %v26 = vld [vmem:[%s1] sm:$0x3]
  %v27 = vld [vmem:[%s0] sm:$0x3]
  %vm28 = vcmask 261120
  %v30 = vsel %vm28, %v26, 0
  %32 = vmatprep.subr.mxu0 0.0
  %33 = vmatpush1.msra.mxu0 %v20
  %34 = vmatprep.subr.mxu0 0.0
  %35 = vmatpush1.msra.mxu0 %v21
  %36 = vmatprep.subr.mxu0 0.0
  %37 = vmatpush1.msra.mxu0 %v22
  %38 = vmatprep.subr.mxu0 0.0
  %39 = vmatpush1.msra.mxu0 %v23
  %40 = vmatprep.subr.mxu0 0.0
  %41 = vmatpush1.msra.mxu0 0.0
  %42 = vmatprep.subr.mxu0 0.0
  %43 = vmatpush1.msra.mxu0 0.0
  %44 = vmatprep.subr.mxu0 0.0
  %45 = vmatpush1.msra.mxu0 0.0
  %46 = vmatprep.subr.mxu0 0.0
  %47 = vmatpush1.msra.mxu0 0.0
  %48 = vmatprep.subr.mxu0 0.0
  %49 = vmatpush1.msra.mxu0 0.0
  %50 = vmatprep.subr.mxu0 0.0
  %51 = vmatpush1.msra.mxu0 0.0
  %52 = vmatprep.subr.mxu0 0.0
  %53 = vmatpush1.msra.mxu0 0.0
  %54 = vmatprep.subr.mxu0 0.0
  %55 = vmatpush1.msra.mxu0 0.0
  %56 = vmatprep.subr.mxu0 0.0
  %57 = vmatpush1.msra.mxu0 0.0
  %58 = vmatprep.subr.mxu0 0.0
  %59 = vmatpush1.msra.mxu0 0.0
  %60 = vmatprep.subr.mxu0 0.0
  %61 = vmatpush1.msra.mxu0 0.0
  %62 = vmatprep.subr.mxu0 0.0
  %63 = vmatpush1.msra.mxu0 0.0
  %64 = vmatprep.subr.mxu0 0.0
  %65 = vmatpush1.msra.mxu0 0.0
  %66 = vmatprep.subr.mxu0 0.0
  %67 = vmatpush1.msra.mxu0 0.0
  %68 = vmatprep.subr.mxu0 0.0
  %69 = vmatpush1.msra.mxu0 0.0
  %70 = vmatprep.subr.mxu0 0.0
  %71 = vmatpush1.msra.mxu0 0.0
  %72 = vmatprep.subr.mxu0 0.0
  %73 = vmatpush1.msra.mxu0 0.0
  %74 = vmatprep.subr.mxu0 0.0
  %75 = vmatpush1.msra.mxu0 0.0
  %76 = vmatprep.subr.mxu0 0.0
  %77 = vmatpush1.msra.mxu0 0.0
  %78 = vmatprep.subr.mxu0 0.0
  %79 = vmatpush1.msra.mxu0 0.0
  %80 = vmatprep.subr.mxu0 0.0
  %81 = vmatpush1.msra.mxu0 0.0
  %82 = vmatprep.subr.mxu0 0.0
  %83 = vmatpush1.msra.mxu0 0.0
  %84 = vmatprep.subr.mxu0 0.0
  %85 = vmatpush1.msra.mxu0 0.0
  %86 = vmatprep.subr.mxu0 0.0
  %87 = vmatpush1.msra.mxu0 0.0
  %88 = vmatprep.subr.mxu0 0.0
  %89 = vmatpush1.msra.mxu0 0.0
  %90 = vmatprep.subr.mxu0 0.0
  %91 = vmatpush1.msra.mxu0 0.0
  %92 = vmatprep.subr.mxu0 0.0
  %93 = vmatpush1.msra.mxu0 0.0
  %94 = vmatprep.subr.mxu0 0.0
  %95 = vmatpush1.msra.mxu0 0.0
  %96 = vmatprep.mubr.f32.mxu0 0.0
  %97 = vmatmul.mubr.f32.gmra.mrb[0].mxu0 %v30
  %v98 = vpop.f32.mrb[0].mxu0
  %v99 = vadd.f32 0.0, %v98
  %v100 = vpop.f32.mrb[0].mxu0
  %101 = vdwg.mxu0
  %v102 = vadd.f32 %v27, %v99
  %v103 = vxor.u32 %v102, 2147483648
  %v104 = vmul.f32 %v103, 1.442695
  %v105 = vpow.pop %v104
  %v106 = vadd.f32 %v105, 1.0
  %v107 = vrcp.pop %v106
  %v108 = vmul.f32 1.0, %v107
  %v110 = vlaneseq
  %v111 = vshrl.u32 %v110, 7
  %v112 = vsub.s32 0, %v111
  %v113 = vrot.slane %v24, %v112
  %114 = vrot.lane.b32.xlu0 %v113, 64
  %v115 = vpop.permute.xlu0 %114
  %v117 = vadd.f32 %v99, %v115
  %119 = vrot.lane.b32.xlu0 %v117, 64
  %v120 = vpop.permute.xlu0 %119
  %v122 = vmul.f32 %v108, %v120
  %124 = vrot.lane.b32.xlu0 %v122, 64
  %v125 = vpop.permute.xlu0 %124
  %v127 = vadd.f32 %v27, %v125
  %v128 = vtanh.pop %v127
  %v129 = vsub.f32 1.0, %v108
  %131 = vrot.lane.b32.xlu0 %v128, 96
  %v132 = vpop.permute.xlu0 %131
  %v134 = vmul.f32 %v129, %v132
  %135 = vrot.lane.b32.xlu0 %v26, 32
  %v136 = vpop.permute.xlu0 %135
  %v138 = vmul.f32 %v108, %v136
  %v139 = vadd.f32 %v134, %v138
  %vm140 = vcmp.gt.s32.totalorder %v25, 0
  %v141 = vsel %vm140, 1, 0
  %142 = vset.pattern.permute.xlu0 0
  %143 = vperm.xlu0 %142, %v141
  %v144 = vpop.permute.xlu0 %143
  %vm145 = vcmp.eq.s32.totalorder %v144, 1
  %v146 = vsel %vm145, %v139, %v136
  %s147 = scalar_lea.vmem %s0, 2
  %v148 = vld [vmem:[%s147] sm:$0x3]
  %150 = vrot.lane.b32.xlu0 %v146, 96
  %v151 = vpop.permute.xlu0 %150
  %v152 = vsel %vm28, %v151, 0
  %154 = vmatprep.subr.mxu0 0.0
  %155 = vmatpush1.msra.mxu0 %v20
  %156 = vmatprep.subr.mxu0 0.0
  %157 = vmatpush1.msra.mxu0 %v21
  %158 = vmatprep.subr.mxu0 0.0
  %159 = vmatpush1.msra.mxu0 %v22
  %160 = vmatprep.subr.mxu0 0.0
  %161 = vmatpush1.msra.mxu0 %v23
  %162 = vmatprep.subr.mxu0 0.0
  %163 = vmatpush1.msra.mxu0 0.0
  %164 = vmatprep.subr.mxu0 0.0
  %165 = vmatpush1.msra.mxu0 0.0
  %166 = vmatprep.subr.mxu0 0.0
  %167 = vmatpush1.msra.mxu0 0.0
  %168 = vmatprep.subr.mxu0 0.0
  %169 = vmatpush1.msra.mxu0 0.0
  %170 = vmatprep.subr.mxu0 0.0
  %171 = vmatpush1.msra.mxu0 0.0
  %172 = vmatprep.subr.mxu0 0.0
  %173 = vmatpush1.msra.mxu0 0.0
  %174 = vmatprep.subr.mxu0 0.0
  %175 = vmatpush1.msra.mxu0 0.0
  %176 = vmatprep.subr.mxu0 0.0
  %177 = vmatpush1.msra.mxu0 0.0
  %178 = vmatprep.subr.mxu0 0.0
  %179 = vmatpush1.msra.mxu0 0.0
  %180 = vmatprep.subr.mxu0 0.0
  %181 = vmatpush1.msra.mxu0 0.0
  %182 = vmatprep.subr.mxu0 0.0
  %183 = vmatpush1.msra.mxu0 0.0
  %184 = vmatprep.subr.mxu0 0.0
  %185 = vmatpush1.msra.mxu0 0.0
  %186 = vmatprep.subr.mxu0 0.0
  %187 = vmatpush1.msra.mxu0 0.0
  %188 = vmatprep.subr.mxu0 0.0
  %189 = vmatpush1.msra.mxu0 0.0
  %190 = vmatprep.subr.mxu0 0.0
  %191 = vmatpush1.msra.mxu0 0.0
  %192 = vmatprep.subr.mxu0 0.0
  %193 = vmatpush1.msra.mxu0 0.0
  %194 = vmatprep.subr.mxu0 0.0
  %195 = vmatpush1.msra.mxu0 0.0
  %196 = vmatprep.subr.mxu0 0.0
  %197 = vmatpush1.msra.mxu0 0.0
  %198 = vmatprep.subr.mxu0 0.0
  %199 = vmatpush1.msra.mxu0 0.0
  %200 = vmatprep.subr.mxu0 0.0
  %201 = vmatpush1.msra.mxu0 0.0
  %202 = vmatprep.subr.mxu0 0.0
  %203 = vmatpush1.msra.mxu0 0.0
  %204 = vmatprep.subr.mxu0 0.0
  %205 = vmatpush1.msra.mxu0 0.0
  %206 = vmatprep.subr.mxu0 0.0
  %207 = vmatpush1.msra.mxu0 0.0
  %208 = vmatprep.subr.mxu0 0.0
  %209 = vmatpush1.msra.mxu0 0.0
  %210 = vmatprep.subr.mxu0 0.0
  %211 = vmatpush1.msra.mxu0 0.0
  %212 = vmatprep.subr.mxu0 0.0
  %213 = vmatpush1.msra.mxu0 0.0
  %214 = vmatprep.subr.mxu0 0.0
  %215 = vmatpush1.msra.mxu0 0.0
  %216 = vmatprep.subr.mxu0 0.0
  %217 = vmatpush1.msra.mxu0 0.0
  %218 = vmatprep.mubr.f32.mxu0 0.0
  %219 = vmatmul.mubr.f32.gmra.mrb[0].mxu0 %v152
  %v220 = vpop.f32.mrb[0].mxu0
  %v221 = vadd.f32 0.0, %v220
  %v222 = vpop.f32.mrb[0].mxu0
  %223 = vdwg.mxu0
  %v224 = vadd.f32 %v148, %v221
  %v225 = vxor.u32 %v224, 2147483648
  %v226 = vmul.f32 %v225, 1.442695
  %v227 = vpow.pop %v226
  %v228 = vadd.f32 %v227, 1.0
  %v229 = vrcp.pop %v228
  %v230 = vmul.f32 1.0, %v229
  %v231 = vadd.f32 %v221, %v115
  %233 = vrot.lane.b32.xlu0 %v231, 64
  %v234 = vpop.permute.xlu0 %233
  %v236 = vmul.f32 %v230, %v234
  %238 = vrot.lane.b32.xlu0 %v236, 64
  %v239 = vpop.permute.xlu0 %238
  %v241 = vadd.f32 %v148, %v239
  %v242 = vtanh.pop %v241
  %v243 = vsub.f32 1.0, %v230
  %245 = vrot.lane.b32.xlu0 %v242, 96
  %v246 = vpop.permute.xlu0 %245
  %v248 = vmul.f32 %v243, %v246
  %v249 = vmul.f32 %v230, %v146
  %v250 = vadd.f32 %v248, %v249
  %vm251 = vcmp.gt.s32.totalorder %v25, 1
  %v252 = vsel %vm251, 1, 0
  %253 = vset.pattern.permute.xlu0 0
  %254 = vperm.xlu0 %253, %v252
  %v255 = vpop.permute.xlu0 %254
  %vm256 = vcmp.eq.s32.totalorder %v255, 1
  %v257 = vsel %vm256, %v250, %v146
  %s258 = scalar_lea.vmem %s0, 4
  %v259 = vld [vmem:[%s258] sm:$0x3]
  %261 = vrot.lane.b32.xlu0 %v257, 96
  %v262 = vpop.permute.xlu0 %261
  %v263 = vsel %vm28, %v262, 0
  %265 = vmatprep.subr.mxu0 0.0
  %266 = vmatpush1.msra.mxu0 %v20
  %267 = vmatprep.subr.mxu0 0.0
  %268 = vmatpush1.msra.mxu0 %v21
  %269 = vmatprep.subr.mxu0 0.0
  %270 = vmatpush1.msra.mxu0 %v22
  %271 = vmatprep.subr.mxu0 0.0
  %272 = vmatpush1.msra.mxu0 %v23
  %273 = vmatprep.subr.mxu0 0.0
  %274 = vmatpush1.msra.mxu0 0.0
  %275 = vmatprep.subr.mxu0 0.0
  %276 = vmatpush1.msra.mxu0 0.0
  %277 = vmatprep.subr.mxu0 0.0
  %278 = vmatpush1.msra.mxu0 0.0
  %279 = vmatprep.subr.mxu0 0.0
  %280 = vmatpush1.msra.mxu0 0.0
  %281 = vmatprep.subr.mxu0 0.0
  %282 = vmatpush1.msra.mxu0 0.0
  %283 = vmatprep.subr.mxu0 0.0
  %284 = vmatpush1.msra.mxu0 0.0
  %285 = vmatprep.subr.mxu0 0.0
  %286 = vmatpush1.msra.mxu0 0.0
  %287 = vmatprep.subr.mxu0 0.0
  %288 = vmatpush1.msra.mxu0 0.0
  %289 = vmatprep.subr.mxu0 0.0
  %290 = vmatpush1.msra.mxu0 0.0
  %291 = vmatprep.subr.mxu0 0.0
  %292 = vmatpush1.msra.mxu0 0.0
  %293 = vmatprep.subr.mxu0 0.0
  %294 = vmatpush1.msra.mxu0 0.0
  %295 = vmatprep.subr.mxu0 0.0
  %296 = vmatpush1.msra.mxu0 0.0
  %297 = vmatprep.subr.mxu0 0.0
  %298 = vmatpush1.msra.mxu0 0.0
  %299 = vmatprep.subr.mxu0 0.0
  %300 = vmatpush1.msra.mxu0 0.0
  %301 = vmatprep.subr.mxu0 0.0
  %302 = vmatpush1.msra.mxu0 0.0
  %303 = vmatprep.subr.mxu0 0.0
  %304 = vmatpush1.msra.mxu0 0.0
  %305 = vmatprep.subr.mxu0 0.0
  %306 = vmatpush1.msra.mxu0 0.0
  %307 = vmatprep.subr.mxu0 0.0
  %308 = vmatpush1.msra.mxu0 0.0
  %309 = vmatprep.subr.mxu0 0.0
  %310 = vmatpush1.msra.mxu0 0.0
  %311 = vmatprep.subr.mxu0 0.0
  %312 = vmatpush1.msra.mxu0 0.0
  %313 = vmatprep.subr.mxu0 0.0
  %314 = vmatpush1.msra.mxu0 0.0
  %315 = vmatprep.subr.mxu0 0.0
  %316 = vmatpush1.msra.mxu0 0.0
  %317 = vmatprep.subr.mxu0 0.0
  %318 = vmatpush1.msra.mxu0 0.0
  %319 = vmatprep.subr.mxu0 0.0
  %320 = vmatpush1.msra.mxu0 0.0
  %321 = vmatprep.subr.mxu0 0.0
  %322 = vmatpush1.msra.mxu0 0.0
  %323 = vmatprep.subr.mxu0 0.0
  %324 = vmatpush1.msra.mxu0 0.0
  %325 = vmatprep.subr.mxu0 0.0
  %326 = vmatpush1.msra.mxu0 0.0
  %327 = vmatprep.subr.mxu0 0.0
  %328 = vmatpush1.msra.mxu0 0.0
  %329 = vmatprep.mubr.f32.mxu0 0.0
  %330 = vmatmul.mubr.f32.gmra.mrb[0].mxu0 %v263
  %v331 = vpop.f32.mrb[0].mxu0
  %v332 = vadd.f32 0.0, %v331
  %v333 = vpop.f32.mrb[0].mxu0
  %334 = vdwg.mxu0
  %v335 = vadd.f32 %v259, %v332
  %v336 = vxor.u32 %v335, 2147483648
  %v337 = vmul.f32 %v336, 1.442695
  %v338 = vpow.pop %v337
  %v339 = vadd.f32 %v338, 1.0
  %v340 = vrcp.pop %v339
  %v341 = vmul.f32 1.0, %v340
  %v342 = vadd.f32 %v332, %v115
  %344 = vrot.lane.b32.xlu0 %v342, 64
  %v345 = vpop.permute.xlu0 %344
  %v347 = vmul.f32 %v341, %v345
  %349 = vrot.lane.b32.xlu0 %v347, 64
  %v350 = vpop.permute.xlu0 %349
  %v352 = vadd.f32 %v259, %v350
  %v353 = vtanh.pop %v352
  %v354 = vsub.f32 1.0, %v341
  %356 = vrot.lane.b32.xlu0 %v353, 96
  %v357 = vpop.permute.xlu0 %356
  %v359 = vmul.f32 %v354, %v357
  %v360 = vmul.f32 %v341, %v257
  %v361 = vadd.f32 %v359, %v360
  %vm362 = vcmp.gt.s32.totalorder %v25, 2
  %v363 = vsel %vm362, 1, 0
  %364 = vset.pattern.permute.xlu0 0
  %365 = vperm.xlu0 %364, %v363
  %v366 = vpop.permute.xlu0 %365
  %vm367 = vcmp.eq.s32.totalorder %v366, 1
  %v368 = vsel %vm367, %v361, %v257
  %s369 = scalar_lea.vmem %s0, 6
  %v370 = vld [vmem:[%s369] sm:$0x3]
  %372 = vrot.lane.b32.xlu0 %v368, 96
  %v373 = vpop.permute.xlu0 %372
  %v374 = vsel %vm28, %v373, 0
  %376 = vmatprep.subr.mxu0 0.0
  %377 = vmatpush1.msra.mxu0 %v20
  %378 = vmatprep.subr.mxu0 0.0
  %379 = vmatpush1.msra.mxu0 %v21
  %380 = vmatprep.subr.mxu0 0.0
  %381 = vmatpush1.msra.mxu0 %v22
  %382 = vmatprep.subr.mxu0 0.0
  %383 = vmatpush1.msra.mxu0 %v23
  %384 = vmatprep.subr.mxu0 0.0
  %385 = vmatpush1.msra.mxu0 0.0
  %386 = vmatprep.subr.mxu0 0.0
  %387 = vmatpush1.msra.mxu0 0.0
  %388 = vmatprep.subr.mxu0 0.0
  %389 = vmatpush1.msra.mxu0 0.0
  %390 = vmatprep.subr.mxu0 0.0
  %391 = vmatpush1.msra.mxu0 0.0
  %392 = vmatprep.subr.mxu0 0.0
  %393 = vmatpush1.msra.mxu0 0.0
  %394 = vmatprep.subr.mxu0 0.0
  %395 = vmatpush1.msra.mxu0 0.0
  %396 = vmatprep.subr.mxu0 0.0
  %397 = vmatpush1.msra.mxu0 0.0
  %398 = vmatprep.subr.mxu0 0.0
  %399 = vmatpush1.msra.mxu0 0.0
  %400 = vmatprep.subr.mxu0 0.0
  %401 = vmatpush1.msra.mxu0 0.0
  %402 = vmatprep.subr.mxu0 0.0
  %403 = vmatpush1.msra.mxu0 0.0
  %404 = vmatprep.subr.mxu0 0.0
  %405 = vmatpush1.msra.mxu0 0.0
  %406 = vmatprep.subr.mxu0 0.0
  %407 = vmatpush1.msra.mxu0 0.0
  %408 = vmatprep.subr.mxu0 0.0
  %409 = vmatpush1.msra.mxu0 0.0
  %410 = vmatprep.subr.mxu0 0.0
  %411 = vmatpush1.msra.mxu0 0.0
  %412 = vmatprep.subr.mxu0 0.0
  %413 = vmatpush1.msra.mxu0 0.0
  %414 = vmatprep.subr.mxu0 0.0
  %415 = vmatpush1.msra.mxu0 0.0
  %416 = vmatprep.subr.mxu0 0.0
  %417 = vmatpush1.msra.mxu0 0.0
  %418 = vmatprep.subr.mxu0 0.0
  %419 = vmatpush1.msra.mxu0 0.0
  %420 = vmatprep.subr.mxu0 0.0
  %421 = vmatpush1.msra.mxu0 0.0
  %422 = vmatprep.subr.mxu0 0.0
  %423 = vmatpush1.msra.mxu0 0.0
  %424 = vmatprep.subr.mxu0 0.0
  %425 = vmatpush1.msra.mxu0 0.0
  %426 = vmatprep.subr.mxu0 0.0
  %427 = vmatpush1.msra.mxu0 0.0
  %428 = vmatprep.subr.mxu0 0.0
  %429 = vmatpush1.msra.mxu0 0.0
  %430 = vmatprep.subr.mxu0 0.0
  %431 = vmatpush1.msra.mxu0 0.0
  %432 = vmatprep.subr.mxu0 0.0
  %433 = vmatpush1.msra.mxu0 0.0
  %434 = vmatprep.subr.mxu0 0.0
  %435 = vmatpush1.msra.mxu0 0.0
  %436 = vmatprep.subr.mxu0 0.0
  %437 = vmatpush1.msra.mxu0 0.0
  %438 = vmatprep.subr.mxu0 0.0
  %439 = vmatpush1.msra.mxu0 0.0
  %440 = vmatprep.mubr.f32.mxu0 0.0
  %441 = vmatmul.mubr.f32.gmra.mrb[0].mxu0 %v374
  %v442 = vpop.f32.mrb[0].mxu0
  %v443 = vadd.f32 0.0, %v442
  %v444 = vpop.f32.mrb[0].mxu0
  %445 = vdwg.mxu0
  %v446 = vadd.f32 %v370, %v443
  %v447 = vxor.u32 %v446, 2147483648
  %v448 = vmul.f32 %v447, 1.442695
  %v449 = vpow.pop %v448
  %v450 = vadd.f32 %v449, 1.0
  %v451 = vrcp.pop %v450
  %v452 = vmul.f32 1.0, %v451
  %v453 = vadd.f32 %v443, %v115
  %455 = vrot.lane.b32.xlu0 %v453, 64
  %v456 = vpop.permute.xlu0 %455
  %v458 = vmul.f32 %v452, %v456
  %460 = vrot.lane.b32.xlu0 %v458, 64
  %v461 = vpop.permute.xlu0 %460
  %v463 = vadd.f32 %v370, %v461
  %v464 = vtanh.pop %v463
  %v465 = vsub.f32 1.0, %v452
  %467 = vrot.lane.b32.xlu0 %v464, 96
  %v468 = vpop.permute.xlu0 %467
  %v470 = vmul.f32 %v465, %v468
  %v471 = vmul.f32 %v452, %v368
  %v472 = vadd.f32 %v470, %v471
  %vm473 = vcmp.gt.s32.totalorder %v25, 3
  %v474 = vsel %vm473, 1, 0
  %475 = vset.pattern.permute.xlu0 0
  %476 = vperm.xlu0 %475, %v474
  %v477 = vpop.permute.xlu0 %476
  %vm478 = vcmp.eq.s32.totalorder %v477, 1
  %v479 = vsel %vm478, %v472, %v368
  %s480 = scalar_lea.vmem %s0, 8
  %v481 = vld [vmem:[%s480] sm:$0x3]
  %483 = vrot.lane.b32.xlu0 %v479, 96
  %v484 = vpop.permute.xlu0 %483
  %v485 = vsel %vm28, %v484, 0
  %487 = vmatprep.subr.mxu0 0.0
  %488 = vmatpush1.msra.mxu0 %v20
  %489 = vmatprep.subr.mxu0 0.0
  %490 = vmatpush1.msra.mxu0 %v21
  %491 = vmatprep.subr.mxu0 0.0
  %492 = vmatpush1.msra.mxu0 %v22
  %493 = vmatprep.subr.mxu0 0.0
  %494 = vmatpush1.msra.mxu0 %v23
  %495 = vmatprep.subr.mxu0 0.0
  %496 = vmatpush1.msra.mxu0 0.0
  %497 = vmatprep.subr.mxu0 0.0
  %498 = vmatpush1.msra.mxu0 0.0
  %499 = vmatprep.subr.mxu0 0.0
  %500 = vmatpush1.msra.mxu0 0.0
  %501 = vmatprep.subr.mxu0 0.0
  %502 = vmatpush1.msra.mxu0 0.0
  %503 = vmatprep.subr.mxu0 0.0
  %504 = vmatpush1.msra.mxu0 0.0
  %505 = vmatprep.subr.mxu0 0.0
  %506 = vmatpush1.msra.mxu0 0.0
  %507 = vmatprep.subr.mxu0 0.0
  %508 = vmatpush1.msra.mxu0 0.0
  %509 = vmatprep.subr.mxu0 0.0
  %510 = vmatpush1.msra.mxu0 0.0
  %511 = vmatprep.subr.mxu0 0.0
  %512 = vmatpush1.msra.mxu0 0.0
  %513 = vmatprep.subr.mxu0 0.0
  %514 = vmatpush1.msra.mxu0 0.0
  %515 = vmatprep.subr.mxu0 0.0
  %516 = vmatpush1.msra.mxu0 0.0
  %517 = vmatprep.subr.mxu0 0.0
  %518 = vmatpush1.msra.mxu0 0.0
  %519 = vmatprep.subr.mxu0 0.0
  %520 = vmatpush1.msra.mxu0 0.0
  %521 = vmatprep.subr.mxu0 0.0
  %522 = vmatpush1.msra.mxu0 0.0
  %523 = vmatprep.subr.mxu0 0.0
  %524 = vmatpush1.msra.mxu0 0.0
  %525 = vmatprep.subr.mxu0 0.0
  %526 = vmatpush1.msra.mxu0 0.0
  %527 = vmatprep.subr.mxu0 0.0
  %528 = vmatpush1.msra.mxu0 0.0
  %529 = vmatprep.subr.mxu0 0.0
  %530 = vmatpush1.msra.mxu0 0.0
  %531 = vmatprep.subr.mxu0 0.0
  %532 = vmatpush1.msra.mxu0 0.0
  %533 = vmatprep.subr.mxu0 0.0
  %534 = vmatpush1.msra.mxu0 0.0
  %535 = vmatprep.subr.mxu0 0.0
  %536 = vmatpush1.msra.mxu0 0.0
  %537 = vmatprep.subr.mxu0 0.0
  %538 = vmatpush1.msra.mxu0 0.0
  %539 = vmatprep.subr.mxu0 0.0
  %540 = vmatpush1.msra.mxu0 0.0
  %541 = vmatprep.subr.mxu0 0.0
  %542 = vmatpush1.msra.mxu0 0.0
  %543 = vmatprep.subr.mxu0 0.0
  %544 = vmatpush1.msra.mxu0 0.0
  %545 = vmatprep.subr.mxu0 0.0
  %546 = vmatpush1.msra.mxu0 0.0
  %547 = vmatprep.subr.mxu0 0.0
  %548 = vmatpush1.msra.mxu0 0.0
  %549 = vmatprep.subr.mxu0 0.0
  %550 = vmatpush1.msra.mxu0 0.0
  %551 = vmatprep.mubr.f32.mxu0 0.0
  %552 = vmatmul.mubr.f32.gmra.mrb[0].mxu0 %v485
  %v553 = vpop.f32.mrb[0].mxu0
  %v554 = vadd.f32 0.0, %v553
  %v555 = vpop.f32.mrb[0].mxu0
  %556 = vdwg.mxu0
  %v557 = vadd.f32 %v481, %v554
  %v558 = vxor.u32 %v557, 2147483648
  %v559 = vmul.f32 %v558, 1.442695
  %v560 = vpow.pop %v559
  %v561 = vadd.f32 %v560, 1.0
  %v562 = vrcp.pop %v561
  %v563 = vmul.f32 1.0, %v562
  %v564 = vadd.f32 %v554, %v115
  %566 = vrot.lane.b32.xlu0 %v564, 64
  %v567 = vpop.permute.xlu0 %566
  %v569 = vmul.f32 %v563, %v567
  %571 = vrot.lane.b32.xlu0 %v569, 64
  %v572 = vpop.permute.xlu0 %571
  %v574 = vadd.f32 %v481, %v572
  %v575 = vtanh.pop %v574
  %v576 = vsub.f32 1.0, %v563
  %578 = vrot.lane.b32.xlu0 %v575, 96
  %v579 = vpop.permute.xlu0 %578
  %v581 = vmul.f32 %v576, %v579
  %v582 = vmul.f32 %v563, %v479
  %v583 = vadd.f32 %v581, %v582
  %vm584 = vcmp.gt.s32.totalorder %v25, 4
  %v585 = vsel %vm584, 1, 0
  %586 = vset.pattern.permute.xlu0 0
  %587 = vperm.xlu0 %586, %v585
  %v588 = vpop.permute.xlu0 %587
  %vm589 = vcmp.eq.s32.totalorder %v588, 1
  %v590 = vsel %vm589, %v583, %v479
  %s591 = scalar_lea.vmem %s0, 10
  %v592 = vld [vmem:[%s591] sm:$0x3]
  %594 = vrot.lane.b32.xlu0 %v590, 96
  %v595 = vpop.permute.xlu0 %594
  %v596 = vsel %vm28, %v595, 0
  %598 = vmatprep.subr.mxu0 0.0
  %599 = vmatpush1.msra.mxu0 %v20
  %600 = vmatprep.subr.mxu0 0.0
  %601 = vmatpush1.msra.mxu0 %v21
  %602 = vmatprep.subr.mxu0 0.0
  %603 = vmatpush1.msra.mxu0 %v22
  %604 = vmatprep.subr.mxu0 0.0
  %605 = vmatpush1.msra.mxu0 %v23
  %606 = vmatprep.subr.mxu0 0.0
  %607 = vmatpush1.msra.mxu0 0.0
  %608 = vmatprep.subr.mxu0 0.0
  %609 = vmatpush1.msra.mxu0 0.0
  %610 = vmatprep.subr.mxu0 0.0
  %611 = vmatpush1.msra.mxu0 0.0
  %612 = vmatprep.subr.mxu0 0.0
  %613 = vmatpush1.msra.mxu0 0.0
  %614 = vmatprep.subr.mxu0 0.0
  %615 = vmatpush1.msra.mxu0 0.0
  %616 = vmatprep.subr.mxu0 0.0
  %617 = vmatpush1.msra.mxu0 0.0
  %618 = vmatprep.subr.mxu0 0.0
  %619 = vmatpush1.msra.mxu0 0.0
  %620 = vmatprep.subr.mxu0 0.0
  %621 = vmatpush1.msra.mxu0 0.0
  %622 = vmatprep.subr.mxu0 0.0
  %623 = vmatpush1.msra.mxu0 0.0
  %624 = vmatprep.subr.mxu0 0.0
  %625 = vmatpush1.msra.mxu0 0.0
  %626 = vmatprep.subr.mxu0 0.0
  %627 = vmatpush1.msra.mxu0 0.0
  %628 = vmatprep.subr.mxu0 0.0
  %629 = vmatpush1.msra.mxu0 0.0
  %630 = vmatprep.subr.mxu0 0.0
  %631 = vmatpush1.msra.mxu0 0.0
  %632 = vmatprep.subr.mxu0 0.0
  %633 = vmatpush1.msra.mxu0 0.0
  %634 = vmatprep.subr.mxu0 0.0
  %635 = vmatpush1.msra.mxu0 0.0
  %636 = vmatprep.subr.mxu0 0.0
  %637 = vmatpush1.msra.mxu0 0.0
  %638 = vmatprep.subr.mxu0 0.0
  %639 = vmatpush1.msra.mxu0 0.0
  %640 = vmatprep.subr.mxu0 0.0
  %641 = vmatpush1.msra.mxu0 0.0
  %642 = vmatprep.subr.mxu0 0.0
  %643 = vmatpush1.msra.mxu0 0.0
  %644 = vmatprep.subr.mxu0 0.0
  %645 = vmatpush1.msra.mxu0 0.0
  %646 = vmatprep.subr.mxu0 0.0
  %647 = vmatpush1.msra.mxu0 0.0
  %648 = vmatprep.subr.mxu0 0.0
  %649 = vmatpush1.msra.mxu0 0.0
  %650 = vmatprep.subr.mxu0 0.0
  %651 = vmatpush1.msra.mxu0 0.0
  %652 = vmatprep.subr.mxu0 0.0
  %653 = vmatpush1.msra.mxu0 0.0
  %654 = vmatprep.subr.mxu0 0.0
  %655 = vmatpush1.msra.mxu0 0.0
  %656 = vmatprep.subr.mxu0 0.0
  %657 = vmatpush1.msra.mxu0 0.0
  %658 = vmatprep.subr.mxu0 0.0
  %659 = vmatpush1.msra.mxu0 0.0
  %660 = vmatprep.subr.mxu0 0.0
  %661 = vmatpush1.msra.mxu0 0.0
  %662 = vmatprep.mubr.f32.mxu0 0.0
  %663 = vmatmul.mubr.f32.gmra.mrb[0].mxu0 %v596
  %v664 = vpop.f32.mrb[0].mxu0
  %v665 = vadd.f32 0.0, %v664
  %v666 = vpop.f32.mrb[0].mxu0
  %667 = vdwg.mxu0
  %v668 = vadd.f32 %v592, %v665
  %v669 = vxor.u32 %v668, 2147483648
  %v670 = vmul.f32 %v669, 1.442695
  %v671 = vpow.pop %v670
  %v672 = vadd.f32 %v671, 1.0
  %v673 = vrcp.pop %v672
  %v674 = vmul.f32 1.0, %v673
  %v675 = vadd.f32 %v665, %v115
  %677 = vrot.lane.b32.xlu0 %v675, 64
  %v678 = vpop.permute.xlu0 %677
  %v680 = vmul.f32 %v674, %v678
  %682 = vrot.lane.b32.xlu0 %v680, 64
  %v683 = vpop.permute.xlu0 %682
  %v685 = vadd.f32 %v592, %v683
  %v686 = vtanh.pop %v685
  %v687 = vsub.f32 1.0, %v674
  %689 = vrot.lane.b32.xlu0 %v686, 96
  %v690 = vpop.permute.xlu0 %689
  %v692 = vmul.f32 %v687, %v690
  %v693 = vmul.f32 %v674, %v590
  %v694 = vadd.f32 %v692, %v693
  %vm695 = vcmp.gt.s32.totalorder %v25, 5
  %v696 = vsel %vm695, 1, 0
  %697 = vset.pattern.permute.xlu0 0
  %698 = vperm.xlu0 %697, %v696
  %v699 = vpop.permute.xlu0 %698
  %vm700 = vcmp.eq.s32.totalorder %v699, 1
  %v701 = vsel %vm700, %v694, %v590
  %s702 = scalar_lea.vmem %s0, 12
  %v703 = vld [vmem:[%s702] sm:$0x3]
  %705 = vrot.lane.b32.xlu0 %v701, 96
  %v706 = vpop.permute.xlu0 %705
  %v707 = vsel %vm28, %v706, 0
  %709 = vmatprep.subr.mxu0 0.0
  %710 = vmatpush1.msra.mxu0 %v20
  %711 = vmatprep.subr.mxu0 0.0
  %712 = vmatpush1.msra.mxu0 %v21
  %713 = vmatprep.subr.mxu0 0.0
  %714 = vmatpush1.msra.mxu0 %v22
  %715 = vmatprep.subr.mxu0 0.0
  %716 = vmatpush1.msra.mxu0 %v23
  %717 = vmatprep.subr.mxu0 0.0
  %718 = vmatpush1.msra.mxu0 0.0
  %719 = vmatprep.subr.mxu0 0.0
  %720 = vmatpush1.msra.mxu0 0.0
  %721 = vmatprep.subr.mxu0 0.0
  %722 = vmatpush1.msra.mxu0 0.0
  %723 = vmatprep.subr.mxu0 0.0
  %724 = vmatpush1.msra.mxu0 0.0
  %725 = vmatprep.subr.mxu0 0.0
  %726 = vmatpush1.msra.mxu0 0.0
  %727 = vmatprep.subr.mxu0 0.0
  %728 = vmatpush1.msra.mxu0 0.0
  %729 = vmatprep.subr.mxu0 0.0
  %730 = vmatpush1.msra.mxu0 0.0
  %731 = vmatprep.subr.mxu0 0.0
  %732 = vmatpush1.msra.mxu0 0.0
  %733 = vmatprep.subr.mxu0 0.0
  %734 = vmatpush1.msra.mxu0 0.0
  %735 = vmatprep.subr.mxu0 0.0
  %736 = vmatpush1.msra.mxu0 0.0
  %737 = vmatprep.subr.mxu0 0.0
  %738 = vmatpush1.msra.mxu0 0.0
  %739 = vmatprep.subr.mxu0 0.0
  %740 = vmatpush1.msra.mxu0 0.0
  %741 = vmatprep.subr.mxu0 0.0
  %742 = vmatpush1.msra.mxu0 0.0
  %743 = vmatprep.subr.mxu0 0.0
  %744 = vmatpush1.msra.mxu0 0.0
  %745 = vmatprep.subr.mxu0 0.0
  %746 = vmatpush1.msra.mxu0 0.0
  %747 = vmatprep.subr.mxu0 0.0
  %748 = vmatpush1.msra.mxu0 0.0
  %749 = vmatprep.subr.mxu0 0.0
  %750 = vmatpush1.msra.mxu0 0.0
  %751 = vmatprep.subr.mxu0 0.0
  %752 = vmatpush1.msra.mxu0 0.0
  %753 = vmatprep.subr.mxu0 0.0
  %754 = vmatpush1.msra.mxu0 0.0
  %755 = vmatprep.subr.mxu0 0.0
  %756 = vmatpush1.msra.mxu0 0.0
  %757 = vmatprep.subr.mxu0 0.0
  %758 = vmatpush1.msra.mxu0 0.0
  %759 = vmatprep.subr.mxu0 0.0
  %760 = vmatpush1.msra.mxu0 0.0
  %761 = vmatprep.subr.mxu0 0.0
  %762 = vmatpush1.msra.mxu0 0.0
  %763 = vmatprep.subr.mxu0 0.0
  %764 = vmatpush1.msra.mxu0 0.0
  %765 = vmatprep.subr.mxu0 0.0
  %766 = vmatpush1.msra.mxu0 0.0
  %767 = vmatprep.subr.mxu0 0.0
  %768 = vmatpush1.msra.mxu0 0.0
  %769 = vmatprep.subr.mxu0 0.0
  %770 = vmatpush1.msra.mxu0 0.0
  %771 = vmatprep.subr.mxu0 0.0
  %772 = vmatpush1.msra.mxu0 0.0
  %773 = vmatprep.mubr.f32.mxu0 0.0
  %774 = vmatmul.mubr.f32.gmra.mrb[0].mxu0 %v707
  %v775 = vpop.f32.mrb[0].mxu0
  %v776 = vadd.f32 0.0, %v775
  %v777 = vpop.f32.mrb[0].mxu0
  %778 = vdwg.mxu0
  %v779 = vadd.f32 %v703, %v776
  %v780 = vxor.u32 %v779, 2147483648
  %v781 = vmul.f32 %v780, 1.442695
  %v782 = vpow.pop %v781
  %v783 = vadd.f32 %v782, 1.0
  %v784 = vrcp.pop %v783
  %v785 = vmul.f32 1.0, %v784
  %v786 = vadd.f32 %v776, %v115
  %788 = vrot.lane.b32.xlu0 %v786, 64
  %v789 = vpop.permute.xlu0 %788
  %v791 = vmul.f32 %v785, %v789
  %793 = vrot.lane.b32.xlu0 %v791, 64
  %v794 = vpop.permute.xlu0 %793
  %v796 = vadd.f32 %v703, %v794
  %v797 = vtanh.pop %v796
  %v798 = vsub.f32 1.0, %v785
  %800 = vrot.lane.b32.xlu0 %v797, 96
  %v801 = vpop.permute.xlu0 %800
  %v803 = vmul.f32 %v798, %v801
  %v804 = vmul.f32 %v785, %v701
  %v805 = vadd.f32 %v803, %v804
  %vm806 = vcmp.gt.s32.totalorder %v25, 6
  %v807 = vsel %vm806, 1, 0
  %808 = vset.pattern.permute.xlu0 0
  %809 = vperm.xlu0 %808, %v807
  %v810 = vpop.permute.xlu0 %809
  %vm811 = vcmp.eq.s32.totalorder %v810, 1
  %v812 = vsel %vm811, %v805, %v701
  %s813 = scalar_lea.vmem %s0, 14
  %v814 = vld [vmem:[%s813] sm:$0x3]
  %816 = vrot.lane.b32.xlu0 %v812, 96
  %v817 = vpop.permute.xlu0 %816
  %v818 = vsel %vm28, %v817, 0
  %820 = vmatprep.subr.mxu0 0.0
  %821 = vmatpush1.msra.mxu0 %v20
  %822 = vmatprep.subr.mxu0 0.0
  %823 = vmatpush1.msra.mxu0 %v21
  %824 = vmatprep.subr.mxu0 0.0
  %825 = vmatpush1.msra.mxu0 %v22
  %826 = vmatprep.subr.mxu0 0.0
  %827 = vmatpush1.msra.mxu0 %v23
  %828 = vmatprep.subr.mxu0 0.0
  %829 = vmatpush1.msra.mxu0 0.0
  %830 = vmatprep.subr.mxu0 0.0
  %831 = vmatpush1.msra.mxu0 0.0
  %832 = vmatprep.subr.mxu0 0.0
  %833 = vmatpush1.msra.mxu0 0.0
  %834 = vmatprep.subr.mxu0 0.0
  %835 = vmatpush1.msra.mxu0 0.0
  %836 = vmatprep.subr.mxu0 0.0
  %837 = vmatpush1.msra.mxu0 0.0
  %838 = vmatprep.subr.mxu0 0.0
  %839 = vmatpush1.msra.mxu0 0.0
  %840 = vmatprep.subr.mxu0 0.0
  %841 = vmatpush1.msra.mxu0 0.0
  %842 = vmatprep.subr.mxu0 0.0
  %843 = vmatpush1.msra.mxu0 0.0
  %844 = vmatprep.subr.mxu0 0.0
  %845 = vmatpush1.msra.mxu0 0.0
  %846 = vmatprep.subr.mxu0 0.0
  %847 = vmatpush1.msra.mxu0 0.0
  %848 = vmatprep.subr.mxu0 0.0
  %849 = vmatpush1.msra.mxu0 0.0
  %850 = vmatprep.subr.mxu0 0.0
  %851 = vmatpush1.msra.mxu0 0.0
  %852 = vmatprep.subr.mxu0 0.0
  %853 = vmatpush1.msra.mxu0 0.0
  %854 = vmatprep.subr.mxu0 0.0
  %855 = vmatpush1.msra.mxu0 0.0
  %856 = vmatprep.subr.mxu0 0.0
  %857 = vmatpush1.msra.mxu0 0.0
  %858 = vmatprep.subr.mxu0 0.0
  %859 = vmatpush1.msra.mxu0 0.0
  %860 = vmatprep.subr.mxu0 0.0
  %861 = vmatpush1.msra.mxu0 0.0
  %862 = vmatprep.subr.mxu0 0.0
  %863 = vmatpush1.msra.mxu0 0.0
  %864 = vmatprep.subr.mxu0 0.0
  %865 = vmatpush1.msra.mxu0 0.0
  %866 = vmatprep.subr.mxu0 0.0
  %867 = vmatpush1.msra.mxu0 0.0
  %868 = vmatprep.subr.mxu0 0.0
  %869 = vmatpush1.msra.mxu0 0.0
  %870 = vmatprep.subr.mxu0 0.0
  %871 = vmatpush1.msra.mxu0 0.0
  %872 = vmatprep.subr.mxu0 0.0
  %873 = vmatpush1.msra.mxu0 0.0
  %874 = vmatprep.subr.mxu0 0.0
  %875 = vmatpush1.msra.mxu0 0.0
  %876 = vmatprep.subr.mxu0 0.0
  %877 = vmatpush1.msra.mxu0 0.0
  %878 = vmatprep.subr.mxu0 0.0
  %879 = vmatpush1.msra.mxu0 0.0
  %880 = vmatprep.subr.mxu0 0.0
  %881 = vmatpush1.msra.mxu0 0.0
  %882 = vmatprep.subr.mxu0 0.0
  %883 = vmatpush1.msra.mxu0 0.0
  %884 = vmatprep.mubr.f32.mxu0 0.0
  %885 = vmatmul.mubr.f32.gmra.mrb[0].mxu0 %v818
  %v886 = vpop.f32.mrb[0].mxu0
  %v887 = vadd.f32 0.0, %v886
  %v888 = vpop.f32.mrb[0].mxu0
  %889 = vdwg.mxu0
  %v890 = vadd.f32 %v814, %v887
  %v891 = vxor.u32 %v890, 2147483648
  %v892 = vmul.f32 %v891, 1.442695
  %v893 = vpow.pop %v892
  %v894 = vadd.f32 %v893, 1.0
  %v895 = vrcp.pop %v894
  %v896 = vmul.f32 1.0, %v895
  %v897 = vadd.f32 %v887, %v115
  %899 = vrot.lane.b32.xlu0 %v897, 64
  %v900 = vpop.permute.xlu0 %899
  %v902 = vmul.f32 %v896, %v900
  %904 = vrot.lane.b32.xlu0 %v902, 64
  %v905 = vpop.permute.xlu0 %904
  %v907 = vadd.f32 %v814, %v905
  %v908 = vtanh.pop %v907
  %v909 = vsub.f32 1.0, %v896
  %911 = vrot.lane.b32.xlu0 %v908, 96
  %v912 = vpop.permute.xlu0 %911
  %v914 = vmul.f32 %v909, %v912
  %v915 = vmul.f32 %v896, %v812
  %v916 = vadd.f32 %v914, %v915
  %vm917 = vcmp.gt.s32.totalorder %v25, 7
  %v918 = vsel %vm917, 1, 0
  %919 = vset.pattern.permute.xlu0 0
  %920 = vperm.xlu0 %919, %v918
  %v921 = vpop.permute.xlu0 %920
  %vm922 = vcmp.eq.s32.totalorder %v921, 1
  %v923 = vsel %vm922, %v916, %v812
  %925 = vrot.lane.b32.xlu0 %v923, 96
  %v926 = vpop.permute.xlu0 %925
  %vm928 = vcmask 254976
  %929 = vst.msk [vmem:[%s5] sm:$0x3] %vm928, %v926
  // Predicated region
  $region22: #{gmvsae_forward.6} parent=0 // pred_check
    _
  $region23: #{gmvsae_forward.6} parent=0 // pred_check_branch
    %931 = sbr.rel (0) target = $region25
  $region24: #{gmvsae_forward.6} parent=0 // pred_region
    _
  $region25: #{gmvsae_forward.6} parent=0 // pred_fallthru
    _
  // Predicated region
  $region26: #{gmvsae_forward.6} parent=0 // pred_check
    _
  $region27: #{gmvsae_forward.6} parent=0 // pred_check_branch
    %933 = sbr.rel (0) target = $region29
  $region28: #{gmvsae_forward.6} parent=0 // pred_region
    _
  $region29: #{gmvsae_forward.6} parent=0 // pred_fallthru
    _

// kernel: gmvsae_forward.9
$region0: #{gmvsae_forward.9}
  #allocation0 [shape = 'u32[]', space=smem, size = 0x4, offset = 0x4, fixed_abs, tag = 'smem constant byte address 0x4 - core index']
  #allocation1 [shape = 'u32[144,128]{1,0:T(1,128)}', space=vmem, size = 0x12000, scoped, tag = 'internal scratch']
  %s0 = inlined_call_operand.vmem [shape: f32[8,2,96], index: 0, kind: input, shape index: {}]
  %s1 = inlined_call_operand.vmem [shape: f32[2,32], index: 1, kind: input, shape index: {}]
  %s2 = inlined_call_operand.vmem [shape: s32[2,1], index: 2, kind: input, shape index: {}]
  %s3 = inlined_call_operand.vmem [shape: f32[32,96], index: 3, kind: input, shape index: {}]
  %s4 = inlined_call_operand.vmem [shape: f32[1,32], index: 4, kind: input, shape index: {}]
  %s5 = inlined_call_operand.vmem [shape: f32[1,32], index: 5, kind: input, shape index: {}]
  %s6 = inlined_call_operand.vmem [shape: f32[1,32], index: 6, kind: input, shape index: {}]
  %s7 = inlined_call_operand.vmem [shape: f32[32,16], index: 7, kind: input, shape index: {}]
  %s8 = inlined_call_operand.vmem [shape: f32[1,16], index: 8, kind: input, shape index: {}]
  %s9 = inlined_call_operand.vmem [shape: s32[8,2,1], index: 9, kind: input, shape index: {}]
  %s10 = inlined_call_operand.vmem [shape: f32[2,1], index: 10, kind: output, shape index: {}]
  %s11 = sld [smem:[#allocation0]]
  $region50: #{gmvsae_forward.9} parent=0
    _
  %s13 = ssub.s32 1, %s11
  %s14 = scalar_select 0, %s13, %s11
  // Predicated region
  $region2: #{gmvsae_forward.9} parent=0 // pred_check
    _
  $region3: #{gmvsae_forward.9} parent=0 // pred_check_branch
    %16 = sbr.rel (0) target = $region5
  $region4: #{gmvsae_forward.9} parent=0 // pred_region
    _
  $region5: #{gmvsae_forward.9} parent=0 // pred_fallthru
    _
  // Predicated region
  $region6: #{gmvsae_forward.9} parent=0 // pred_check
    _
  $region7: #{gmvsae_forward.9} parent=0 // pred_check_branch
    %18 = sbr.rel (0) target = $region9
  $region8: #{gmvsae_forward.9} parent=0 // pred_region
    _
  $region9: #{gmvsae_forward.9} parent=0 // pred_fallthru
    _
  // Predicated region
  $region10: #{gmvsae_forward.9} parent=0 // pred_check
    _
  $region11: #{gmvsae_forward.9} parent=0 // pred_check_branch
    %20 = sbr.rel (0) target = $region13
  $region12: #{gmvsae_forward.9} parent=0 // pred_region
    _
  $region13: #{gmvsae_forward.9} parent=0 // pred_fallthru
    _
  // Predicated region
  $region14: #{gmvsae_forward.9} parent=0 // pred_check
    _
  $region15: #{gmvsae_forward.9} parent=0 // pred_check_branch
    %22 = sbr.rel (0) target = $region17
  $region16: #{gmvsae_forward.9} parent=0 // pred_region
    _
  $region17: #{gmvsae_forward.9} parent=0 // pred_fallthru
    _
  // Predicated region
  $region18: #{gmvsae_forward.9} parent=0 // pred_check
    _
  $region19: #{gmvsae_forward.9} parent=0 // pred_check_branch
    %24 = sbr.rel (0) target = $region21
  $region20: #{gmvsae_forward.9} parent=0 // pred_region
    _
  $region21: #{gmvsae_forward.9} parent=0 // pred_fallthru
    _
  // Predicated region
  $region22: #{gmvsae_forward.9} parent=0 // pred_check
    _
  $region23: #{gmvsae_forward.9} parent=0 // pred_check_branch
    %26 = sbr.rel (0) target = $region25
  $region24: #{gmvsae_forward.9} parent=0 // pred_region
    _
  $region25: #{gmvsae_forward.9} parent=0 // pred_fallthru
    _
  // Predicated region
  $region26: #{gmvsae_forward.9} parent=0 // pred_check
    _
  $region27: #{gmvsae_forward.9} parent=0 // pred_check_branch
    %28 = sbr.rel (0) target = $region29
  $region28: #{gmvsae_forward.9} parent=0 // pred_region
    _
  $region29: #{gmvsae_forward.9} parent=0 // pred_fallthru
    _
  // Predicated region
  $region30: #{gmvsae_forward.9} parent=0 // pred_check
    _
  $region31: #{gmvsae_forward.9} parent=0 // pred_check_branch
    %30 = sbr.rel (0) target = $region33
  $region32: #{gmvsae_forward.9} parent=0 // pred_region
    _
  $region33: #{gmvsae_forward.9} parent=0 // pred_fallthru
    _
  // Predicated region
  $region34: #{gmvsae_forward.9} parent=0 // pred_check
    _
  $region35: #{gmvsae_forward.9} parent=0 // pred_check_branch
    %32 = sbr.rel (0) target = $region37
  $region36: #{gmvsae_forward.9} parent=0 // pred_region
    _
  $region37: #{gmvsae_forward.9} parent=0 // pred_fallthru
    _
  // Predicated region
  $region38: #{gmvsae_forward.9} parent=0 // pred_check
    _
  $region39: #{gmvsae_forward.9} parent=0 // pred_check_branch
    %34 = sbr.rel (0) target = $region41
  $region40: #{gmvsae_forward.9} parent=0 // pred_region
    _
  $region41: #{gmvsae_forward.9} parent=0 // pred_fallthru
    _
  %v35 = vld [vmem:[%s3] sm:$0xff]
  %v36 = vld [vmem:[%s3 + $0x8] sm:$0xff]
  %v37 = vld [vmem:[%s3 + $0x10] sm:$0xff]
  %v38 = vld [vmem:[%s3 + $0x18] sm:$0xff]
  %v39 = vld [vmem:[%s4] sm:$0x1]
  %v40 = vld [vmem:[%s5] sm:$0x1]
  %v41 = vld [vmem:[%s6] sm:$0x1]
  %v42 = vld [vmem:[%s7] sm:$0xff]
  %v43 = vld [vmem:[%s7 + $0x8] sm:$0xff]
  %v44 = vld [vmem:[%s7 + $0x10] sm:$0xff]
  %v45 = vld [vmem:[%s7 + $0x18] sm:$0xff]
  %v46 = vld [vmem:[%s8] sm:$0x1]
  %v47 = vld [vmem:[%s2] sm:$0x3]
  %v48 = vlaneseq
  %v49 = vand.u32 %v48, 127
  %v50 = vld [vmem:[%s1] sm:$0x3]
  %v51 = vld [vmem:[%s0] sm:$0x3]
  %vm52 = vcmask 261120
  %v54 = vsel %vm52, %v50, 0
  %56 = vmatprep.subr.mxu0 0.0
  %57 = vmatpush1.msra.mxu0 %v35
  %58 = vmatprep.subr.mxu0 0.0
  %59 = vmatpush1.msra.mxu0 %v36
  %60 = vmatprep.subr.mxu0 0.0
  %61 = vmatpush1.msra.mxu0 %v37
  %62 = vmatprep.subr.mxu0 0.0
  %63 = vmatpush1.msra.mxu0 %v38
  %64 = vmatprep.subr.mxu0 0.0
  %65 = vmatpush1.msra.mxu0 0.0
  %66 = vmatprep.subr.mxu0 0.0
  %67 = vmatpush1.msra.mxu0 0.0
  %68 = vmatprep.subr.mxu0 0.0
  %69 = vmatpush1.msra.mxu0 0.0
  %70 = vmatprep.subr.mxu0 0.0
  %71 = vmatpush1.msra.mxu0 0.0
  %72 = vmatprep.subr.mxu0 0.0
  %73 = vmatpush1.msra.mxu0 0.0
  %74 = vmatprep.subr.mxu0 0.0
  %75 = vmatpush1.msra.mxu0 0.0
  %76 = vmatprep.subr.mxu0 0.0
  %77 = vmatpush1.msra.mxu0 0.0
  %78 = vmatprep.subr.mxu0 0.0
  %79 = vmatpush1.msra.mxu0 0.0
  %80 = vmatprep.subr.mxu0 0.0
  %81 = vmatpush1.msra.mxu0 0.0
  %82 = vmatprep.subr.mxu0 0.0
  %83 = vmatpush1.msra.mxu0 0.0
  %84 = vmatprep.subr.mxu0 0.0
  %85 = vmatpush1.msra.mxu0 0.0
  %86 = vmatprep.subr.mxu0 0.0
  %87 = vmatpush1.msra.mxu0 0.0
  %88 = vmatprep.subr.mxu0 0.0
  %89 = vmatpush1.msra.mxu0 0.0
  %90 = vmatprep.subr.mxu0 0.0
  %91 = vmatpush1.msra.mxu0 0.0
  %92 = vmatprep.subr.mxu0 0.0
  %93 = vmatpush1.msra.mxu0 0.0
  %94 = vmatprep.subr.mxu0 0.0
  %95 = vmatpush1.msra.mxu0 0.0
  %96 = vmatprep.subr.mxu0 0.0
  %97 = vmatpush1.msra.mxu0 0.0
  %98 = vmatprep.subr.mxu0 0.0
  %99 = vmatpush1.msra.mxu0 0.0
  %100 = vmatprep.subr.mxu0 0.0
  %101 = vmatpush1.msra.mxu0 0.0
  %102 = vmatprep.subr.mxu0 0.0
  %103 = vmatpush1.msra.mxu0 0.0
  %104 = vmatprep.subr.mxu0 0.0
  %105 = vmatpush1.msra.mxu0 0.0
  %106 = vmatprep.subr.mxu0 0.0
  %107 = vmatpush1.msra.mxu0 0.0
  %108 = vmatprep.subr.mxu0 0.0
  %109 = vmatpush1.msra.mxu0 0.0
  %110 = vmatprep.subr.mxu0 0.0
  %111 = vmatpush1.msra.mxu0 0.0
  %112 = vmatprep.subr.mxu0 0.0
  %113 = vmatpush1.msra.mxu0 0.0
  %114 = vmatprep.subr.mxu0 0.0
  %115 = vmatpush1.msra.mxu0 0.0
  %116 = vmatprep.subr.mxu0 0.0
  %117 = vmatpush1.msra.mxu0 0.0
  %118 = vmatprep.subr.mxu0 0.0
  %119 = vmatpush1.msra.mxu0 0.0
  %120 = vmatprep.mubr.f32.mxu0 0.0
  %121 = vmatmul.mubr.f32.gmra.mrb[0].mxu0 %v54
  %v122 = vpop.f32.mrb[0].mxu0
  %v123 = vadd.f32 0.0, %v122
  %v124 = vpop.f32.mrb[0].mxu0
  %125 = vdwg.mxu0
  %v126 = vadd.f32 %v51, %v123
  %v127 = vxor.u32 %v126, 2147483648
  %v128 = vmul.f32 %v127, 1.442695
  %v129 = vpow.pop %v128
  %v130 = vadd.f32 %v129, 1.0
  %v131 = vrcp.pop %v130
  %v132 = vmul.f32 1.0, %v131
  %v134 = vlaneseq
  %v135 = vshrl.u32 %v134, 7
  %v136 = vsub.s32 0, %v135
  %v137 = vrot.slane %v39, %v136
  %138 = vrot.lane.b32.xlu0 %v137, 64
  %v139 = vpop.permute.xlu0 %138
  %v141 = vadd.f32 %v123, %v139
  %143 = vrot.lane.b32.xlu0 %v141, 64
  %v144 = vpop.permute.xlu0 %143
  %v146 = vmul.f32 %v132, %v144
  %148 = vrot.lane.b32.xlu0 %v146, 64
  %v149 = vpop.permute.xlu0 %148
  %v151 = vadd.f32 %v51, %v149
  %v152 = vtanh.pop %v151
  %v153 = vsub.f32 1.0, %v132
  %155 = vrot.lane.b32.xlu0 %v152, 96
  %v156 = vpop.permute.xlu0 %155
  %v158 = vmul.f32 %v153, %v156
  %159 = vrot.lane.b32.xlu0 %v50, 32
  %v160 = vpop.permute.xlu0 %159
  %v162 = vmul.f32 %v132, %v160
  %v163 = vadd.f32 %v158, %v162
  %vm164 = vcmp.gt.s32.totalorder %v47, 0
  %v165 = vsel %vm164, 1, 0
  %166 = vset.pattern.permute.xlu0 0
  %167 = vperm.xlu0 %166, %v165
  %v168 = vpop.permute.xlu0 %167
  %vm169 = vcmp.eq.s32.totalorder %v168, 1
  %v170 = vsel %vm169, %v163, %v160
  %v171 = vsel %vm169, %v163, 0.0
  %173 = vrot.lane.b32.xlu0 %v171, 96
  %v174 = vpop.permute.xlu0 %173
  %vm176 = vcmask 254976
  %v177 = vsel %vm176, %v174, 0.0
  %178 = vadd.xlane.f32.xlu0 %v177
  %v179 = vpop.xlane.xlu0 %178
  %v180 = vrcp.pop 32.0
  %v181 = vmul.f32 %v179, %v180
  %v182 = vsub.f32 %v171, %v181
  %v183 = vmul.f32 %v182, %v182
  %185 = vrot.lane.b32.xlu0 %v183, 96
  %v186 = vpop.permute.xlu0 %185
  %v188 = vsel %vm176, %v186, 0.0
  %189 = vadd.xlane.f32.xlu0 %v188
  %v190 = vpop.xlane.xlu0 %189
  %v191 = vmul.f32 %v190, %v180
  %v192 = vadd.f32 %v191, 1e-05
  %v193 = vrsqrt.pop %v192
  %v194 = vmul.f32 %v182, %v193
  %v196 = vlaneseq
  %v197 = vshrl.u32 %v196, 7
  %v198 = vsub.s32 0, %v197
  %v199 = vrot.slane %v40, %v198
  %200 = vrot.lane.b32.xlu0 %v199, 32
  %v201 = vpop.permute.xlu0 %200
  %v203 = vmul.f32 %v194, %v201
  %v205 = vlaneseq
  %v206 = vshrl.u32 %v205, 7
  %v207 = vsub.s32 0, %v206
  %v208 = vrot.slane %v41, %v207
  %209 = vrot.lane.b32.xlu0 %v208, 32
  %v210 = vpop.permute.xlu0 %209
  %v212 = vadd.f32 %v203, %v210
  %v214 = vlaneseq
  %v215 = vshrl.u32 %v214, 7
  %v216 = vsub.s32 0, %v215
  %v217 = vrot.slane %v46, %v216
  %220 = vrot.lane.b32.xlu0 %v212, 96
  %v221 = vpop.permute.xlu0 %220
  %v222 = vsel %vm52, %v221, 0
  %224 = vmatprep.subr.mxu0 0.0
  %225 = vmatpush1.msra.mxu0 %v42
  %226 = vmatprep.subr.mxu0 0.0
  %227 = vmatpush1.msra.mxu0 %v43
  %228 = vmatprep.subr.mxu0 0.0
  %229 = vmatpush1.msra.mxu0 %v44
  %230 = vmatprep.subr.mxu0 0.0
  %231 = vmatpush1.msra.mxu0 %v45
  %232 = vmatprep.subr.mxu0 0.0
  %233 = vmatpush1.msra.mxu0 0.0
  %234 = vmatprep.subr.mxu0 0.0
  %235 = vmatpush1.msra.mxu0 0.0
  %236 = vmatprep.subr.mxu0 0.0
  %237 = vmatpush1.msra.mxu0 0.0
  %238 = vmatprep.subr.mxu0 0.0
  %239 = vmatpush1.msra.mxu0 0.0
  %240 = vmatprep.subr.mxu0 0.0
  %241 = vmatpush1.msra.mxu0 0.0
  %242 = vmatprep.subr.mxu0 0.0
  %243 = vmatpush1.msra.mxu0 0.0
  %244 = vmatprep.subr.mxu0 0.0
  %245 = vmatpush1.msra.mxu0 0.0
  %246 = vmatprep.subr.mxu0 0.0
  %247 = vmatpush1.msra.mxu0 0.0
  %248 = vmatprep.subr.mxu0 0.0
  %249 = vmatpush1.msra.mxu0 0.0
  %250 = vmatprep.subr.mxu0 0.0
  %251 = vmatpush1.msra.mxu0 0.0
  %252 = vmatprep.subr.mxu0 0.0
  %253 = vmatpush1.msra.mxu0 0.0
  %254 = vmatprep.subr.mxu0 0.0
  %255 = vmatpush1.msra.mxu0 0.0
  %256 = vmatprep.subr.mxu0 0.0
  %257 = vmatpush1.msra.mxu0 0.0
  %258 = vmatprep.subr.mxu0 0.0
  %259 = vmatpush1.msra.mxu0 0.0
  %260 = vmatprep.subr.mxu0 0.0
  %261 = vmatpush1.msra.mxu0 0.0
  %262 = vmatprep.subr.mxu0 0.0
  %263 = vmatpush1.msra.mxu0 0.0
  %264 = vmatprep.subr.mxu0 0.0
  %265 = vmatpush1.msra.mxu0 0.0
  %266 = vmatprep.subr.mxu0 0.0
  %267 = vmatpush1.msra.mxu0 0.0
  %268 = vmatprep.subr.mxu0 0.0
  %269 = vmatpush1.msra.mxu0 0.0
  %270 = vmatprep.subr.mxu0 0.0
  %271 = vmatpush1.msra.mxu0 0.0
  %272 = vmatprep.subr.mxu0 0.0
  %273 = vmatpush1.msra.mxu0 0.0
  %274 = vmatprep.subr.mxu0 0.0
  %275 = vmatpush1.msra.mxu0 0.0
  %276 = vmatprep.subr.mxu0 0.0
  %277 = vmatpush1.msra.mxu0 0.0
  %278 = vmatprep.subr.mxu0 0.0
  %279 = vmatpush1.msra.mxu0 0.0
  %280 = vmatprep.subr.mxu0 0.0
  %281 = vmatpush1.msra.mxu0 0.0
  %282 = vmatprep.subr.mxu0 0.0
  %283 = vmatpush1.msra.mxu0 0.0
  %284 = vmatprep.subr.mxu0 0.0
  %285 = vmatpush1.msra.mxu0 0.0
  %286 = vmatprep.subr.mxu0 0.0
  %287 = vmatpush1.msra.mxu0 0.0
  %288 = vmatprep.mubr.f32.mxu0 0.0
  %289 = vmatmul.mubr.f32.gmra.mrb[0].mxu0 %v222
  %v290 = vpop.f32.mrb[0].mxu0
  %v291 = vadd.f32 %v217, %v290
  %v292 = vpop.f32.mrb[0].mxu0
  %293 = vdwg.mxu0
  %vm294 = vcmask 123904
  %v295 = vsel %vm294, %v291, -inf
  %296 = vmax.xlane.f32.xlu0 %v295
  %v297 = vpop.xlane.xlu0 %296
  %v298 = vsub.f32 %v291, %v297
  %v299 = vmul.f32 %v298, 1.442695
  %v300 = vpow.pop %v299
  %v301 = vsel %vm294, %v300, 0.0
  %302 = vadd.xlane.f32.xlu0 %v301
  %v303 = vpop.xlane.xlu0 %302
  %v304 = vlog2.pop %v303
  %v305 = vmul.f32 %v304, 0.6931472
  %v306 = vadd.f32 %v297, %v305
  %v307 = vld [vmem:[%s9] sm:$0x3]
  %308 = vset.pattern.permute.xlu0 0
  %309 = vperm.xlu0 %308, %v307
  %v310 = vpop.permute.xlu0 %309
  %vm311 = vcmp.eq.s32.totalorder %v49, %v310
  %v312 = vsel %vm311, 1, 0
  %v313 = vcvt.s32.f32 %v312
  %v314 = vmul.f32 %v291, %v313
  %v315 = vsel %vm294, %v314, 0.0
  %316 = vadd.xlane.f32.xlu0 %v315
  %v317 = vpop.xlane.xlu0 %316
  %vm318 = vcmp.ge.s32.totalorder %v307, 0
  %v319 = vsel %vm318, 1, 0
  %v320 = vcvt.s32.f32 %v319
  %v321 = vsub.f32 %v306, %v317
  %v322 = vmul.f32 %v321, %v320
  %v323 = vadd.f32 %v322, 0.0
  %s324 = scalar_lea.vmem %s0, 2
  %v325 = vld [vmem:[%s324] sm:$0x3]
  %327 = vrot.lane.b32.xlu0 %v170, 96
  %v328 = vpop.permute.xlu0 %327
  %v329 = vsel %vm52, %v328, 0
  %331 = vmatprep.subr.mxu0 0.0
  %332 = vmatpush1.msra.mxu0 %v35
  %333 = vmatprep.subr.mxu0 0.0
  %334 = vmatpush1.msra.mxu0 %v36
  %335 = vmatprep.subr.mxu0 0.0
  %336 = vmatpush1.msra.mxu0 %v37
  %337 = vmatprep.subr.mxu0 0.0
  %338 = vmatpush1.msra.mxu0 %v38
  %339 = vmatprep.subr.mxu0 0.0
  %340 = vmatpush1.msra.mxu0 0.0
  %341 = vmatprep.subr.mxu0 0.0
  %342 = vmatpush1.msra.mxu0 0.0
  %343 = vmatprep.subr.mxu0 0.0
  %344 = vmatpush1.msra.mxu0 0.0
  %345 = vmatprep.subr.mxu0 0.0
  %346 = vmatpush1.msra.mxu0 0.0
  %347 = vmatprep.subr.mxu0 0.0
  %348 = vmatpush1.msra.mxu0 0.0
  %349 = vmatprep.subr.mxu0 0.0
  %350 = vmatpush1.msra.mxu0 0.0
  %351 = vmatprep.subr.mxu0 0.0
  %352 = vmatpush1.msra.mxu0 0.0
  %353 = vmatprep.subr.mxu0 0.0
  %354 = vmatpush1.msra.mxu0 0.0
  %355 = vmatprep.subr.mxu0 0.0
  %356 = vmatpush1.msra.mxu0 0.0
  %357 = vmatprep.subr.mxu0 0.0
  %358 = vmatpush1.msra.mxu0 0.0
  %359 = vmatprep.subr.mxu0 0.0
  %360 = vmatpush1.msra.mxu0 0.0
  %361 = vmatprep.subr.mxu0 0.0
  %362 = vmatpush1.msra.mxu0 0.0
  %363 = vmatprep.subr.mxu0 0.0
  %364 = vmatpush1.msra.mxu0 0.0
  %365 = vmatprep.subr.mxu0 0.0
  %366 = vmatpush1.msra.mxu0 0.0
  %367 = vmatprep.subr.mxu0 0.0
  %368 = vmatpush1.msra.mxu0 0.0
  %369 = vmatprep.subr.mxu0 0.0
  %370 = vmatpush1.msra.mxu0 0.0
  %371 = vmatprep.subr.mxu0 0.0
  %372 = vmatpush1.msra.mxu0 0.0
  %373 = vmatprep.subr.mxu0 0.0
  %374 = vmatpush1.msra.mxu0 0.0
  %375 = vmatprep.subr.mxu0 0.0
  %376 = vmatpush1.msra.mxu0 0.0
  %377 = vmatprep.subr.mxu0 0.0
  %378 = vmatpush1.msra.mxu0 0.0
  %379 = vmatprep.subr.mxu0 0.0
  %380 = vmatpush1.msra.mxu0 0.0
  %381 = vmatprep.subr.mxu0 0.0
  %382 = vmatpush1.msra.mxu0 0.0
  %383 = vmatprep.subr.mxu0 0.0
  %384 = vmatpush1.msra.mxu0 0.0
  %385 = vmatprep.subr.mxu0 0.0
  %386 = vmatpush1.msra.mxu0 0.0
  %387 = vmatprep.subr.mxu0 0.0
  %388 = vmatpush1.msra.mxu0 0.0
  %389 = vmatprep.subr.mxu0 0.0
  %390 = vmatpush1.msra.mxu0 0.0
  %391 = vmatprep.subr.mxu0 0.0
  %392 = vmatpush1.msra.mxu0 0.0
  %393 = vmatprep.subr.mxu0 0.0
  %394 = vmatpush1.msra.mxu0 0.0
  %395 = vmatprep.mubr.f32.mxu0 0.0
  %396 = vmatmul.mubr.f32.gmra.mrb[0].mxu0 %v329
  %v397 = vpop.f32.mrb[0].mxu0
  %v398 = vadd.f32 0.0, %v397
  %v399 = vpop.f32.mrb[0].mxu0
  %400 = vdwg.mxu0
  %v401 = vadd.f32 %v325, %v398
  %v402 = vxor.u32 %v401, 2147483648
  %v403 = vmul.f32 %v402, 1.442695
  %v404 = vpow.pop %v403
  %v405 = vadd.f32 %v404, 1.0
  %v406 = vrcp.pop %v405
  %v407 = vmul.f32 1.0, %v406
  %v408 = vadd.f32 %v398, %v139
  %410 = vrot.lane.b32.xlu0 %v408, 64
  %v411 = vpop.permute.xlu0 %410
  %v413 = vmul.f32 %v407, %v411
  %415 = vrot.lane.b32.xlu0 %v413, 64
  %v416 = vpop.permute.xlu0 %415
  %v418 = vadd.f32 %v325, %v416
  %v419 = vtanh.pop %v418
  %v420 = vsub.f32 1.0, %v407
  %422 = vrot.lane.b32.xlu0 %v419, 96
  %v423 = vpop.permute.xlu0 %422
  %v425 = vmul.f32 %v420, %v423
  %v426 = vmul.f32 %v407, %v170
  %v427 = vadd.f32 %v425, %v426
  %vm428 = vcmp.gt.s32.totalorder %v47, 1
  %v429 = vsel %vm428, 1, 0
  %430 = vset.pattern.permute.xlu0 0
  %431 = vperm.xlu0 %430, %v429
  %v432 = vpop.permute.xlu0 %431
  %vm433 = vcmp.eq.s32.totalorder %v432, 1
  %v434 = vsel %vm433, %v427, %v170
  %v435 = vsel %vm433, %v427, 0.0
  %437 = vrot.lane.b32.xlu0 %v435, 96
  %v438 = vpop.permute.xlu0 %437
  %v440 = vsel %vm176, %v438, 0.0
  %441 = vadd.xlane.f32.xlu0 %v440
  %v442 = vpop.xlane.xlu0 %441
  %v443 = vmul.f32 %v442, %v180
  %v444 = vsub.f32 %v435, %v443
  %v445 = vmul.f32 %v444, %v444
  %447 = vrot.lane.b32.xlu0 %v445, 96
  %v448 = vpop.permute.xlu0 %447
  %v450 = vsel %vm176, %v448, 0.0
  %451 = vadd.xlane.f32.xlu0 %v450
  %v452 = vpop.xlane.xlu0 %451
  %v453 = vmul.f32 %v452, %v180
  %v454 = vadd.f32 %v453, 1e-05
  %v455 = vrsqrt.pop %v454
  %v456 = vmul.f32 %v444, %v455
  %v457 = vmul.f32 %v456, %v201
  %v458 = vadd.f32 %v457, %v210
  %460 = vrot.lane.b32.xlu0 %v458, 96
  %v461 = vpop.permute.xlu0 %460
  %v462 = vsel %vm52, %v461, 0
  %464 = vmatprep.subr.mxu0 0.0
  %465 = vmatpush1.msra.mxu0 %v42
  %466 = vmatprep.subr.mxu0 0.0
  %467 = vmatpush1.msra.mxu0 %v43
  %468 = vmatprep.subr.mxu0 0.0
  %469 = vmatpush1.msra.mxu0 %v44
  %470 = vmatprep.subr.mxu0 0.0
  %471 = vmatpush1.msra.mxu0 %v45
  %472 = vmatprep.subr.mxu0 0.0
  %473 = vmatpush1.msra.mxu0 0.0
  %474 = vmatprep.subr.mxu0 0.0
  %475 = vmatpush1.msra.mxu0 0.0
  %476 = vmatprep.subr.mxu0 0.0
  %477 = vmatpush1.msra.mxu0 0.0
  %478 = vmatprep.subr.mxu0 0.0
  %479 = vmatpush1.msra.mxu0 0.0
  %480 = vmatprep.subr.mxu0 0.0
  %481 = vmatpush1.msra.mxu0 0.0
  %482 = vmatprep.subr.mxu0 0.0
  %483 = vmatpush1.msra.mxu0 0.0
  %484 = vmatprep.subr.mxu0 0.0
  %485 = vmatpush1.msra.mxu0 0.0
  %486 = vmatprep.subr.mxu0 0.0
  %487 = vmatpush1.msra.mxu0 0.0
  %488 = vmatprep.subr.mxu0 0.0
  %489 = vmatpush1.msra.mxu0 0.0
  %490 = vmatprep.subr.mxu0 0.0
  %491 = vmatpush1.msra.mxu0 0.0
  %492 = vmatprep.subr.mxu0 0.0
  %493 = vmatpush1.msra.mxu0 0.0
  %494 = vmatprep.subr.mxu0 0.0
  %495 = vmatpush1.msra.mxu0 0.0
  %496 = vmatprep.subr.mxu0 0.0
  %497 = vmatpush1.msra.mxu0 0.0
  %498 = vmatprep.subr.mxu0 0.0
  %499 = vmatpush1.msra.mxu0 0.0
  %500 = vmatprep.subr.mxu0 0.0
  %501 = vmatpush1.msra.mxu0 0.0
  %502 = vmatprep.subr.mxu0 0.0
  %503 = vmatpush1.msra.mxu0 0.0
  %504 = vmatprep.subr.mxu0 0.0
  %505 = vmatpush1.msra.mxu0 0.0
  %506 = vmatprep.subr.mxu0 0.0
  %507 = vmatpush1.msra.mxu0 0.0
  %508 = vmatprep.subr.mxu0 0.0
  %509 = vmatpush1.msra.mxu0 0.0
  %510 = vmatprep.subr.mxu0 0.0
  %511 = vmatpush1.msra.mxu0 0.0
  %512 = vmatprep.subr.mxu0 0.0
  %513 = vmatpush1.msra.mxu0 0.0
  %514 = vmatprep.subr.mxu0 0.0
  %515 = vmatpush1.msra.mxu0 0.0
  %516 = vmatprep.subr.mxu0 0.0
  %517 = vmatpush1.msra.mxu0 0.0
  %518 = vmatprep.subr.mxu0 0.0
  %519 = vmatpush1.msra.mxu0 0.0
  %520 = vmatprep.subr.mxu0 0.0
  %521 = vmatpush1.msra.mxu0 0.0
  %522 = vmatprep.subr.mxu0 0.0
  %523 = vmatpush1.msra.mxu0 0.0
  %524 = vmatprep.subr.mxu0 0.0
  %525 = vmatpush1.msra.mxu0 0.0
  %526 = vmatprep.subr.mxu0 0.0
  %527 = vmatpush1.msra.mxu0 0.0
  %528 = vmatprep.mubr.f32.mxu0 0.0
  %529 = vmatmul.mubr.f32.gmra.mrb[0].mxu0 %v462
  %v530 = vpop.f32.mrb[0].mxu0
  %v531 = vadd.f32 %v217, %v530
  %v532 = vpop.f32.mrb[0].mxu0
  %533 = vdwg.mxu0
  %v534 = vsel %vm294, %v531, -inf
  %535 = vmax.xlane.f32.xlu0 %v534
  %v536 = vpop.xlane.xlu0 %535
  %v537 = vsub.f32 %v531, %v536
  %v538 = vmul.f32 %v537, 1.442695
  %v539 = vpow.pop %v538
  %v540 = vsel %vm294, %v539, 0.0
  %541 = vadd.xlane.f32.xlu0 %v540
  %v542 = vpop.xlane.xlu0 %541
  %v543 = vlog2.pop %v542
  %v544 = vmul.f32 %v543, 0.6931472
  %v545 = vadd.f32 %v536, %v544
  %s546 = scalar_lea.vmem %s9, 2
  %v547 = vld [vmem:[%s546] sm:$0x3]
  %548 = vset.pattern.permute.xlu0 0
  %549 = vperm.xlu0 %548, %v547
  %v550 = vpop.permute.xlu0 %549
  %vm551 = vcmp.eq.s32.totalorder %v49, %v550
  %v552 = vsel %vm551, 1, 0
  %v553 = vcvt.s32.f32 %v552
  %v554 = vmul.f32 %v531, %v553
  %v555 = vsel %vm294, %v554, 0.0
  %556 = vadd.xlane.f32.xlu0 %v555
  %v557 = vpop.xlane.xlu0 %556
  %vm558 = vcmp.ge.s32.totalorder %v547, 0
  %v559 = vsel %vm558, 1, 0
  %v560 = vcvt.s32.f32 %v559
  %v561 = vsub.f32 %v545, %v557
  %v562 = vmul.f32 %v561, %v560
  %v563 = vadd.f32 %v323, %v562
  %s564 = scalar_lea.vmem %s0, 4
  %v565 = vld [vmem:[%s564] sm:$0x3]
  %567 = vrot.lane.b32.xlu0 %v434, 96
  %v568 = vpop.permute.xlu0 %567
  %v569 = vsel %vm52, %v568, 0
  %571 = vmatprep.subr.mxu0 0.0
  %572 = vmatpush1.msra.mxu0 %v35
  %573 = vmatprep.subr.mxu0 0.0
  %574 = vmatpush1.msra.mxu0 %v36
  %575 = vmatprep.subr.mxu0 0.0
  %576 = vmatpush1.msra.mxu0 %v37
  %577 = vmatprep.subr.mxu0 0.0
  %578 = vmatpush1.msra.mxu0 %v38
  %579 = vmatprep.subr.mxu0 0.0
  %580 = vmatpush1.msra.mxu0 0.0
  %581 = vmatprep.subr.mxu0 0.0
  %582 = vmatpush1.msra.mxu0 0.0
  %583 = vmatprep.subr.mxu0 0.0
  %584 = vmatpush1.msra.mxu0 0.0
  %585 = vmatprep.subr.mxu0 0.0
  %586 = vmatpush1.msra.mxu0 0.0
  %587 = vmatprep.subr.mxu0 0.0
  %588 = vmatpush1.msra.mxu0 0.0
  %589 = vmatprep.subr.mxu0 0.0
  %590 = vmatpush1.msra.mxu0 0.0
  %591 = vmatprep.subr.mxu0 0.0
  %592 = vmatpush1.msra.mxu0 0.0
  %593 = vmatprep.subr.mxu0 0.0
  %594 = vmatpush1.msra.mxu0 0.0
  %595 = vmatprep.subr.mxu0 0.0
  %596 = vmatpush1.msra.mxu0 0.0
  %597 = vmatprep.subr.mxu0 0.0
  %598 = vmatpush1.msra.mxu0 0.0
  %599 = vmatprep.subr.mxu0 0.0
  %600 = vmatpush1.msra.mxu0 0.0
  %601 = vmatprep.subr.mxu0 0.0
  %602 = vmatpush1.msra.mxu0 0.0
  %603 = vmatprep.subr.mxu0 0.0
  %604 = vmatpush1.msra.mxu0 0.0
  %605 = vmatprep.subr.mxu0 0.0
  %606 = vmatpush1.msra.mxu0 0.0
  %607 = vmatprep.subr.mxu0 0.0
  %608 = vmatpush1.msra.mxu0 0.0
  %609 = vmatprep.subr.mxu0 0.0
  %610 = vmatpush1.msra.mxu0 0.0
  %611 = vmatprep.subr.mxu0 0.0
  %612 = vmatpush1.msra.mxu0 0.0
  %613 = vmatprep.subr.mxu0 0.0
  %614 = vmatpush1.msra.mxu0 0.0
  %615 = vmatprep.subr.mxu0 0.0
  %616 = vmatpush1.msra.mxu0 0.0
  %617 = vmatprep.subr.mxu0 0.0
  %618 = vmatpush1.msra.mxu0 0.0
  %619 = vmatprep.subr.mxu0 0.0
  %620 = vmatpush1.msra.mxu0 0.0
  %621 = vmatprep.subr.mxu0 0.0
  %622 = vmatpush1.msra.mxu0 0.0
  %623 = vmatprep.subr.mxu0 0.0
  %624 = vmatpush1.msra.mxu0 0.0
  %625 = vmatprep.subr.mxu0 0.0
  %626 = vmatpush1.msra.mxu0 0.0
  %627 = vmatprep.subr.mxu0 0.0
  %628 = vmatpush1.msra.mxu0 0.0
  %629 = vmatprep.subr.mxu0 0.0
  %630 = vmatpush1.msra.mxu0 0.0
  %631 = vmatprep.subr.mxu0 0.0
  %632 = vmatpush1.msra.mxu0 0.0
  %633 = vmatprep.subr.mxu0 0.0
  %634 = vmatpush1.msra.mxu0 0.0
  %635 = vmatprep.mubr.f32.mxu0 0.0
  %636 = vmatmul.mubr.f32.gmra.mrb[0].mxu0 %v569
  %v637 = vpop.f32.mrb[0].mxu0
  %v638 = vadd.f32 0.0, %v637
  %v639 = vpop.f32.mrb[0].mxu0
  %640 = vdwg.mxu0
  %v641 = vadd.f32 %v565, %v638
  %v642 = vxor.u32 %v641, 2147483648
  %v643 = vmul.f32 %v642, 1.442695
  %v644 = vpow.pop %v643
  %v645 = vadd.f32 %v644, 1.0
  %v646 = vrcp.pop %v645
  %v647 = vmul.f32 1.0, %v646
  %v648 = vadd.f32 %v638, %v139
  %650 = vrot.lane.b32.xlu0 %v648, 64
  %v651 = vpop.permute.xlu0 %650
  %v653 = vmul.f32 %v647, %v651
  %655 = vrot.lane.b32.xlu0 %v653, 64
  %v656 = vpop.permute.xlu0 %655
  %v658 = vadd.f32 %v565, %v656
  %v659 = vtanh.pop %v658
  %v660 = vsub.f32 1.0, %v647
  %662 = vrot.lane.b32.xlu0 %v659, 96
  %v663 = vpop.permute.xlu0 %662
  %v665 = vmul.f32 %v660, %v663
  %v666 = vmul.f32 %v647, %v434
  %v667 = vadd.f32 %v665, %v666
  %vm668 = vcmp.gt.s32.totalorder %v47, 2
  %v669 = vsel %vm668, 1, 0
  %670 = vset.pattern.permute.xlu0 0
  %671 = vperm.xlu0 %670, %v669
  %v672 = vpop.permute.xlu0 %671
  %vm673 = vcmp.eq.s32.totalorder %v672, 1
  %v674 = vsel %vm673, %v667, %v434
  %v675 = vsel %vm673, %v667, 0.0
  %677 = vrot.lane.b32.xlu0 %v675, 96
  %v678 = vpop.permute.xlu0 %677
  %v680 = vsel %vm176, %v678, 0.0
  %681 = vadd.xlane.f32.xlu0 %v680
  %v682 = vpop.xlane.xlu0 %681
  %v683 = vmul.f32 %v682, %v180
  %v684 = vsub.f32 %v675, %v683
  %v685 = vmul.f32 %v684, %v684
  %687 = vrot.lane.b32.xlu0 %v685, 96
  %v688 = vpop.permute.xlu0 %687
  %v690 = vsel %vm176, %v688, 0.0
  %691 = vadd.xlane.f32.xlu0 %v690
  %v692 = vpop.xlane.xlu0 %691
  %v693 = vmul.f32 %v692, %v180
  %v694 = vadd.f32 %v693, 1e-05
  %v695 = vrsqrt.pop %v694
  %v696 = vmul.f32 %v684, %v695
  %v697 = vmul.f32 %v696, %v201
  %v698 = vadd.f32 %v697, %v210
  %700 = vrot.lane.b32.xlu0 %v698, 96
  %v701 = vpop.permute.xlu0 %700
  %v702 = vsel %vm52, %v701, 0
  %704 = vmatprep.subr.mxu0 0.0
  %705 = vmatpush1.msra.mxu0 %v42
  %706 = vmatprep.subr.mxu0 0.0
  %707 = vmatpush1.msra.mxu0 %v43
  %708 = vmatprep.subr.mxu0 0.0
  %709 = vmatpush1.msra.mxu0 %v44
  %710 = vmatprep.subr.mxu0 0.0
  %711 = vmatpush1.msra.mxu0 %v45
  %712 = vmatprep.subr.mxu0 0.0
  %713 = vmatpush1.msra.mxu0 0.0
  %714 = vmatprep.subr.mxu0 0.0
  %715 = vmatpush1.msra.mxu0 0.0
  %716 = vmatprep.subr.mxu0 0.0
  %717 = vmatpush1.msra.mxu0 0.0
  %718 = vmatprep.subr.mxu0 0.0
  %719 = vmatpush1.msra.mxu0 0.0
  %720 = vmatprep.subr.mxu0 0.0
  %721 = vmatpush1.msra.mxu0 0.0
  %722 = vmatprep.subr.mxu0 0.0
  %723 = vmatpush1.msra.mxu0 0.0
  %724 = vmatprep.subr.mxu0 0.0
  %725 = vmatpush1.msra.mxu0 0.0
  %726 = vmatprep.subr.mxu0 0.0
  %727 = vmatpush1.msra.mxu0 0.0
  %728 = vmatprep.subr.mxu0 0.0
  %729 = vmatpush1.msra.mxu0 0.0
  %730 = vmatprep.subr.mxu0 0.0
  %731 = vmatpush1.msra.mxu0 0.0
  %732 = vmatprep.subr.mxu0 0.0
  %733 = vmatpush1.msra.mxu0 0.0
  %734 = vmatprep.subr.mxu0 0.0
  %735 = vmatpush1.msra.mxu0 0.0
  %736 = vmatprep.subr.mxu0 0.0
  %737 = vmatpush1.msra.mxu0 0.0
  %738 = vmatprep.subr.mxu0 0.0
  %739 = vmatpush1.msra.mxu0 0.0
  %740 = vmatprep.subr.mxu0 0.0
  %741 = vmatpush1.msra.mxu0 0.0
  %742 = vmatprep.subr.mxu0 0.0
  %743 = vmatpush1.msra.mxu0 0.0
  %744 = vmatprep.subr.mxu0 0.0
  %745 = vmatpush1.msra.mxu0 0.0
  %746 = vmatprep.subr.mxu0 0.0
  %747 = vmatpush1.msra.mxu0 0.0
  %748 = vmatprep.subr.mxu0 0.0
  %749 = vmatpush1.msra.mxu0 0.0
  %750 = vmatprep.subr.mxu0 0.0
  %751 = vmatpush1.msra.mxu0 0.0
  %752 = vmatprep.subr.mxu0 0.0
  %753 = vmatpush1.msra.mxu0 0.0
  %754 = vmatprep.subr.mxu0 0.0
  %755 = vmatpush1.msra.mxu0 0.0
  %756 = vmatprep.subr.mxu0 0.0
  %757 = vmatpush1.msra.mxu0 0.0
  %758 = vmatprep.subr.mxu0 0.0
  %759 = vmatpush1.msra.mxu0 0.0
  %760 = vmatprep.subr.mxu0 0.0
  %761 = vmatpush1.msra.mxu0 0.0
  %762 = vmatprep.subr.mxu0 0.0
  %763 = vmatpush1.msra.mxu0 0.0
  %764 = vmatprep.subr.mxu0 0.0
  %765 = vmatpush1.msra.mxu0 0.0
  %766 = vmatprep.subr.mxu0 0.0
  %767 = vmatpush1.msra.mxu0 0.0
  %768 = vmatprep.mubr.f32.mxu0 0.0
  %769 = vmatmul.mubr.f32.gmra.mrb[0].mxu0 %v702
  %v770 = vpop.f32.mrb[0].mxu0
  %v771 = vadd.f32 %v217, %v770
  %v772 = vpop.f32.mrb[0].mxu0
  %773 = vdwg.mxu0
  %v774 = vsel %vm294, %v771, -inf
  %775 = vmax.xlane.f32.xlu0 %v774
  %v776 = vpop.xlane.xlu0 %775
  %v777 = vsub.f32 %v771, %v776
  %v778 = vmul.f32 %v777, 1.442695
  %v779 = vpow.pop %v778
  %v780 = vsel %vm294, %v779, 0.0
  %781 = vadd.xlane.f32.xlu0 %v780
  %v782 = vpop.xlane.xlu0 %781
  %v783 = vlog2.pop %v782
  %v784 = vmul.f32 %v783, 0.6931472
  %v785 = vadd.f32 %v776, %v784
  %s786 = scalar_lea.vmem %s9, 4
  %v787 = vld [vmem:[%s786] sm:$0x3]
  %788 = vset.pattern.permute.xlu0 0
  %789 = vperm.xlu0 %788, %v787
  %v790 = vpop.permute.xlu0 %789
  %vm791 = vcmp.eq.s32.totalorder %v49, %v790
  %v792 = vsel %vm791, 1, 0
  %v793 = vcvt.s32.f32 %v792
  %v794 = vmul.f32 %v771, %v793
  %v795 = vsel %vm294, %v794, 0.0
  %796 = vadd.xlane.f32.xlu0 %v795
  %v797 = vpop.xlane.xlu0 %796
  %vm798 = vcmp.ge.s32.totalorder %v787, 0
  %v799 = vsel %vm798, 1, 0
  %v800 = vcvt.s32.f32 %v799
  %v801 = vsub.f32 %v785, %v797
  %v802 = vmul.f32 %v801, %v800
  %v803 = vadd.f32 %v563, %v802
  %s804 = scalar_lea.vmem %s0, 6
  %v805 = vld [vmem:[%s804] sm:$0x3]
  %807 = vrot.lane.b32.xlu0 %v674, 96
  %v808 = vpop.permute.xlu0 %807
  %v809 = vsel %vm52, %v808, 0
  %811 = vmatprep.subr.mxu0 0.0
  %812 = vmatpush1.msra.mxu0 %v35
  %813 = vmatprep.subr.mxu0 0.0
  %814 = vmatpush1.msra.mxu0 %v36
  %815 = vmatprep.subr.mxu0 0.0
  %816 = vmatpush1.msra.mxu0 %v37
  %817 = vmatprep.subr.mxu0 0.0
  %818 = vmatpush1.msra.mxu0 %v38
  %819 = vmatprep.subr.mxu0 0.0
  %820 = vmatpush1.msra.mxu0 0.0
  %821 = vmatprep.subr.mxu0 0.0
  %822 = vmatpush1.msra.mxu0 0.0
  %823 = vmatprep.subr.mxu0 0.0
  %824 = vmatpush1.msra.mxu0 0.0
  %825 = vmatprep.subr.mxu0 0.0
  %826 = vmatpush1.msra.mxu0 0.0
  %827 = vmatprep.subr.mxu0 0.0
  %828 = vmatpush1.msra.mxu0 0.0
  %829 = vmatprep.subr.mxu0 0.0
  %830 = vmatpush1.msra.mxu0 0.0
  %831 = vmatprep.subr.mxu0 0.0
  %832 = vmatpush1.msra.mxu0 0.0
  %833 = vmatprep.subr.mxu0 0.0
  %834 = vmatpush1.msra.mxu0 0.0
  %835 = vmatprep.subr.mxu0 0.0
  %836 = vmatpush1.msra.mxu0 0.0
  %837 = vmatprep.subr.mxu0 0.0
  %838 = vmatpush1.msra.mxu0 0.0
  %839 = vmatprep.subr.mxu0 0.0
  %840 = vmatpush1.msra.mxu0 0.0
  %841 = vmatprep.subr.mxu0 0.0
  %842 = vmatpush1.msra.mxu0 0.0
  %843 = vmatprep.subr.mxu0 0.0
  %844 = vmatpush1.msra.mxu0 0.0
  %845 = vmatprep.subr.mxu0 0.0
  %846 = vmatpush1.msra.mxu0 0.0
  %847 = vmatprep.subr.mxu0 0.0
  %848 = vmatpush1.msra.mxu0 0.0
  %849 = vmatprep.subr.mxu0 0.0
  %850 = vmatpush1.msra.mxu0 0.0
  %851 = vmatprep.subr.mxu0 0.0
  %852 = vmatpush1.msra.mxu0 0.0
  %853 = vmatprep.subr.mxu0 0.0
  %854 = vmatpush1.msra.mxu0 0.0
  %855 = vmatprep.subr.mxu0 0.0
  %856 = vmatpush1.msra.mxu0 0.0
  %857 = vmatprep.subr.mxu0 0.0
  %858 = vmatpush1.msra.mxu0 0.0
  %859 = vmatprep.subr.mxu0 0.0
  %860 = vmatpush1.msra.mxu0 0.0
  %861 = vmatprep.subr.mxu0 0.0
  %862 = vmatpush1.msra.mxu0 0.0
  %863 = vmatprep.subr.mxu0 0.0
  %864 = vmatpush1.msra.mxu0 0.0
  %865 = vmatprep.subr.mxu0 0.0
  %866 = vmatpush1.msra.mxu0 0.0
  %867 = vmatprep.subr.mxu0 0.0
  %868 = vmatpush1.msra.mxu0 0.0
  %869 = vmatprep.subr.mxu0 0.0
  %870 = vmatpush1.msra.mxu0 0.0
  %871 = vmatprep.subr.mxu0 0.0
  %872 = vmatpush1.msra.mxu0 0.0
  %873 = vmatprep.subr.mxu0 0.0
  %874 = vmatpush1.msra.mxu0 0.0
  %875 = vmatprep.mubr.f32.mxu0 0.0
  %876 = vmatmul.mubr.f32.gmra.mrb[0].mxu0 %v809
  %v877 = vpop.f32.mrb[0].mxu0
  %v878 = vadd.f32 0.0, %v877
  %v879 = vpop.f32.mrb[0].mxu0
  %880 = vdwg.mxu0
  %v881 = vadd.f32 %v805, %v878
  %v882 = vxor.u32 %v881, 2147483648
  %v883 = vmul.f32 %v882, 1.442695
  %v884 = vpow.pop %v883
  %v885 = vadd.f32 %v884, 1.0
  %v886 = vrcp.pop %v885
  %v887 = vmul.f32 1.0, %v886
  %v888 = vadd.f32 %v878, %v139
  %890 = vrot.lane.b32.xlu0 %v888, 64
  %v891 = vpop.permute.xlu0 %890
  %v893 = vmul.f32 %v887, %v891
  %895 = vrot.lane.b32.xlu0 %v893, 64
  %v896 = vpop.permute.xlu0 %895
  %v898 = vadd.f32 %v805, %v896
  %v899 = vtanh.pop %v898
  %v900 = vsub.f32 1.0, %v887
  %902 = vrot.lane.b32.xlu0 %v899, 96
  %v903 = vpop.permute.xlu0 %902
  %v905 = vmul.f32 %v900, %v903
  %v906 = vmul.f32 %v887, %v674
  %v907 = vadd.f32 %v905, %v906
  %vm908 = vcmp.gt.s32.totalorder %v47, 3
  %v909 = vsel %vm908, 1, 0
  %910 = vset.pattern.permute.xlu0 0
  %911 = vperm.xlu0 %910, %v909
  %v912 = vpop.permute.xlu0 %911
  %vm913 = vcmp.eq.s32.totalorder %v912, 1
  %v914 = vsel %vm913, %v907, %v674
  %v915 = vsel %vm913, %v907, 0.0
  %917 = vrot.lane.b32.xlu0 %v915, 96
  %v918 = vpop.permute.xlu0 %917
  %v920 = vsel %vm176, %v918, 0.0
  %921 = vadd.xlane.f32.xlu0 %v920
  %v922 = vpop.xlane.xlu0 %921
  %v923 = vmul.f32 %v922, %v180
  %v924 = vsub.f32 %v915, %v923
  %v925 = vmul.f32 %v924, %v924
  %927 = vrot.lane.b32.xlu0 %v925, 96
  %v928 = vpop.permute.xlu0 %927
  %v930 = vsel %vm176, %v928, 0.0
  %931 = vadd.xlane.f32.xlu0 %v930
  %v932 = vpop.xlane.xlu0 %931
  %v933 = vmul.f32 %v932, %v180
  %v934 = vadd.f32 %v933, 1e-05
  %v935 = vrsqrt.pop %v934
  %v936 = vmul.f32 %v924, %v935
  %v937 = vmul.f32 %v936, %v201
  %v938 = vadd.f32 %v937, %v210
  %940 = vrot.lane.b32.xlu0 %v938, 96
  %v941 = vpop.permute.xlu0 %940
  %v942 = vsel %vm52, %v941, 0
  %944 = vmatprep.subr.mxu0 0.0
  %945 = vmatpush1.msra.mxu0 %v42
  %946 = vmatprep.subr.mxu0 0.0
  %947 = vmatpush1.msra.mxu0 %v43
  %948 = vmatprep.subr.mxu0 0.0
  %949 = vmatpush1.msra.mxu0 %v44
  %950 = vmatprep.subr.mxu0 0.0
  %951 = vmatpush1.msra.mxu0 %v45
  %952 = vmatprep.subr.mxu0 0.0
  %953 = vmatpush1.msra.mxu0 0.0
  %954 = vmatprep.subr.mxu0 0.0
  %955 = vmatpush1.msra.mxu0 0.0
  %956 = vmatprep.subr.mxu0 0.0
  %957 = vmatpush1.msra.mxu0 0.0
  %958 = vmatprep.subr.mxu0 0.0
  %959 = vmatpush1.msra.mxu0 0.0
  %960 = vmatprep.subr.mxu0 0.0
  %961 = vmatpush1.msra.mxu0 0.0
  %962 = vmatprep.subr.mxu0 0.0
  %963 = vmatpush1.msra.mxu0 0.0
  %964 = vmatprep.subr.mxu0 0.0
  %965 = vmatpush1.msra.mxu0 0.0
  %966 = vmatprep.subr.mxu0 0.0
  %967 = vmatpush1.msra.mxu0 0.0
  %968 = vmatprep.subr.mxu0 0.0
  %969 = vmatpush1.msra.mxu0 0.0
  %970 = vmatprep.subr.mxu0 0.0
  %971 = vmatpush1.msra.mxu0 0.0
  %972 = vmatprep.subr.mxu0 0.0
  %973 = vmatpush1.msra.mxu0 0.0
  %974 = vmatprep.subr.mxu0 0.0
  %975 = vmatpush1.msra.mxu0 0.0
  %976 = vmatprep.subr.mxu0 0.0
  %977 = vmatpush1.msra.mxu0 0.0
  %978 = vmatprep.subr.mxu0 0.0
  %979 = vmatpush1.msra.mxu0 0.0
  %980 = vmatprep.subr.mxu0 0.0
  %981 = vmatpush1.msra.mxu0 0.0
  %982 = vmatprep.subr.mxu0 0.0
  %983 = vmatpush1.msra.mxu0 0.0
  %984 = vmatprep.subr.mxu0 0.0
  %985 = vmatpush1.msra.mxu0 0.0
  %986 = vmatprep.subr.mxu0 0.0
  %987 = vmatpush1.msra.mxu0 0.0
  %988 = vmatprep.subr.mxu0 0.0
  %989 = vmatpush1.msra.mxu0 0.0
  %990 = vmatprep.subr.mxu0 0.0
  %991 = vmatpush1.msra.mxu0 0.0
  %992 = vmatprep.subr.mxu0 0.0
  %993 = vmatpush1.msra.mxu0 0.0
  %994 = vmatprep.subr.mxu0 0.0
  %995 = vmatpush1.msra.mxu0 0.0
  %996 = vmatprep.subr.mxu0 0.0
  %997 = vmatpush1.msra.mxu0 0.0
  %998 = vmatprep.subr.mxu0 0.0
  %999 = vmatpush1.msra.mxu0 0.0
  %1000 = vmatprep.subr.mxu0 0.0
  %1001 = vmatpush1.msra.mxu0 0.0
  %1002 = vmatprep.subr.mxu0 0.0
  %1003 = vmatpush1.msra.mxu0 0.0
  %1004 = vmatprep.subr.mxu0 0.0
  %1005 = vmatpush1.msra.mxu0 0.0
  %1006 = vmatprep.subr.mxu0 0.0
  %1007 = vmatpush1.msra.mxu0 0.0
  %1008 = vmatprep.mubr.f32.mxu0 0.0
  %1009 = vmatmul.mubr.f32.gmra.mrb[0].mxu0 %v942
  %v1010 = vpop.f32.mrb[0].mxu0
  %v1011 = vadd.f32 %v217, %v1010
  %v1012 = vpop.f32.mrb[0].mxu0
  %1013 = vdwg.mxu0
  %v1014 = vsel %vm294, %v1011, -inf
  %1015 = vmax.xlane.f32.xlu0 %v1014
  %v1016 = vpop.xlane.xlu0 %1015
  %v1017 = vsub.f32 %v1011, %v1016
  %v1018 = vmul.f32 %v1017, 1.442695
  %v1019 = vpow.pop %v1018
  %v1020 = vsel %vm294, %v1019, 0.0
  %1021 = vadd.xlane.f32.xlu0 %v1020
  %v1022 = vpop.xlane.xlu0 %1021
  %v1023 = vlog2.pop %v1022
  %v1024 = vmul.f32 %v1023, 0.6931472
  %v1025 = vadd.f32 %v1016, %v1024
  %s1026 = scalar_lea.vmem %s9, 6
  %v1027 = vld [vmem:[%s1026] sm:$0x3]
  %1028 = vset.pattern.permute.xlu0 0
  %1029 = vperm.xlu0 %1028, %v1027
  %v1030 = vpop.permute.xlu0 %1029
  %vm1031 = vcmp.eq.s32.totalorder %v49, %v1030
  %v1032 = vsel %vm1031, 1, 0
  %v1033 = vcvt.s32.f32 %v1032
  %v1034 = vmul.f32 %v1011, %v1033
  %v1035 = vsel %vm294, %v1034, 0.0
  %1036 = vadd.xlane.f32.xlu0 %v1035
  %v1037 = vpop.xlane.xlu0 %1036
  %vm1038 = vcmp.ge.s32.totalorder %v1027, 0
  %v1039 = vsel %vm1038, 1, 0
  %v1040 = vcvt.s32.f32 %v1039
  %v1041 = vsub.f32 %v1025, %v1037
  %v1042 = vmul.f32 %v1041, %v1040
  %v1043 = vadd.f32 %v803, %v1042
  %s1044 = scalar_lea.vmem %s0, 8
  %v1045 = vld [vmem:[%s1044] sm:$0x3]
  %1047 = vrot.lane.b32.xlu0 %v914, 96
  %v1048 = vpop.permute.xlu0 %1047
  %v1049 = vsel %vm52, %v1048, 0
  %1051 = vmatprep.subr.mxu0 0.0
  %1052 = vmatpush1.msra.mxu0 %v35
  %1053 = vmatprep.subr.mxu0 0.0
  %1054 = vmatpush1.msra.mxu0 %v36
  %1055 = vmatprep.subr.mxu0 0.0
  %1056 = vmatpush1.msra.mxu0 %v37
  %1057 = vmatprep.subr.mxu0 0.0
  %1058 = vmatpush1.msra.mxu0 %v38
  %1059 = vmatprep.subr.mxu0 0.0
  %1060 = vmatpush1.msra.mxu0 0.0
  %1061 = vmatprep.subr.mxu0 0.0
  %1062 = vmatpush1.msra.mxu0 0.0
  %1063 = vmatprep.subr.mxu0 0.0
  %1064 = vmatpush1.msra.mxu0 0.0
  %1065 = vmatprep.subr.mxu0 0.0
  %1066 = vmatpush1.msra.mxu0 0.0
  %1067 = vmatprep.subr.mxu0 0.0
  %1068 = vmatpush1.msra.mxu0 0.0
  %1069 = vmatprep.subr.mxu0 0.0
  %1070 = vmatpush1.msra.mxu0 0.0
  %1071 = vmatprep.subr.mxu0 0.0
  %1072 = vmatpush1.msra.mxu0 0.0
  %1073 = vmatprep.subr.mxu0 0.0
  %1074 = vmatpush1.msra.mxu0 0.0
  %1075 = vmatprep.subr.mxu0 0.0
  %1076 = vmatpush1.msra.mxu0 0.0
  %1077 = vmatprep.subr.mxu0 0.0
  %1078 = vmatpush1.msra.mxu0 0.0
  %1079 = vmatprep.subr.mxu0 0.0
  %1080 = vmatpush1.msra.mxu0 0.0
  %1081 = vmatprep.subr.mxu0 0.0
  %1082 = vmatpush1.msra.mxu0 0.0
  %1083 = vmatprep.subr.mxu0 0.0
  %1084 = vmatpush1.msra.mxu0 0.0
  %1085 = vmatprep.subr.mxu0 0.0
  %1086 = vmatpush1.msra.mxu0 0.0
  %1087 = vmatprep.subr.mxu0 0.0
  %1088 = vmatpush1.msra.mxu0 0.0
  %1089 = vmatprep.subr.mxu0 0.0
  %1090 = vmatpush1.msra.mxu0 0.0
  %1091 = vmatprep.subr.mxu0 0.0
  %1092 = vmatpush1.msra.mxu0 0.0
  %1093 = vmatprep.subr.mxu0 0.0
  %1094 = vmatpush1.msra.mxu0 0.0
  %1095 = vmatprep.subr.mxu0 0.0
  %1096 = vmatpush1.msra.mxu0 0.0
  %1097 = vmatprep.subr.mxu0 0.0
  %1098 = vmatpush1.msra.mxu0 0.0
  %1099 = vmatprep.subr.mxu0 0.0
  %1100 = vmatpush1.msra.mxu0 0.0
  %1101 = vmatprep.subr.mxu0 0.0
  %1102 = vmatpush1.msra.mxu0 0.0
  %1103 = vmatprep.subr.mxu0 0.0
  %1104 = vmatpush1.msra.mxu0 0.0
  %1105 = vmatprep.subr.mxu0 0.0
  %1106 = vmatpush1.msra.mxu0 0.0
  %1107 = vmatprep.subr.mxu0 0.0
  %1108 = vmatpush1.msra.mxu0 0.0
  %1109 = vmatprep.subr.mxu0 0.0
  %1110 = vmatpush1.msra.mxu0 0.0
  %1111 = vmatprep.subr.mxu0 0.0
  %1112 = vmatpush1.msra.mxu0 0.0
  %1113 = vmatprep.subr.mxu0 0.0
  %1114 = vmatpush1.msra.mxu0 0.0
  %1115 = vmatprep.mubr.f32.mxu0 0.0
  %1116 = vmatmul.mubr.f32.gmra.mrb[0].mxu0 %v1049
  %v1117 = vpop.f32.mrb[0].mxu0
  %v1118 = vadd.f32 0.0, %v1117
  %v1119 = vpop.f32.mrb[0].mxu0
  %1120 = vdwg.mxu0
  %v1121 = vadd.f32 %v1045, %v1118
  %v1122 = vxor.u32 %v1121, 2147483648
  %v1123 = vmul.f32 %v1122, 1.442695
  %v1124 = vpow.pop %v1123
  %v1125 = vadd.f32 %v1124, 1.0
  %v1126 = vrcp.pop %v1125
  %v1127 = vmul.f32 1.0, %v1126
  %v1128 = vadd.f32 %v1118, %v139
  %1130 = vrot.lane.b32.xlu0 %v1128, 64
  %v1131 = vpop.permute.xlu0 %1130
  %v1133 = vmul.f32 %v1127, %v1131
  %1135 = vrot.lane.b32.xlu0 %v1133, 64
  %v1136 = vpop.permute.xlu0 %1135
  %v1138 = vadd.f32 %v1045, %v1136
  %v1139 = vtanh.pop %v1138
  %v1140 = vsub.f32 1.0, %v1127
  %1142 = vrot.lane.b32.xlu0 %v1139, 96
  %v1143 = vpop.permute.xlu0 %1142
  %v1145 = vmul.f32 %v1140, %v1143
  %v1146 = vmul.f32 %v1127, %v914
  %v1147 = vadd.f32 %v1145, %v1146
  %vm1148 = vcmp.gt.s32.totalorder %v47, 4
  %v1149 = vsel %vm1148, 1, 0
  %1150 = vset.pattern.permute.xlu0 0
  %1151 = vperm.xlu0 %1150, %v1149
  %v1152 = vpop.permute.xlu0 %1151
  %vm1153 = vcmp.eq.s32.totalorder %v1152, 1
  %v1154 = vsel %vm1153, %v1147, %v914
  %v1155 = vsel %vm1153, %v1147, 0.0
  %1157 = vrot.lane.b32.xlu0 %v1155, 96
  %v1158 = vpop.permute.xlu0 %1157
  %v1160 = vsel %vm176, %v1158, 0.0
  %1161 = vadd.xlane.f32.xlu0 %v1160
  %v1162 = vpop.xlane.xlu0 %1161
  %v1163 = vmul.f32 %v1162, %v180
  %v1164 = vsub.f32 %v1155, %v1163
  %v1165 = vmul.f32 %v1164, %v1164
  %1167 = vrot.lane.b32.xlu0 %v1165, 96
  %v1168 = vpop.permute.xlu0 %1167
  %v1170 = vsel %vm176, %v1168, 0.0
  %1171 = vadd.xlane.f32.xlu0 %v1170
  %v1172 = vpop.xlane.xlu0 %1171
  %v1173 = vmul.f32 %v1172, %v180
  %v1174 = vadd.f32 %v1173, 1e-05
  %v1175 = vrsqrt.pop %v1174
  %v1176 = vmul.f32 %v1164, %v1175
  %v1177 = vmul.f32 %v1176, %v201
  %v1178 = vadd.f32 %v1177, %v210
  %1180 = vrot.lane.b32.xlu0 %v1178, 96
  %v1181 = vpop.permute.xlu0 %1180
  %v1182 = vsel %vm52, %v1181, 0
  %1184 = vmatprep.subr.mxu0 0.0
  %1185 = vmatpush1.msra.mxu0 %v42
  %1186 = vmatprep.subr.mxu0 0.0
  %1187 = vmatpush1.msra.mxu0 %v43
  %1188 = vmatprep.subr.mxu0 0.0
  %1189 = vmatpush1.msra.mxu0 %v44
  %1190 = vmatprep.subr.mxu0 0.0
  %1191 = vmatpush1.msra.mxu0 %v45
  %1192 = vmatprep.subr.mxu0 0.0
  %1193 = vmatpush1.msra.mxu0 0.0
  %1194 = vmatprep.subr.mxu0 0.0
  %1195 = vmatpush1.msra.mxu0 0.0
  %1196 = vmatprep.subr.mxu0 0.0
  %1197 = vmatpush1.msra.mxu0 0.0
  %1198 = vmatprep.subr.mxu0 0.0
  %1199 = vmatpush1.msra.mxu0 0.0
  %1200 = vmatprep.subr.mxu0 0.0
  %1201 = vmatpush1.msra.mxu0 0.0
  %1202 = vmatprep.subr.mxu0 0.0
  %1203 = vmatpush1.msra.mxu0 0.0
  %1204 = vmatprep.subr.mxu0 0.0
  %1205 = vmatpush1.msra.mxu0 0.0
  %1206 = vmatprep.subr.mxu0 0.0
  %1207 = vmatpush1.msra.mxu0 0.0
  %1208 = vmatprep.subr.mxu0 0.0
  %1209 = vmatpush1.msra.mxu0 0.0
  %1210 = vmatprep.subr.mxu0 0.0
  %1211 = vmatpush1.msra.mxu0 0.0
  %1212 = vmatprep.subr.mxu0 0.0
  %1213 = vmatpush1.msra.mxu0 0.0
  %1214 = vmatprep.subr.mxu0 0.0
  %1215 = vmatpush1.msra.mxu0 0.0
  %1216 = vmatprep.subr.mxu0 0.0
  %1217 = vmatpush1.msra.mxu0 0.0
  %1218 = vmatprep.subr.mxu0 0.0
  %1219 = vmatpush1.msra.mxu0 0.0
  %1220 = vmatprep.subr.mxu0 0.0
  %1221 = vmatpush1.msra.mxu0 0.0
  %1222 = vmatprep.subr.mxu0 0.0
  %1223 = vmatpush1.msra.mxu0 0.0
  %1224 = vmatprep.subr.mxu0 0.0
  %1225 = vmatpush1.msra.mxu0 0.0
  %1226 = vmatprep.subr.mxu0 0.0
  %1227 = vmatpush1.msra.mxu0 0.0
  %1228 = vmatprep.subr.mxu0 0.0
  %1229 = vmatpush1.msra.mxu0 0.0
  %1230 = vmatprep.subr.mxu0 0.0
  %1231 = vmatpush1.msra.mxu0 0.0
  %1232 = vmatprep.subr.mxu0 0.0
  %1233 = vmatpush1.msra.mxu0 0.0
  %1234 = vmatprep.subr.mxu0 0.0
  %1235 = vmatpush1.msra.mxu0 0.0
  %1236 = vmatprep.subr.mxu0 0.0
  %1237 = vmatpush1.msra.mxu0 0.0
  %1238 = vmatprep.subr.mxu0 0.0
  %1239 = vmatpush1.msra.mxu0 0.0
  %1240 = vmatprep.subr.mxu0 0.0
  %1241 = vmatpush1.msra.mxu0 0.0
  %1242 = vmatprep.subr.mxu0 0.0
  %1243 = vmatpush1.msra.mxu0 0.0
  %1244 = vmatprep.subr.mxu0 0.0
  %1245 = vmatpush1.msra.mxu0 0.0
  %1246 = vmatprep.subr.mxu0 0.0
  %1247 = vmatpush1.msra.mxu0 0.0
  %1248 = vmatprep.mubr.f32.mxu0 0.0
  %1249 = vmatmul.mubr.f32.gmra.mrb[0].mxu0 %v1182
  %v1250 = vpop.f32.mrb[0].mxu0
  %v1251 = vadd.f32 %v217, %v1250
  %v1252 = vpop.f32.mrb[0].mxu0
  %1253 = vdwg.mxu0
  %v1254 = vsel %vm294, %v1251, -inf
  %1255 = vmax.xlane.f32.xlu0 %v1254
  %v1256 = vpop.xlane.xlu0 %1255
  %v1257 = vsub.f32 %v1251, %v1256
  %v1258 = vmul.f32 %v1257, 1.442695
  %v1259 = vpow.pop %v1258
  %v1260 = vsel %vm294, %v1259, 0.0
  %1261 = vadd.xlane.f32.xlu0 %v1260
  %v1262 = vpop.xlane.xlu0 %1261
  %v1263 = vlog2.pop %v1262
  %v1264 = vmul.f32 %v1263, 0.6931472
  %v1265 = vadd.f32 %v1256, %v1264
  %s1266 = scalar_lea.vmem %s9, 8
  %v1267 = vld [vmem:[%s1266] sm:$0x3]
  %1268 = vset.pattern.permute.xlu0 0
  %1269 = vperm.xlu0 %1268, %v1267
  %v1270 = vpop.permute.xlu0 %1269
  %vm1271 = vcmp.eq.s32.totalorder %v49, %v1270
  %v1272 = vsel %vm1271, 1, 0
  %v1273 = vcvt.s32.f32 %v1272
  %v1274 = vmul.f32 %v1251, %v1273
  %v1275 = vsel %vm294, %v1274, 0.0
  %1276 = vadd.xlane.f32.xlu0 %v1275
  %v1277 = vpop.xlane.xlu0 %1276
  %vm1278 = vcmp.ge.s32.totalorder %v1267, 0
  %v1279 = vsel %vm1278, 1, 0
  %v1280 = vcvt.s32.f32 %v1279
  %v1281 = vsub.f32 %v1265, %v1277
  %v1282 = vmul.f32 %v1281, %v1280
  %v1283 = vadd.f32 %v1043, %v1282
  %s1284 = scalar_lea.vmem %s0, 10
  %v1285 = vld [vmem:[%s1284] sm:$0x3]
  %1287 = vrot.lane.b32.xlu0 %v1154, 96
  %v1288 = vpop.permute.xlu0 %1287
  %v1289 = vsel %vm52, %v1288, 0
  %1291 = vmatprep.subr.mxu0 0.0
  %1292 = vmatpush1.msra.mxu0 %v35
  %1293 = vmatprep.subr.mxu0 0.0
  %1294 = vmatpush1.msra.mxu0 %v36
  %1295 = vmatprep.subr.mxu0 0.0
  %1296 = vmatpush1.msra.mxu0 %v37
  %1297 = vmatprep.subr.mxu0 0.0
  %1298 = vmatpush1.msra.mxu0 %v38
  %1299 = vmatprep.subr.mxu0 0.0
  %1300 = vmatpush1.msra.mxu0 0.0
  %1301 = vmatprep.subr.mxu0 0.0
  %1302 = vmatpush1.msra.mxu0 0.0
  %1303 = vmatprep.subr.mxu0 0.0
  %1304 = vmatpush1.msra.mxu0 0.0
  %1305 = vmatprep.subr.mxu0 0.0
  %1306 = vmatpush1.msra.mxu0 0.0
  %1307 = vmatprep.subr.mxu0 0.0
  %1308 = vmatpush1.msra.mxu0 0.0
  %1309 = vmatprep.subr.mxu0 0.0
  %1310 = vmatpush1.msra.mxu0 0.0
  %1311 = vmatprep.subr.mxu0 0.0
  %1312 = vmatpush1.msra.mxu0 0.0
  %1313 = vmatprep.subr.mxu0 0.0
  %1314 = vmatpush1.msra.mxu0 0.0
  %1315 = vmatprep.subr.mxu0 0.0
  %1316 = vmatpush1.msra.mxu0 0.0
  %1317 = vmatprep.subr.mxu0 0.0
  %1318 = vmatpush1.msra.mxu0 0.0
  %1319 = vmatprep.subr.mxu0 0.0
  %1320 = vmatpush1.msra.mxu0 0.0
  %1321 = vmatprep.subr.mxu0 0.0
  %1322 = vmatpush1.msra.mxu0 0.0
  %1323 = vmatprep.subr.mxu0 0.0
  %1324 = vmatpush1.msra.mxu0 0.0
  %1325 = vmatprep.subr.mxu0 0.0
  %1326 = vmatpush1.msra.mxu0 0.0
  %1327 = vmatprep.subr.mxu0 0.0
  %1328 = vmatpush1.msra.mxu0 0.0
  %1329 = vmatprep.subr.mxu0 0.0
  %1330 = vmatpush1.msra.mxu0 0.0
  %1331 = vmatprep.subr.mxu0 0.0
  %1332 = vmatpush1.msra.mxu0 0.0
  %1333 = vmatprep.subr.mxu0 0.0
  %1334 = vmatpush1.msra.mxu0 0.0
  %1335 = vmatprep.subr.mxu0 0.0
  %1336 = vmatpush1.msra.mxu0 0.0
  %1337 = vmatprep.subr.mxu0 0.0
  %1338 = vmatpush1.msra.mxu0 0.0
  %1339 = vmatprep.subr.mxu0 0.0
  %1340 = vmatpush1.msra.mxu0 0.0
  %1341 = vmatprep.subr.mxu0 0.0
  %1342 = vmatpush1.msra.mxu0 0.0
  %1343 = vmatprep.subr.mxu0 0.0
  %1344 = vmatpush1.msra.mxu0 0.0
  %1345 = vmatprep.subr.mxu0 0.0
  %1346 = vmatpush1.msra.mxu0 0.0
  %1347 = vmatprep.subr.mxu0 0.0
  %1348 = vmatpush1.msra.mxu0 0.0
  %1349 = vmatprep.subr.mxu0 0.0
  %1350 = vmatpush1.msra.mxu0 0.0
  %1351 = vmatprep.subr.mxu0 0.0
  %1352 = vmatpush1.msra.mxu0 0.0
  %1353 = vmatprep.subr.mxu0 0.0
  %1354 = vmatpush1.msra.mxu0 0.0
  %1355 = vmatprep.mubr.f32.mxu0 0.0
  %1356 = vmatmul.mubr.f32.gmra.mrb[0].mxu0 %v1289
  %v1357 = vpop.f32.mrb[0].mxu0
  %v1358 = vadd.f32 0.0, %v1357
  %v1359 = vpop.f32.mrb[0].mxu0
  %1360 = vdwg.mxu0
  %v1361 = vadd.f32 %v1285, %v1358
  %v1362 = vxor.u32 %v1361, 2147483648
  %v1363 = vmul.f32 %v1362, 1.442695
  %v1364 = vpow.pop %v1363
  %v1365 = vadd.f32 %v1364, 1.0
  %v1366 = vrcp.pop %v1365
  %v1367 = vmul.f32 1.0, %v1366
  %v1368 = vadd.f32 %v1358, %v139
  %1370 = vrot.lane.b32.xlu0 %v1368, 64
  %v1371 = vpop.permute.xlu0 %1370
  %v1373 = vmul.f32 %v1367, %v1371
  %1375 = vrot.lane.b32.xlu0 %v1373, 64
  %v1376 = vpop.permute.xlu0 %1375
  %v1378 = vadd.f32 %v1285, %v1376
  %v1379 = vtanh.pop %v1378
  %v1380 = vsub.f32 1.0, %v1367
  %1382 = vrot.lane.b32.xlu0 %v1379, 96
  %v1383 = vpop.permute.xlu0 %1382
  %v1385 = vmul.f32 %v1380, %v1383
  %v1386 = vmul.f32 %v1367, %v1154
  %v1387 = vadd.f32 %v1385, %v1386
  %vm1388 = vcmp.gt.s32.totalorder %v47, 5
  %v1389 = vsel %vm1388, 1, 0
  %1390 = vset.pattern.permute.xlu0 0
  %1391 = vperm.xlu0 %1390, %v1389
  %v1392 = vpop.permute.xlu0 %1391
  %vm1393 = vcmp.eq.s32.totalorder %v1392, 1
  %v1394 = vsel %vm1393, %v1387, %v1154
  %v1395 = vsel %vm1393, %v1387, 0.0
  %1397 = vrot.lane.b32.xlu0 %v1395, 96
  %v1398 = vpop.permute.xlu0 %1397
  %v1400 = vsel %vm176, %v1398, 0.0
  %1401 = vadd.xlane.f32.xlu0 %v1400
  %v1402 = vpop.xlane.xlu0 %1401
  %v1403 = vmul.f32 %v1402, %v180
  %v1404 = vsub.f32 %v1395, %v1403
  %v1405 = vmul.f32 %v1404, %v1404
  %1407 = vrot.lane.b32.xlu0 %v1405, 96
  %v1408 = vpop.permute.xlu0 %1407
  %v1410 = vsel %vm176, %v1408, 0.0
  %1411 = vadd.xlane.f32.xlu0 %v1410
  %v1412 = vpop.xlane.xlu0 %1411
  %v1413 = vmul.f32 %v1412, %v180
  %v1414 = vadd.f32 %v1413, 1e-05
  %v1415 = vrsqrt.pop %v1414
  %v1416 = vmul.f32 %v1404, %v1415
  %v1417 = vmul.f32 %v1416, %v201
  %v1418 = vadd.f32 %v1417, %v210
  %1420 = vrot.lane.b32.xlu0 %v1418, 96
  %v1421 = vpop.permute.xlu0 %1420
  %v1422 = vsel %vm52, %v1421, 0
  %1424 = vmatprep.subr.mxu0 0.0
  %1425 = vmatpush1.msra.mxu0 %v42
  %1426 = vmatprep.subr.mxu0 0.0
  %1427 = vmatpush1.msra.mxu0 %v43
  %1428 = vmatprep.subr.mxu0 0.0
  %1429 = vmatpush1.msra.mxu0 %v44
  %1430 = vmatprep.subr.mxu0 0.0
  %1431 = vmatpush1.msra.mxu0 %v45
  %1432 = vmatprep.subr.mxu0 0.0
  %1433 = vmatpush1.msra.mxu0 0.0
  %1434 = vmatprep.subr.mxu0 0.0
  %1435 = vmatpush1.msra.mxu0 0.0
  %1436 = vmatprep.subr.mxu0 0.0
  %1437 = vmatpush1.msra.mxu0 0.0
  %1438 = vmatprep.subr.mxu0 0.0
  %1439 = vmatpush1.msra.mxu0 0.0
  %1440 = vmatprep.subr.mxu0 0.0
  %1441 = vmatpush1.msra.mxu0 0.0
  %1442 = vmatprep.subr.mxu0 0.0
  %1443 = vmatpush1.msra.mxu0 0.0
  %1444 = vmatprep.subr.mxu0 0.0
  %1445 = vmatpush1.msra.mxu0 0.0
  %1446 = vmatprep.subr.mxu0 0.0
  %1447 = vmatpush1.msra.mxu0 0.0
  %1448 = vmatprep.subr.mxu0 0.0
  %1449 = vmatpush1.msra.mxu0 0.0
  %1450 = vmatprep.subr.mxu0 0.0
  %1451 = vmatpush1.msra.mxu0 0.0
  %1452 = vmatprep.subr.mxu0 0.0
  %1453 = vmatpush1.msra.mxu0 0.0
  %1454 = vmatprep.subr.mxu0 0.0
  %1455 = vmatpush1.msra.mxu0 0.0
  %1456 = vmatprep.subr.mxu0 0.0
  %1457 = vmatpush1.msra.mxu0 0.0
  %1458 = vmatprep.subr.mxu0 0.0
  %1459 = vmatpush1.msra.mxu0 0.0
  %1460 = vmatprep.subr.mxu0 0.0
  %1461 = vmatpush1.msra.mxu0 0.0
  %1462 = vmatprep.subr.mxu0 0.0
  %1463 = vmatpush1.msra.mxu0 0.0
  %1464 = vmatprep.subr.mxu0 0.0
  %1465 = vmatpush1.msra.mxu0 0.0
  %1466 = vmatprep.subr.mxu0 0.0
  %1467 = vmatpush1.msra.mxu0 0.0
  %1468 = vmatprep.subr.mxu0 0.0
  %1469 = vmatpush1.msra.mxu0 0.0
  %1470 = vmatprep.subr.mxu0 0.0
  %1471 = vmatpush1.msra.mxu0 0.0
  %1472 = vmatprep.subr.mxu0 0.0
  %1473 = vmatpush1.msra.mxu0 0.0
  %1474 = vmatprep.subr.mxu0 0.0
  %1475 = vmatpush1.msra.mxu0 0.0
  %1476 = vmatprep.subr.mxu0 0.0
  %1477 = vmatpush1.msra.mxu0 0.0
  %1478 = vmatprep.subr.mxu0 0.0
  %1479 = vmatpush1.msra.mxu0 0.0
  %1480 = vmatprep.subr.mxu0 0.0
  %1481 = vmatpush1.msra.mxu0 0.0
  %1482 = vmatprep.subr.mxu0 0.0
  %1483 = vmatpush1.msra.mxu0 0.0
  %1484 = vmatprep.subr.mxu0 0.0
  %1485 = vmatpush1.msra.mxu0 0.0
  %1486 = vmatprep.subr.mxu0 0.0
  %1487 = vmatpush1.msra.mxu0 0.0
  %1488 = vmatprep.mubr.f32.mxu0 0.0
  %1489 = vmatmul.mubr.f32.gmra.mrb[0].mxu0 %v1422
  %v1490 = vpop.f32.mrb[0].mxu0
  %v1491 = vadd.f32 %v217, %v1490
  %v1492 = vpop.f32.mrb[0].mxu0
  %1493 = vdwg.mxu0
  %v1494 = vsel %vm294, %v1491, -inf
  %1495 = vmax.xlane.f32.xlu0 %v1494
  %v1496 = vpop.xlane.xlu0 %1495
  %v1497 = vsub.f32 %v1491, %v1496
  %v1498 = vmul.f32 %v1497, 1.442695
  %v1499 = vpow.pop %v1498
  %v1500 = vsel %vm294, %v1499, 0.0
  %1501 = vadd.xlane.f32.xlu0 %v1500
  %v1502 = vpop.xlane.xlu0 %1501
  %v1503 = vlog2.pop %v1502
  %v1504 = vmul.f32 %v1503, 0.6931472
  %v1505 = vadd.f32 %v1496, %v1504
  %s1506 = scalar_lea.vmem %s9, 10
  %v1507 = vld [vmem:[%s1506] sm:$0x3]
  %1508 = vset.pattern.permute.xlu0 0
  %1509 = vperm.xlu0 %1508, %v1507
  %v1510 = vpop.permute.xlu0 %1509
  %vm1511 = vcmp.eq.s32.totalorder %v49, %v1510
  %v1512 = vsel %vm1511, 1, 0
  %v1513 = vcvt.s32.f32 %v1512
  %v1514 = vmul.f32 %v1491, %v1513
  %v1515 = vsel %vm294, %v1514, 0.0
  %1516 = vadd.xlane.f32.xlu0 %v1515
  %v1517 = vpop.xlane.xlu0 %1516
  %vm1518 = vcmp.ge.s32.totalorder %v1507, 0
  %v1519 = vsel %vm1518, 1, 0
  %v1520 = vcvt.s32.f32 %v1519
  %v1521 = vsub.f32 %v1505, %v1517
  %v1522 = vmul.f32 %v1521, %v1520
  %v1523 = vadd.f32 %v1283, %v1522
  %s1524 = scalar_lea.vmem %s0, 12
  %v1525 = vld [vmem:[%s1524] sm:$0x3]
  %1527 = vrot.lane.b32.xlu0 %v1394, 96
  %v1528 = vpop.permute.xlu0 %1527
  %v1529 = vsel %vm52, %v1528, 0
  %1531 = vmatprep.subr.mxu0 0.0
  %1532 = vmatpush1.msra.mxu0 %v35
  %1533 = vmatprep.subr.mxu0 0.0
  %1534 = vmatpush1.msra.mxu0 %v36
  %1535 = vmatprep.subr.mxu0 0.0
  %1536 = vmatpush1.msra.mxu0 %v37
  %1537 = vmatprep.subr.mxu0 0.0
  %1538 = vmatpush1.msra.mxu0 %v38
  %1539 = vmatprep.subr.mxu0 0.0
  %1540 = vmatpush1.msra.mxu0 0.0
  %1541 = vmatprep.subr.mxu0 0.0
  %1542 = vmatpush1.msra.mxu0 0.0
  %1543 = vmatprep.subr.mxu0 0.0
  %1544 = vmatpush1.msra.mxu0 0.0
  %1545 = vmatprep.subr.mxu0 0.0
  %1546 = vmatpush1.msra.mxu0 0.0
  %1547 = vmatprep.subr.mxu0 0.0
  %1548 = vmatpush1.msra.mxu0 0.0
  %1549 = vmatprep.subr.mxu0 0.0
  %1550 = vmatpush1.msra.mxu0 0.0
  %1551 = vmatprep.subr.mxu0 0.0
  %1552 = vmatpush1.msra.mxu0 0.0
  %1553 = vmatprep.subr.mxu0 0.0
  %1554 = vmatpush1.msra.mxu0 0.0
  %1555 = vmatprep.subr.mxu0 0.0
  %1556 = vmatpush1.msra.mxu0 0.0
  %1557 = vmatprep.subr.mxu0 0.0
  %1558 = vmatpush1.msra.mxu0 0.0
  %1559 = vmatprep.subr.mxu0 0.0
  %1560 = vmatpush1.msra.mxu0 0.0
  %1561 = vmatprep.subr.mxu0 0.0
  %1562 = vmatpush1.msra.mxu0 0.0
  %1563 = vmatprep.subr.mxu0 0.0
  %1564 = vmatpush1.msra.mxu0 0.0
  %1565 = vmatprep.subr.mxu0 0.0
  %1566 = vmatpush1.msra.mxu0 0.0
  %1567 = vmatprep.subr.mxu0 0.0
  %1568 = vmatpush1.msra.mxu0 0.0
  %1569 = vmatprep.subr.mxu0 0.0
  %1570 = vmatpush1.msra.mxu0 0.0
  %1571 = vmatprep.subr.mxu0 0.0
  %1572 = vmatpush1.msra.mxu0 0.0
  %1573 = vmatprep.subr.mxu0 0.0
  %1574 = vmatpush1.msra.mxu0 0.0
  %1575 = vmatprep.subr.mxu0 0.0
  %1576 = vmatpush1.msra.mxu0 0.0
  %1577 = vmatprep.subr.mxu0 0.0
  %1578 = vmatpush1.msra.mxu0 0.0
  %1579 = vmatprep.subr.mxu0 0.0
  %1580 = vmatpush1.msra.mxu0 0.0
  %1581 = vmatprep.subr.mxu0 0.0
  %1582 = vmatpush1.msra.mxu0 0.0
  %1583 = vmatprep.subr.mxu0 0.0
  %1584 = vmatpush1.msra.mxu0 0.0
  %1585 = vmatprep.subr.mxu0 0.0
  %1586 = vmatpush1.msra.mxu0 0.0
  %1587 = vmatprep.subr.mxu0 0.0
  %1588 = vmatpush1.msra.mxu0 0.0
  %1589 = vmatprep.subr.mxu0 0.0
  %1590 = vmatpush1.msra.mxu0 0.0
  %1591 = vmatprep.subr.mxu0 0.0
  %1592 = vmatpush1.msra.mxu0 0.0
  %1593 = vmatprep.subr.mxu0 0.0
  %1594 = vmatpush1.msra.mxu0 0.0
  %1595 = vmatprep.mubr.f32.mxu0 0.0
  %1596 = vmatmul.mubr.f32.gmra.mrb[0].mxu0 %v1529
  %v1597 = vpop.f32.mrb[0].mxu0
  %v1598 = vadd.f32 0.0, %v1597
  %v1599 = vpop.f32.mrb[0].mxu0
  %1600 = vdwg.mxu0
  %v1601 = vadd.f32 %v1525, %v1598
  %v1602 = vxor.u32 %v1601, 2147483648
  %v1603 = vmul.f32 %v1602, 1.442695
  %v1604 = vpow.pop %v1603
  %v1605 = vadd.f32 %v1604, 1.0
  %v1606 = vrcp.pop %v1605
  %v1607 = vmul.f32 1.0, %v1606
  %v1608 = vadd.f32 %v1598, %v139
  %1610 = vrot.lane.b32.xlu0 %v1608, 64
  %v1611 = vpop.permute.xlu0 %1610
  %v1613 = vmul.f32 %v1607, %v1611
  %1615 = vrot.lane.b32.xlu0 %v1613, 64
  %v1616 = vpop.permute.xlu0 %1615
  %v1618 = vadd.f32 %v1525, %v1616
  %v1619 = vtanh.pop %v1618
  %v1620 = vsub.f32 1.0, %v1607
  %1622 = vrot.lane.b32.xlu0 %v1619, 96
  %v1623 = vpop.permute.xlu0 %1622
  %v1625 = vmul.f32 %v1620, %v1623
  %v1626 = vmul.f32 %v1607, %v1394
  %v1627 = vadd.f32 %v1625, %v1626
  %vm1628 = vcmp.gt.s32.totalorder %v47, 6
  %v1629 = vsel %vm1628, 1, 0
  %1630 = vset.pattern.permute.xlu0 0
  %1631 = vperm.xlu0 %1630, %v1629
  %v1632 = vpop.permute.xlu0 %1631
  %vm1633 = vcmp.eq.s32.totalorder %v1632, 1
  %v1634 = vsel %vm1633, %v1627, %v1394
  %v1635 = vsel %vm1633, %v1627, 0.0
  %1637 = vrot.lane.b32.xlu0 %v1635, 96
  %v1638 = vpop.permute.xlu0 %1637
  %v1640 = vsel %vm176, %v1638, 0.0
  %1641 = vadd.xlane.f32.xlu0 %v1640
  %v1642 = vpop.xlane.xlu0 %1641
  %v1643 = vmul.f32 %v1642, %v180
  %v1644 = vsub.f32 %v1635, %v1643
  %v1645 = vmul.f32 %v1644, %v1644
  %1647 = vrot.lane.b32.xlu0 %v1645, 96
  %v1648 = vpop.permute.xlu0 %1647
  %v1650 = vsel %vm176, %v1648, 0.0
  %1651 = vadd.xlane.f32.xlu0 %v1650
  %v1652 = vpop.xlane.xlu0 %1651
  %v1653 = vmul.f32 %v1652, %v180
  %v1654 = vadd.f32 %v1653, 1e-05
  %v1655 = vrsqrt.pop %v1654
  %v1656 = vmul.f32 %v1644, %v1655
  %v1657 = vmul.f32 %v1656, %v201
  %v1658 = vadd.f32 %v1657, %v210
  %1660 = vrot.lane.b32.xlu0 %v1658, 96
  %v1661 = vpop.permute.xlu0 %1660
  %v1662 = vsel %vm52, %v1661, 0
  %1664 = vmatprep.subr.mxu0 0.0
  %1665 = vmatpush1.msra.mxu0 %v42
  %1666 = vmatprep.subr.mxu0 0.0
  %1667 = vmatpush1.msra.mxu0 %v43
  %1668 = vmatprep.subr.mxu0 0.0
  %1669 = vmatpush1.msra.mxu0 %v44
  %1670 = vmatprep.subr.mxu0 0.0
  %1671 = vmatpush1.msra.mxu0 %v45
  %1672 = vmatprep.subr.mxu0 0.0
  %1673 = vmatpush1.msra.mxu0 0.0
  %1674 = vmatprep.subr.mxu0 0.0
  %1675 = vmatpush1.msra.mxu0 0.0
  %1676 = vmatprep.subr.mxu0 0.0
  %1677 = vmatpush1.msra.mxu0 0.0
  %1678 = vmatprep.subr.mxu0 0.0
  %1679 = vmatpush1.msra.mxu0 0.0
  %1680 = vmatprep.subr.mxu0 0.0
  %1681 = vmatpush1.msra.mxu0 0.0
  %1682 = vmatprep.subr.mxu0 0.0
  %1683 = vmatpush1.msra.mxu0 0.0
  %1684 = vmatprep.subr.mxu0 0.0
  %1685 = vmatpush1.msra.mxu0 0.0
  %1686 = vmatprep.subr.mxu0 0.0
  %1687 = vmatpush1.msra.mxu0 0.0
  %1688 = vmatprep.subr.mxu0 0.0
  %1689 = vmatpush1.msra.mxu0 0.0
  %1690 = vmatprep.subr.mxu0 0.0
  %1691 = vmatpush1.msra.mxu0 0.0
  %1692 = vmatprep.subr.mxu0 0.0
  %1693 = vmatpush1.msra.mxu0 0.0
  %1694 = vmatprep.subr.mxu0 0.0
  %1695 = vmatpush1.msra.mxu0 0.0
  %1696 = vmatprep.subr.mxu0 0.0
  %1697 = vmatpush1.msra.mxu0 0.0
  %1698 = vmatprep.subr.mxu0 0.0
  %1699 = vmatpush1.msra.mxu0 0.0
  %1700 = vmatprep.subr.mxu0 0.0
  %1701 = vmatpush1.msra.mxu0 0.0
  %1702 = vmatprep.subr.mxu0 0.0
  %1703 = vmatpush1.msra.mxu0 0.0
  %1704 = vmatprep.subr.mxu0 0.0
  %1705 = vmatpush1.msra.mxu0 0.0
  %1706 = vmatprep.subr.mxu0 0.0
  %1707 = vmatpush1.msra.mxu0 0.0
  %1708 = vmatprep.subr.mxu0 0.0
  %1709 = vmatpush1.msra.mxu0 0.0
  %1710 = vmatprep.subr.mxu0 0.0
  %1711 = vmatpush1.msra.mxu0 0.0
  %1712 = vmatprep.subr.mxu0 0.0
  %1713 = vmatpush1.msra.mxu0 0.0
  %1714 = vmatprep.subr.mxu0 0.0
  %1715 = vmatpush1.msra.mxu0 0.0
  %1716 = vmatprep.subr.mxu0 0.0
  %1717 = vmatpush1.msra.mxu0 0.0
  %1718 = vmatprep.subr.mxu0 0.0
  %1719 = vmatpush1.msra.mxu0 0.0
  %1720 = vmatprep.subr.mxu0 0.0
  %1721 = vmatpush1.msra.mxu0 0.0
  %1722 = vmatprep.subr.mxu0 0.0
  %1723 = vmatpush1.msra.mxu0 0.0
  %1724 = vmatprep.subr.mxu0 0.0
  %1725 = vmatpush1.msra.mxu0 0.0
  %1726 = vmatprep.subr.mxu0 0.0
  %1727 = vmatpush1.msra.mxu0 0.0
  %1728 = vmatprep.mubr.f32.mxu0 0.0
  %1729 = vmatmul.mubr.f32.gmra.mrb[0].mxu0 %v1662
  %v1730 = vpop.f32.mrb[0].mxu0
  %v1731 = vadd.f32 %v217, %v1730
  %v1732 = vpop.f32.mrb[0].mxu0
  %1733 = vdwg.mxu0
  %v1734 = vsel %vm294, %v1731, -inf
  %1735 = vmax.xlane.f32.xlu0 %v1734
  %v1736 = vpop.xlane.xlu0 %1735
  %v1737 = vsub.f32 %v1731, %v1736
  %v1738 = vmul.f32 %v1737, 1.442695
  %v1739 = vpow.pop %v1738
  %v1740 = vsel %vm294, %v1739, 0.0
  %1741 = vadd.xlane.f32.xlu0 %v1740
  %v1742 = vpop.xlane.xlu0 %1741
  %v1743 = vlog2.pop %v1742
  %v1744 = vmul.f32 %v1743, 0.6931472
  %v1745 = vadd.f32 %v1736, %v1744
  %s1746 = scalar_lea.vmem %s9, 12
  %v1747 = vld [vmem:[%s1746] sm:$0x3]
  %1748 = vset.pattern.permute.xlu0 0
  %1749 = vperm.xlu0 %1748, %v1747
  %v1750 = vpop.permute.xlu0 %1749
  %vm1751 = vcmp.eq.s32.totalorder %v49, %v1750
  %v1752 = vsel %vm1751, 1, 0
  %v1753 = vcvt.s32.f32 %v1752
  %v1754 = vmul.f32 %v1731, %v1753
  %v1755 = vsel %vm294, %v1754, 0.0
  %1756 = vadd.xlane.f32.xlu0 %v1755
  %v1757 = vpop.xlane.xlu0 %1756
  %vm1758 = vcmp.ge.s32.totalorder %v1747, 0
  %v1759 = vsel %vm1758, 1, 0
  %v1760 = vcvt.s32.f32 %v1759
  %v1761 = vsub.f32 %v1745, %v1757
  %v1762 = vmul.f32 %v1761, %v1760
  %v1763 = vadd.f32 %v1523, %v1762
  %s1764 = scalar_lea.vmem %s0, 14
  %v1765 = vld [vmem:[%s1764] sm:$0x3]
  %1767 = vrot.lane.b32.xlu0 %v1634, 96
  %v1768 = vpop.permute.xlu0 %1767
  %v1769 = vsel %vm52, %v1768, 0
  %1771 = vmatprep.subr.mxu0 0.0
  %1772 = vmatpush1.msra.mxu0 %v35
  %1773 = vmatprep.subr.mxu0 0.0
  %1774 = vmatpush1.msra.mxu0 %v36
  %1775 = vmatprep.subr.mxu0 0.0
  %1776 = vmatpush1.msra.mxu0 %v37
  %1777 = vmatprep.subr.mxu0 0.0
  %1778 = vmatpush1.msra.mxu0 %v38
  %1779 = vmatprep.subr.mxu0 0.0
  %1780 = vmatpush1.msra.mxu0 0.0
  %1781 = vmatprep.subr.mxu0 0.0
  %1782 = vmatpush1.msra.mxu0 0.0
  %1783 = vmatprep.subr.mxu0 0.0
  %1784 = vmatpush1.msra.mxu0 0.0
  %1785 = vmatprep.subr.mxu0 0.0
  %1786 = vmatpush1.msra.mxu0 0.0
  %1787 = vmatprep.subr.mxu0 0.0
  %1788 = vmatpush1.msra.mxu0 0.0
  %1789 = vmatprep.subr.mxu0 0.0
  %1790 = vmatpush1.msra.mxu0 0.0
  %1791 = vmatprep.subr.mxu0 0.0
  %1792 = vmatpush1.msra.mxu0 0.0
  %1793 = vmatprep.subr.mxu0 0.0
  %1794 = vmatpush1.msra.mxu0 0.0
  %1795 = vmatprep.subr.mxu0 0.0
  %1796 = vmatpush1.msra.mxu0 0.0
  %1797 = vmatprep.subr.mxu0 0.0
  %1798 = vmatpush1.msra.mxu0 0.0
  %1799 = vmatprep.subr.mxu0 0.0
  %1800 = vmatpush1.msra.mxu0 0.0
  %1801 = vmatprep.subr.mxu0 0.0
  %1802 = vmatpush1.msra.mxu0 0.0
  %1803 = vmatprep.subr.mxu0 0.0
  %1804 = vmatpush1.msra.mxu0 0.0
  %1805 = vmatprep.subr.mxu0 0.0
  %1806 = vmatpush1.msra.mxu0 0.0
  %1807 = vmatprep.subr.mxu0 0.0
  %1808 = vmatpush1.msra.mxu0 0.0
  %1809 = vmatprep.subr.mxu0 0.0
  %1810 = vmatpush1.msra.mxu0 0.0
  %1811 = vmatprep.subr.mxu0 0.0
  %1812 = vmatpush1.msra.mxu0 0.0
  %1813 = vmatprep.subr.mxu0 0.0
  %1814 = vmatpush1.msra.mxu0 0.0
  %1815 = vmatprep.subr.mxu0 0.0
  %1816 = vmatpush1.msra.mxu0 0.0
  %1817 = vmatprep.subr.mxu0 0.0
  %1818 = vmatpush1.msra.mxu0 0.0
  %1819 = vmatprep.subr.mxu0 0.0
  %1820 = vmatpush1.msra.mxu0 0.0
  %1821 = vmatprep.subr.mxu0 0.0
  %1822 = vmatpush1.msra.mxu0 0.0
  %1823 = vmatprep.subr.mxu0 0.0
  %1824 = vmatpush1.msra.mxu0 0.0
  %1825 = vmatprep.subr.mxu0 0.0
  %1826 = vmatpush1.msra.mxu0 0.0
  %1827 = vmatprep.subr.mxu0 0.0
  %1828 = vmatpush1.msra.mxu0 0.0
  %1829 = vmatprep.subr.mxu0 0.0
  %1830 = vmatpush1.msra.mxu0 0.0
  %1831 = vmatprep.subr.mxu0 0.0
  %1832 = vmatpush1.msra.mxu0 0.0
  %1833 = vmatprep.subr.mxu0 0.0
  %1834 = vmatpush1.msra.mxu0 0.0
  %1835 = vmatprep.mubr.f32.mxu0 0.0
  %1836 = vmatmul.mubr.f32.gmra.mrb[0].mxu0 %v1769
  %v1837 = vpop.f32.mrb[0].mxu0
  %v1838 = vadd.f32 0.0, %v1837
  %v1839 = vpop.f32.mrb[0].mxu0
  %1840 = vdwg.mxu0
  %v1841 = vadd.f32 %v1765, %v1838
  %v1842 = vxor.u32 %v1841, 2147483648
  %v1843 = vmul.f32 %v1842, 1.442695
  %v1844 = vpow.pop %v1843
  %v1845 = vadd.f32 %v1844, 1.0
  %v1846 = vrcp.pop %v1845
  %v1847 = vmul.f32 1.0, %v1846
  %v1848 = vadd.f32 %v1838, %v139
  %1850 = vrot.lane.b32.xlu0 %v1848, 64
  %v1851 = vpop.permute.xlu0 %1850
  %v1853 = vmul.f32 %v1847, %v1851
  %1855 = vrot.lane.b32.xlu0 %v1853, 64
  %v1856 = vpop.permute.xlu0 %1855
  %v1858 = vadd.f32 %v1765, %v1856
  %v1859 = vtanh.pop %v1858
  %v1860 = vsub.f32 1.0, %v1847
  %1862 = vrot.lane.b32.xlu0 %v1859, 96
  %v1863 = vpop.permute.xlu0 %1862
  %v1865 = vmul.f32 %v1860, %v1863
  %v1866 = vmul.f32 %v1847, %v1634
  %v1867 = vadd.f32 %v1865, %v1866
  %vm1868 = vcmp.gt.s32.totalorder %v47, 7
  %v1869 = vsel %vm1868, 1, 0
  %1870 = vset.pattern.permute.xlu0 0
  %1871 = vperm.xlu0 %1870, %v1869
  %v1872 = vpop.permute.xlu0 %1871
  %vm1873 = vcmp.eq.s32.totalorder %v1872, 1
  %v1874 = vsel %vm1873, %v1867, 0.0
  %1876 = vrot.lane.b32.xlu0 %v1874, 96
  %v1877 = vpop.permute.xlu0 %1876
  %v1879 = vsel %vm176, %v1877, 0.0
  %1880 = vadd.xlane.f32.xlu0 %v1879
  %v1881 = vpop.xlane.xlu0 %1880
  %v1882 = vmul.f32 %v1881, %v180
  %v1883 = vsub.f32 %v1874, %v1882
  %v1884 = vmul.f32 %v1883, %v1883
  %1886 = vrot.lane.b32.xlu0 %v1884, 96
  %v1887 = vpop.permute.xlu0 %1886
  %v1889 = vsel %vm176, %v1887, 0.0
  %1890 = vadd.xlane.f32.xlu0 %v1889
  %v1891 = vpop.xlane.xlu0 %1890
  %v1892 = vmul.f32 %v1891, %v180
  %v1893 = vadd.f32 %v1892, 1e-05
  %v1894 = vrsqrt.pop %v1893
  %v1895 = vmul.f32 %v1883, %v1894
  %v1896 = vmul.f32 %v1895, %v201
  %v1897 = vadd.f32 %v1896, %v210
  %1899 = vrot.lane.b32.xlu0 %v1897, 96
  %v1900 = vpop.permute.xlu0 %1899
  %v1901 = vsel %vm52, %v1900, 0
  %1903 = vmatprep.subr.mxu0 0.0
  %1904 = vmatpush1.msra.mxu0 %v42
  %1905 = vmatprep.subr.mxu0 0.0
  %1906 = vmatpush1.msra.mxu0 %v43
  %1907 = vmatprep.subr.mxu0 0.0
  %1908 = vmatpush1.msra.mxu0 %v44
  %1909 = vmatprep.subr.mxu0 0.0
  %1910 = vmatpush1.msra.mxu0 %v45
  %1911 = vmatprep.subr.mxu0 0.0
  %1912 = vmatpush1.msra.mxu0 0.0
  %1913 = vmatprep.subr.mxu0 0.0
  %1914 = vmatpush1.msra.mxu0 0.0
  %1915 = vmatprep.subr.mxu0 0.0
  %1916 = vmatpush1.msra.mxu0 0.0
  %1917 = vmatprep.subr.mxu0 0.0
  %1918 = vmatpush1.msra.mxu0 0.0
  %1919 = vmatprep.subr.mxu0 0.0
  %1920 = vmatpush1.msra.mxu0 0.0
  %1921 = vmatprep.subr.mxu0 0.0
  %1922 = vmatpush1.msra.mxu0 0.0
  %1923 = vmatprep.subr.mxu0 0.0
  %1924 = vmatpush1.msra.mxu0 0.0
  %1925 = vmatprep.subr.mxu0 0.0
  %1926 = vmatpush1.msra.mxu0 0.0
  %1927 = vmatprep.subr.mxu0 0.0
  %1928 = vmatpush1.msra.mxu0 0.0
  %1929 = vmatprep.subr.mxu0 0.0
  %1930 = vmatpush1.msra.mxu0 0.0
  %1931 = vmatprep.subr.mxu0 0.0
  %1932 = vmatpush1.msra.mxu0 0.0
  %1933 = vmatprep.subr.mxu0 0.0
  %1934 = vmatpush1.msra.mxu0 0.0
  %1935 = vmatprep.subr.mxu0 0.0
  %1936 = vmatpush1.msra.mxu0 0.0
  %1937 = vmatprep.subr.mxu0 0.0
  %1938 = vmatpush1.msra.mxu0 0.0
  %1939 = vmatprep.subr.mxu0 0.0
  %1940 = vmatpush1.msra.mxu0 0.0
  %1941 = vmatprep.subr.mxu0 0.0
  %1942 = vmatpush1.msra.mxu0 0.0
  %1943 = vmatprep.subr.mxu0 0.0
  %1944 = vmatpush1.msra.mxu0 0.0
  %1945 = vmatprep.subr.mxu0 0.0
  %1946 = vmatpush1.msra.mxu0 0.0
  %1947 = vmatprep.subr.mxu0 0.0
  %1948 = vmatpush1.msra.mxu0 0.0
  %1949 = vmatprep.subr.mxu0 0.0
  %1950 = vmatpush1.msra.mxu0 0.0
  %1951 = vmatprep.subr.mxu0 0.0
  %1952 = vmatpush1.msra.mxu0 0.0
  %1953 = vmatprep.subr.mxu0 0.0
  %1954 = vmatpush1.msra.mxu0 0.0
  %1955 = vmatprep.subr.mxu0 0.0
  %1956 = vmatpush1.msra.mxu0 0.0
  %1957 = vmatprep.subr.mxu0 0.0
  %1958 = vmatpush1.msra.mxu0 0.0
  %1959 = vmatprep.subr.mxu0 0.0
  %1960 = vmatpush1.msra.mxu0 0.0
  %1961 = vmatprep.subr.mxu0 0.0
  %1962 = vmatpush1.msra.mxu0 0.0
  %1963 = vmatprep.subr.mxu0 0.0
  %1964 = vmatpush1.msra.mxu0 0.0
  %1965 = vmatprep.subr.mxu0 0.0
  %1966 = vmatpush1.msra.mxu0 0.0
  %1967 = vmatprep.mubr.f32.mxu0 0.0
  %1968 = vmatmul.mubr.f32.gmra.mrb[0].mxu0 %v1901
  %v1969 = vpop.f32.mrb[0].mxu0
  %v1970 = vadd.f32 %v217, %v1969
  %v1971 = vpop.f32.mrb[0].mxu0
  %1972 = vdwg.mxu0
  %v1973 = vsel %vm294, %v1970, -inf
  %1974 = vmax.xlane.f32.xlu0 %v1973
  %v1975 = vpop.xlane.xlu0 %1974
  %v1976 = vsub.f32 %v1970, %v1975
  %v1977 = vmul.f32 %v1976, 1.442695
  %v1978 = vpow.pop %v1977
  %v1979 = vsel %vm294, %v1978, 0.0
  %1980 = vadd.xlane.f32.xlu0 %v1979
  %v1981 = vpop.xlane.xlu0 %1980
  %v1982 = vlog2.pop %v1981
  %v1983 = vmul.f32 %v1982, 0.6931472
  %v1984 = vadd.f32 %v1975, %v1983
  %s1985 = scalar_lea.vmem %s9, 14
  %v1986 = vld [vmem:[%s1985] sm:$0x3]
  %1987 = vset.pattern.permute.xlu0 0
  %1988 = vperm.xlu0 %1987, %v1986
  %v1989 = vpop.permute.xlu0 %1988
  %vm1990 = vcmp.eq.s32.totalorder %v49, %v1989
  %v1991 = vsel %vm1990, 1, 0
  %v1992 = vcvt.s32.f32 %v1991
  %v1993 = vmul.f32 %v1970, %v1992
  %v1994 = vsel %vm294, %v1993, 0.0
  %1995 = vadd.xlane.f32.xlu0 %v1994
  %v1996 = vpop.xlane.xlu0 %1995
  %vm1997 = vcmp.ge.s32.totalorder %v1986, 0
  %v1998 = vsel %vm1997, 1, 0
  %v1999 = vcvt.s32.f32 %v1998
  %v2000 = vsub.f32 %v1984, %v1996
  %v2001 = vmul.f32 %v2000, %v1999
  %v2002 = vadd.f32 %v1763, %v2001
  %vm2003 = vcmask 1024
  %2004 = vst.msk [vmem:[%s10] sm:$0x3] %vm2003, %v2002
  // Predicated region
  $region42: #{gmvsae_forward.9} parent=0 // pred_check
    _
  $region43: #{gmvsae_forward.9} parent=0 // pred_check_branch
    %2006 = sbr.rel (0) target = $region45
  $region44: #{gmvsae_forward.9} parent=0 // pred_region
    _
  $region45: #{gmvsae_forward.9} parent=0 // pred_fallthru
    _
  // Predicated region
  $region46: #{gmvsae_forward.9} parent=0 // pred_check
    _
  $region47: #{gmvsae_forward.9} parent=0 // pred_check_branch
    %2008 = sbr.rel (0) target = $region49
  $region48: #{gmvsae_forward.9} parent=0 // pred_region
    _
  $region49: #{gmvsae_forward.9} parent=0 // pred_fallthru
    _

</llo_original>
